<compile_context>
chip_gen: v6e
topology: v6e:2x2x1
jax: 0.10.0
libtpu: 0.0.40
codegen_flags: <defaults>
</compile_context>

<pallas_src>
import math
import functools
import numpy as np

import jax
import jax.numpy as jnp
from jax.experimental import pallas as pl
from jax.experimental.pallas import tpu as pltpu


# ---------------------------------------------------------------------------
# ALiBi slopes (exact port of get_slopes in MultiHeadAttention.__init__)
# ---------------------------------------------------------------------------
def get_slopes(n):
    def power_of_2(n):
        start = 2 ** (-2 ** (-(math.log2(n) - 3)))
        ratio = start
        return [start * ratio ** i for i in range(n)]
    if math.log2(n).is_integer():
        return power_of_2(n)
    cp2 = 2 ** math.floor(math.log2(n))
    return power_of_2(cp2) + get_slopes(2 * cp2)[0::2][: n - cp2]


# ---------------------------------------------------------------------------
# Pallas kernel: MultiHeadAttention forward for a block of Bt batch elements
# ---------------------------------------------------------------------------
def _mha_kernel(q_ref, k_ref, v_ref, bias_ref,
                wk_ref, bk_ref, wv_ref, bv_ref, wo_ref, bo_ref,
                out_ref, *, n_heads, d_k, zero_pad):
    Bt, S, D = q_ref.shape
    H = n_heads
    M = Bt * S
    inv_sqrt_dk = 1.0 / math.sqrt(d_k)

    # bf16 MXU operands, f32 accumulation.
    q2 = q_ref[...].reshape(M, D).astype(jnp.bfloat16)
    k2 = k_ref[...].reshape(M, D).astype(jnp.bfloat16)
    v2 = v_ref[...].reshape(M, D).astype(jnp.bfloat16)

    wk = wk_ref[...]                                   # (D, D) bf16, resident
    # kq_same=True -> q and k both go through k_linear: two dots against the
    # resident wk; no in-kernel concatenate / extra VMEM copy.
    qp = (jnp.dot(q2, wk, preferred_element_type=jnp.float32)
          + bk_ref[...]) * inv_sqrt_dk                 # fold 1/sqrt(d_k) into q once
    kp = jnp.dot(k2, wk, preferred_element_type=jnp.float32) + bk_ref[...]
    vp = jnp.dot(v2, wv_ref[...], preferred_element_type=jnp.float32) + bv_ref[...]

    # Head split: (M, D) -> (H*Bt, S, d_k), heads-MAJOR so everything downstream
    # (scores, PV, accumulated out-proj) is a plain contiguous reshape.
    # TODO(synk): this is the single remaining relayout; a 2-batch-dim
    # dot_general could remove it but is not reliably lowered by Mosaic.
    def split_heads(x):
        return (x.reshape(Bt, S, H, d_k)
                 .transpose(2, 0, 1, 3)
                 .reshape(H * Bt, S, d_k))

    qh = split_heads(qp).astype(jnp.bfloat16)
    kh = split_heads(kp).astype(jnp.bfloat16)
    vh = split_heads(vp).astype(jnp.bfloat16)

    # Batched scores over the single leading (H*Bt) batch dim.
    s = jnp.einsum('bqd,bkd->bqk', qh, kh,
                   preferred_element_type=jnp.float32)         # (H*Bt, S, S) f32
    # ALiBi + causal mask bias: precomputed, resident, f32. Broadcast over Bt.
    s = s.reshape(H, Bt, S, S) + bias_ref[...][:, None]
    s = s - jnp.max(s, axis=-1, keepdims=True)
    p = jnp.exp(s)
    p = p * pl.reciprocal(jnp.sum(p, axis=-1, keepdims=True), approx=True)

    # Batched PV.
    o = jnp.einsum('bqk,bkd->bqd',
                   p.reshape(H * Bt, S, S).astype(jnp.bfloat16), vh,
                   preferred_element_type=jnp.float32)         # (H*Bt, S, d_k)

    # Accumulated out-projection: out = sum_h o_h @ wo[h].
    # Heads are never re-interleaved back into the lane dimension.
    o = o.reshape(H, M, d_k).astype(jnp.bfloat16)
    out = jnp.dot(o[0], wo_ref[0], preferred_element_type=jnp.float32)
    for h in range(1, H):
        out = out + jnp.dot(o[h], wo_ref[h], preferred_element_type=jnp.float32)
    out = out.reshape(Bt, S, D)

    if zero_pad:
        # Reference zeroes the row-0 softmax probabilities of every batch/head;
        # zeroing the pre-bias output at query position 0 is equivalent.
        ridx = jax.lax.broadcasted_iota(jnp.int32, (Bt, S, D), 1)
        out = jnp.where(ridx >= 1, out, 0.0)

    out_ref[...] = (out + bo_ref[...]).astype(out_ref.dtype)


# ---------------------------------------------------------------------------
# Tiling / VMEM heuristics
# ---------------------------------------------------------------------------
def _vmem_estimate(Bt, S, D, H, d_k):
    M = Bt * S
    f32, bf16 = 4, 2
    io = 4 * 2 * M * D * f32                              # double-buffered q,k,v,out
    resident = 2 * (2 * D * D * bf16 + H * d_k * D * bf16
                    + 3 * D * f32 + H * S * S * f32)      # weights + biases + alibi
    proj = 3 * M * D * (f32 + 2 * bf16)                   # qp/kp/vp + bf16 head copies
    attn = 4 * H * Bt * S * S * f32                       # s / exp / p / sum temps
    pv = 2 * H * M * d_k * f32
    outp = 2 * M * D * f32
    return io + resident + proj + attn + pv + outp


def _pick_batch_block(B, S, D, H, d_k, target_rows, vmem_budget):
    best = 1
    for bt in range(2, B + 1):
        if B % bt:
            continue
        if bt * S > target_rows:
            continue
        if _vmem_estimate(bt, S, D, H, d_k) > vmem_budget:
            continue
        best = bt
    return best


# ---------------------------------------------------------------------------
# Wrapper
# ---------------------------------------------------------------------------
def multi_head_attention(mask_int, query, key, values, params, n_heads, zero_pad,
                         batch_block=None, target_rows=256,
                         vmem_budget=48 * 1024 * 1024):
    B, S, D = query.shape
    assert D % n_heads == 0
    d_k = D // n_heads

    if batch_block is None:
        # Target M = Bt*S rows per grid step (MXU fill + per-step overhead
        # amortization) while staying inside a v7x-safe VMEM budget.
        # NOTE: on v7x, prefer an even number of grid blocks so both
        # TensorCores get work; on v5e/v6e extra blocks are pure overhead.
        batch_block = _pick_batch_block(B, S, D, n_heads, d_k,
                                        target_rows, vmem_budget)
    Bt = batch_block
    assert B % Bt == 0
    nblocks = B // Bt

    # ALiBi + causal mask additive bias, built ONCE with a single broadcasted
    # multiply; passed as a resident f32 input (constant index_map).
    neg_slopes = -np.asarray(get_slopes(n_heads), np.float32)           # (H,)
    rel = np.arange(S)[None, :] - np.arange(S)[:, None]                 # (S, S)
    mask_add = np.where(rel < mask_int, 0.0, -1e32).astype(np.float32)
    bias = (neg_slopes[:, None, None] * np.abs(rel).astype(np.float32)[None]
            + mask_add[None])                                           # (H, S, S)
    bias = jnp.asarray(bias, jnp.float32)

    # Weights cast to bf16 once; out-proj pre-split into per-head (d_k, D) slabs.
    wk = params["wk"].astype(jnp.bfloat16)
    wv = params["wv"].astype(jnp.bfloat16)
    wo = params["wo"].reshape(n_heads, d_k, D).astype(jnp.bfloat16)
    bk = params["bk"].astype(jnp.float32)
    bv = params["bv"].astype(jnp.float32)
    bo = params["bo"].astype(jnp.float32)

    kernel = functools.partial(_mha_kernel, n_heads=n_heads, d_k=d_k,
                               zero_pad=bool(zero_pad))

    def full(shape):
        return pl.BlockSpec(shape, lambda b: (0,) * len(shape))

    in_specs = [
        pl.BlockSpec((Bt, S, D), lambda b: (b, 0, 0)),   # query
        pl.BlockSpec((Bt, S, D), lambda b: (b, 0, 0)),   # key
        pl.BlockSpec((Bt, S, D), lambda b: (b, 0, 0)),   # values
        full((n_heads, S, S)),                           # alibi+mask bias (resident)
        full((D, D)), full((1, D)),                      # wk (shared q/k), bk
        full((D, D)), full((1, D)),                      # wv, bv
        full((n_heads, d_k, D)), full((1, D)),           # wo per-head, bo
    ]
    out_spec = pl.BlockSpec((Bt, S, D), lambda b: (b, 0, 0))

    flops = 8 * B * S * D * D + 4 * B * S * S * D
    transcendentals = B * n_heads * S * S
    bytes_accessed = (4 * 4 * B * S * D + 2 * 3 * D * D
                      + 4 * n_heads * S * S + 4 * 3 * D)

    est = _vmem_estimate(Bt, S, D, n_heads, d_k)
    vmem_limit = int(min(64 * 1024 * 1024, max(32 * 1024 * 1024, 2 * est)))

    return pl.pallas_call(
        kernel,
        out_shape=jax.ShapeDtypeStruct((B, S, D), jnp.float32),
        grid=(nblocks,),
        in_specs=in_specs,
        out_specs=out_spec,
        compiler_params=pltpu.CompilerParams(
            dimension_semantics=("parallel",),
            vmem_limit_bytes=vmem_limit),
        cost_estimate=pl.CostEstimate(flops=flops,
                                      transcendentals=transcendentals,
                                      bytes_accessed=bytes_accessed),
    )(query, key, values, bias, wk, bk, wv, bv, wo, bo)


# ---------------------------------------------------------------------------
# Pure-JAX reference (mirrors the PyTorch forward, for a correctness check)
# ---------------------------------------------------------------------------
def reference_forward(mask_int, query, key, values, params, n_heads, zero_pad):
    B, S, D = query.shape
    d_k = D // n_heads
    ii = np.arange(S)[:, None]
    jj = np.arange(S)[None, :]
    mask = jnp.asarray(((jj - ii) < mask_int).astype(np.float32))

    qp = query @ params["wk"] + params["bk"]
    kp = key @ params["wk"] + params["bk"]
    vp = values @ params["wv"] + params["bv"]

    def split(x):
        return x.reshape(B, S, n_heads, d_k).transpose(0, 2, 1, 3)

    qh, kh, vh = split(qp), split(kp), split(vp)

    slopes = jnp.asarray(get_slopes(n_heads), jnp.float32) * (-1.0)
    rel = jnp.abs(jnp.arange(S)[None, :] - jnp.arange(S)[:, None]).astype(jnp.float32)
    alibi = slopes[:, None, None] * rel                      # (H, S, S)

    s = jnp.einsum("bhqd,bhkd->bhqk", qh, kh) / math.sqrt(d_k)
    s = s + alibi[None]
    s = jnp.where(mask[None, None] > 0, s, -1e32)
    p = jax.nn.softmax(s, axis=-1)
    if zero_pad:
        p = p.at[:, :, 0, :].set(0.0)
    o = jnp.einsum("bhqk,bhkd->bhqd", p, vh)
    concat = o.transpose(0, 2, 1, 3).reshape(B, S, D)
    return concat @ params["wo"] + params["bo"]


# ---------------------------------------------------------------------------
# Main
# ---------------------------------------------------------------------------
if __name__ == "__main__":
    # lane-dense d_model (multiple of 128)
    B, S, D, H = 2, 16, 128, 4
    rng = jax.random.PRNGKey(0)
    ks = jax.random.split(rng, 8)

    def xavier(k, fan_in, fan_out):
        lim = math.sqrt(6.0 / (fan_in + fan_out))
        return jax.random.uniform(k, (fan_in, fan_out), jnp.float32, -lim, lim)

    def torch_default(k, fan_in, fan_out):
        lim = 1.0 / math.sqrt(fan_in)
        return jax.random.uniform(k, (fan_in, fan_out), jnp.float32, -lim, lim)

    # weights stored as (in, out): kernel computes x @ W + b
    params = {
        "wk": xavier(ks[0], D, D), "bk": jnp.zeros((1, D), jnp.float32),
        "wv": xavier(ks[1], D, D), "bv": jnp.zeros((1, D), jnp.float32),
        "wo": torch_default(ks[2], D, D), "bo": jnp.zeros((1, D), jnp.float32),
    }

    q_x = jax.random.normal(ks[3], (B, S, D), jnp.float32)
    k_x = jax.random.normal(ks[4], (B, S, D), jnp.float32)
    v_x = jax.random.normal(ks[5], (B, S, D), jnp.float32)

    # mask_int=0 -> strictly-causal mask + zero_pad=True ; mask_int=1 -> causal
    for mask_int in (0, 1):
        zero_pad = (mask_int == 0)
        out = multi_head_attention(mask_int, q_x, k_x, v_x, params, H, zero_pad)
        out = jax.block_until_ready(out)
        ref = reference_forward(mask_int, q_x, k_x, v_x, params, H, zero_pad)
        assert out.shape == (B, S, D)
        # bf16 MXU operands (f32 accumulation) -> slightly looser tolerance
        assert bool(jnp.allclose(out, ref, atol=3e-2, rtol=3e-2)), \
            f"mismatch vs reference (mask_int={mask_int}): " \
            f"max abs err {float(jnp.max(jnp.abs(out - ref)))}"

    print("KERNEL_OK")
</pallas_src>

<mosaic_0001>
module attributes {stable_mosaic.version = 11 : i64} {
  func.func @_mha_kernel(%arg0: i32, %arg1: memref<2x16x128xf32, #tpu.memory_space<vmem>>, %arg2: memref<2x16x128xf32, #tpu.memory_space<vmem>>, %arg3: memref<2x16x128xf32, #tpu.memory_space<vmem>>, %arg4: memref<4x16x16xf32, #tpu.memory_space<vmem>>, %arg5: memref<128x128xbf16, #tpu.memory_space<vmem>>, %arg6: memref<1x128xf32, #tpu.memory_space<vmem>>, %arg7: memref<128x128xbf16, #tpu.memory_space<vmem>>, %arg8: memref<1x128xf32, #tpu.memory_space<vmem>>, %arg9: memref<4x32x128xbf16, #tpu.memory_space<vmem>>, %arg10: memref<1x128xf32, #tpu.memory_space<vmem>>, %arg11: memref<2x16x128xf32, #tpu.memory_space<vmem>>) attributes {dimension_semantics = [#tpu.dimension_semantics<parallel>], iteration_bounds = array<i64: 1>, scalar_prefetch = 0 : i64, scratch_operands = 0 : i64, tpu.core_type = #tpu.core_type<tc>, window_params = [{transform_indices = @transform_0, window_bounds = array<i64: 2, 16, 128>}, {transform_indices = @transform_1, window_bounds = array<i64: 2, 16, 128>}, {transform_indices = @transform_2, window_bounds = array<i64: 2, 16, 128>}, {pipeline_mode = #tpu.pipeline_mode<synchronous>, transform_indices = @transform_3, window_bounds = array<i64: 4, 16, 16>}, {pipeline_mode = #tpu.pipeline_mode<synchronous>, transform_indices = @transform_4, window_bounds = array<i64: 128, 128>}, {pipeline_mode = #tpu.pipeline_mode<synchronous>, transform_indices = @transform_5, window_bounds = array<i64: 1, 128>}, {pipeline_mode = #tpu.pipeline_mode<synchronous>, transform_indices = @transform_6, window_bounds = array<i64: 128, 128>}, {pipeline_mode = #tpu.pipeline_mode<synchronous>, transform_indices = @transform_7, window_bounds = array<i64: 1, 128>}, {pipeline_mode = #tpu.pipeline_mode<synchronous>, transform_indices = @transform_8, window_bounds = array<i64: 4, 32, 128>}, {pipeline_mode = #tpu.pipeline_mode<synchronous>, transform_indices = @transform_9, window_bounds = array<i64: 1, 128>}, {transform_indices = @transform_10, window_bounds = array<i64: 2, 16, 128>}]} {
    %c0 = arith.constant 0 : index
    %c0_0 = arith.constant 0 : index
    %c0_1 = arith.constant 0 : index
    %0 = vector.load %arg1[%c0, %c0_0, %c0_1] : memref<2x16x128xf32, #tpu.memory_space<vmem>>, vector<2x16x128xf32>
    %1 = vector.shape_cast %0 : vector<2x16x128xf32> to vector<32x128xf32>
    %2 = arith.truncf %1 : vector<32x128xf32> to vector<32x128xbf16>
    %c0_2 = arith.constant 0 : index
    %c0_3 = arith.constant 0 : index
    %c0_4 = arith.constant 0 : index
    %3 = vector.load %arg2[%c0_2, %c0_3, %c0_4] : memref<2x16x128xf32, #tpu.memory_space<vmem>>, vector<2x16x128xf32>
    %4 = vector.shape_cast %3 : vector<2x16x128xf32> to vector<32x128xf32>
    %5 = arith.truncf %4 : vector<32x128xf32> to vector<32x128xbf16>
    %c0_5 = arith.constant 0 : index
    %c0_6 = arith.constant 0 : index
    %c0_7 = arith.constant 0 : index
    %6 = vector.load %arg3[%c0_5, %c0_6, %c0_7] : memref<2x16x128xf32, #tpu.memory_space<vmem>>, vector<2x16x128xf32>
    %7 = vector.shape_cast %6 : vector<2x16x128xf32> to vector<32x128xf32>
    %8 = arith.truncf %7 : vector<32x128xf32> to vector<32x128xbf16>
    %c0_8 = arith.constant 0 : index
    %c0_9 = arith.constant 0 : index
    %9 = vector.load %arg5[%c0_8, %c0_9] : memref<128x128xbf16, #tpu.memory_space<vmem>>, vector<128x128xbf16>
    %cst = arith.constant dense<0.000000e+00> : vector<32x128xf32>
    %10 = tpu.matmul %2, %9, %cst {dimension_numbers = #tpu.dot_dimension_numbers<[1], [0], [0], [1], [0, 0, 1, 1], [], []>} : vector<32x128xbf16>, vector<128x128xbf16>, vector<32x128xf32> -> vector<32x128xf32>
    %c0_10 = arith.constant 0 : index
    %c0_11 = arith.constant 0 : index
    %11 = vector.load %arg6[%c0_10, %c0_11] : memref<1x128xf32, #tpu.memory_space<vmem>>, vector<1x128xf32>
    %12 = vector.broadcast %11 : vector<1x128xf32> to vector<32x128xf32>
    %13 = arith.addf %10, %12 : vector<32x128xf32>
    %cst_12 = arith.constant 0.176776692 : f32
    %14 = vector.broadcast %cst_12 : f32 to vector<32x128xf32>
    %15 = arith.mulf %13, %14 : vector<32x128xf32>
    %cst_13 = arith.constant dense<0.000000e+00> : vector<32x128xf32>
    %16 = tpu.matmul %5, %9, %cst_13 {dimension_numbers = #tpu.dot_dimension_numbers<[1], [0], [0], [1], [0, 0, 1, 1], [], []>} : vector<32x128xbf16>, vector<128x128xbf16>, vector<32x128xf32> -> vector<32x128xf32>
    %c0_14 = arith.constant 0 : index
    %c0_15 = arith.constant 0 : index
    %17 = vector.load %arg6[%c0_14, %c0_15] : memref<1x128xf32, #tpu.memory_space<vmem>>, vector<1x128xf32>
    %18 = vector.broadcast %17 : vector<1x128xf32> to vector<32x128xf32>
    %19 = arith.addf %16, %18 : vector<32x128xf32>
    %c0_16 = arith.constant 0 : index
    %c0_17 = arith.constant 0 : index
    %20 = vector.load %arg7[%c0_16, %c0_17] : memref<128x128xbf16, #tpu.memory_space<vmem>>, vector<128x128xbf16>
    %cst_18 = arith.constant dense<0.000000e+00> : vector<32x128xf32>
    %21 = tpu.matmul %8, %20, %cst_18 {dimension_numbers = #tpu.dot_dimension_numbers<[1], [0], [0], [1], [0, 0, 1, 1], [], []>} : vector<32x128xbf16>, vector<128x128xbf16>, vector<32x128xf32> -> vector<32x128xf32>
    %c0_19 = arith.constant 0 : index
    %c0_20 = arith.constant 0 : index
    %22 = vector.load %arg8[%c0_19, %c0_20] : memref<1x128xf32, #tpu.memory_space<vmem>>, vector<1x128xf32>
    %23 = vector.broadcast %22 : vector<1x128xf32> to vector<32x128xf32>
    %24 = arith.addf %21, %23 : vector<32x128xf32>
    %25 = vector.shape_cast %15 : vector<32x128xf32> to vector<2x16x4x32xf32>
    %26 = tpu.transpose %25, [2, 0, 1, 3] : vector<2x16x4x32xf32> -> vector<4x2x16x32xf32>
    %27 = vector.shape_cast %26 : vector<4x2x16x32xf32> to vector<8x16x32xf32>
    %28 = arith.truncf %27 : vector<8x16x32xf32> to vector<8x16x32xbf16>
    %29 = vector.shape_cast %19 : vector<32x128xf32> to vector<2x16x4x32xf32>
    %30 = tpu.transpose %29, [2, 0, 1, 3] : vector<2x16x4x32xf32> -> vector<4x2x16x32xf32>
    %31 = vector.shape_cast %30 : vector<4x2x16x32xf32> to vector<8x16x32xf32>
    %32 = arith.truncf %31 : vector<8x16x32xf32> to vector<8x16x32xbf16>
    %33 = vector.shape_cast %24 : vector<32x128xf32> to vector<2x16x4x32xf32>
    %34 = tpu.transpose %33, [2, 0, 1, 3] : vector<2x16x4x32xf32> -> vector<4x2x16x32xf32>
    %35 = vector.shape_cast %34 : vector<4x2x16x32xf32> to vector<8x16x32xf32>
    %36 = arith.truncf %35 : vector<8x16x32xf32> to vector<8x16x32xbf16>
    "tpu.trace_start"() <{level = 10 : i32, message = "bqd,bkd->bqk"}> : () -> ()
    %cst_21 = arith.constant dense<0.000000e+00> : vector<8x16x16xf32>
    %37 = tpu.matmul %28, %32, %cst_21 {dimension_numbers = #tpu.dot_dimension_numbers<[2], [2], [1], [1], [0, 0, 0, 1, 1, 1], [0], [0]>} : vector<8x16x32xbf16>, vector<8x16x32xbf16>, vector<8x16x16xf32> -> vector<8x16x16xf32>
    "tpu.trace_stop"() : () -> ()
    %38 = vector.shape_cast %37 : vector<8x16x16xf32> to vector<4x2x16x16xf32>
    %c0_22 = arith.constant 0 : index
    %c0_23 = arith.constant 0 : index
    %c0_24 = arith.constant 0 : index
    %39 = vector.load %arg4[%c0_22, %c0_23, %c0_24] : memref<4x16x16xf32, #tpu.memory_space<vmem>>, vector<4x16x16xf32>
    %40 = vector.shape_cast %39 : vector<4x16x16xf32> to vector<4x1x16x16xf32>
    %41 = vector.broadcast %40 : vector<4x1x16x16xf32> to vector<4x2x16x16xf32>
    %42 = arith.addf %38, %41 : vector<4x2x16x16xf32>
    %cst_25 = arith.constant dense<0xFF800000> : vector<4x2x16xf32>
    %43 = vector.multi_reduction <maximumf>, %42, %cst_25 [3] : vector<4x2x16x16xf32> to vector<4x2x16xf32>
    %44 = vector.shape_cast %43 : vector<4x2x16xf32> to vector<4x2x16x1xf32>
    %45 = vector.broadcast %44 : vector<4x2x16x1xf32> to vector<4x2x16x16xf32>
    %46 = arith.subf %42, %45 : vector<4x2x16x16xf32>
    %47 = math.exp %46 : vector<4x2x16x16xf32>
    %cst_26 = arith.constant dense<0.000000e+00> : vector<4x2x16xf32>
    %48 = vector.multi_reduction <add>, %47, %cst_26 [3] : vector<4x2x16x16xf32> to vector<4x2x16xf32>
    %49 = vector.shape_cast %48 : vector<4x2x16xf32> to vector<4x2x16x1xf32>
    %50 = tpu.reciprocal %49 {approx = true} : vector<4x2x16x1xf32> -> vector<4x2x16x1xf32>
    %51 = vector.broadcast %50 : vector<4x2x16x1xf32> to vector<4x2x16x16xf32>
    %52 = arith.mulf %47, %51 : vector<4x2x16x16xf32>
    %53 = vector.shape_cast %52 : vector<4x2x16x16xf32> to vector<8x16x16xf32>
    %54 = arith.truncf %53 : vector<8x16x16xf32> to vector<8x16x16xbf16>
    "tpu.trace_start"() <{level = 10 : i32, message = "bqk,bkd->bqd"}> : () -> ()
    %cst_27 = arith.constant dense<0.000000e+00> : vector<8x16x32xf32>
    %55 = tpu.matmul %54, %36, %cst_27 {dimension_numbers = #tpu.dot_dimension_numbers<[2], [1], [1], [2], [0, 0, 0, 1, 1, 2], [0], [0]>} : vector<8x16x16xbf16>, vector<8x16x32xbf16>, vector<8x16x32xf32> -> vector<8x16x32xf32>
    "tpu.trace_stop"() : () -> ()
    %56 = vector.shape_cast %55 : vector<8x16x32xf32> to vector<4x32x32xf32>
    %57 = arith.truncf %56 : vector<4x32x32xf32> to vector<4x32x32xbf16>
    %58 = vector.extract_strided_slice %57 {offsets = [0, 0, 0], sizes = [1, 32, 32], strides = [1, 1, 1]} : vector<4x32x32xbf16> to vector<1x32x32xbf16>
    %59 = vector.shape_cast %58 : vector<1x32x32xbf16> to vector<32x32xbf16>
    %c0_28 = arith.constant 0 : index
    %c0_29 = arith.constant 0 : index
    %c0_30 = arith.constant 0 : index
    %60 = vector.load %arg9[%c0_28, %c0_29, %c0_30] : memref<4x32x128xbf16, #tpu.memory_space<vmem>>, vector<1x32x128xbf16>
    %61 = vector.shape_cast %60 : vector<1x32x128xbf16> to vector<32x128xbf16>
    %cst_31 = arith.constant dense<0.000000e+00> : vector<32x128xf32>
    %62 = tpu.matmul %59, %61, %cst_31 {dimension_numbers = #tpu.dot_dimension_numbers<[1], [0], [0], [1], [0, 0, 1, 1], [], []>} : vector<32x32xbf16>, vector<32x128xbf16>, vector<32x128xf32> -> vector<32x128xf32>
    %63 = vector.extract_strided_slice %57 {offsets = [1, 0, 0], sizes = [1, 32, 32], strides = [1, 1, 1]} : vector<4x32x32xbf16> to vector<1x32x32xbf16>
    %64 = vector.shape_cast %63 : vector<1x32x32xbf16> to vector<32x32xbf16>
    %c1 = arith.constant 1 : index
    %c0_32 = arith.constant 0 : index
    %c0_33 = arith.constant 0 : index
    %65 = vector.load %arg9[%c1, %c0_32, %c0_33] : memref<4x32x128xbf16, #tpu.memory_space<vmem>>, vector<1x32x128xbf16>
    %66 = vector.shape_cast %65 : vector<1x32x128xbf16> to vector<32x128xbf16>
    %cst_34 = arith.constant dense<0.000000e+00> : vector<32x128xf32>
    %67 = tpu.matmul %64, %66, %cst_34 {dimension_numbers = #tpu.dot_dimension_numbers<[1], [0], [0], [1], [0, 0, 1, 1], [], []>} : vector<32x32xbf16>, vector<32x128xbf16>, vector<32x128xf32> -> vector<32x128xf32>
    %68 = arith.addf %62, %67 : vector<32x128xf32>
    %69 = vector.extract_strided_slice %57 {offsets = [2, 0, 0], sizes = [1, 32, 32], strides = [1, 1, 1]} : vector<4x32x32xbf16> to vector<1x32x32xbf16>
    %70 = vector.shape_cast %69 : vector<1x32x32xbf16> to vector<32x32xbf16>
    %c2 = arith.constant 2 : index
    %c0_35 = arith.constant 0 : index
    %c0_36 = arith.constant 0 : index
    %71 = vector.load %arg9[%c2, %c0_35, %c0_36] : memref<4x32x128xbf16, #tpu.memory_space<vmem>>, vector<1x32x128xbf16>
    %72 = vector.shape_cast %71 : vector<1x32x128xbf16> to vector<32x128xbf16>
    %cst_37 = arith.constant dense<0.000000e+00> : vector<32x128xf32>
    %73 = tpu.matmul %70, %72, %cst_37 {dimension_numbers = #tpu.dot_dimension_numbers<[1], [0], [0], [1], [0, 0, 1, 1], [], []>} : vector<32x32xbf16>, vector<32x128xbf16>, vector<32x128xf32> -> vector<32x128xf32>
    %74 = arith.addf %68, %73 : vector<32x128xf32>
    %75 = vector.extract_strided_slice %57 {offsets = [3, 0, 0], sizes = [1, 32, 32], strides = [1, 1, 1]} : vector<4x32x32xbf16> to vector<1x32x32xbf16>
    %76 = vector.shape_cast %75 : vector<1x32x32xbf16> to vector<32x32xbf16>
    %c3 = arith.constant 3 : index
    %c0_38 = arith.constant 0 : index
    %c0_39 = arith.constant 0 : index
    %77 = vector.load %arg9[%c3, %c0_38, %c0_39] : memref<4x32x128xbf16, #tpu.memory_space<vmem>>, vector<1x32x128xbf16>
    %78 = vector.shape_cast %77 : vector<1x32x128xbf16> to vector<32x128xbf16>
    %cst_40 = arith.constant dense<0.000000e+00> : vector<32x128xf32>
    %79 = tpu.matmul %76, %78, %cst_40 {dimension_numbers = #tpu.dot_dimension_numbers<[1], [0], [0], [1], [0, 0, 1, 1], [], []>} : vector<32x32xbf16>, vector<32x128xbf16>, vector<32x128xf32> -> vector<32x128xf32>
    %80 = arith.addf %74, %79 : vector<32x128xf32>
    %81 = vector.shape_cast %80 : vector<32x128xf32> to vector<2x16x128xf32>
    %82 = tpu.iota {dimensions = array<i32: 1>} : vector<2x16x128xi32>
    %c1_i32 = arith.constant 1 : i32
    %83 = vector.broadcast %c1_i32 : i32 to vector<2x16x128xi32>
    %84 = arith.cmpi sge, %82, %83 : vector<2x16x128xi32>
    %cst_41 = arith.constant 0.000000e+00 : f32
    %85 = vector.broadcast %cst_41 : f32 to vector<2x16x128xf32>
    %86 = arith.select %84, %81, %85 : vector<2x16x128xi1>, vector<2x16x128xf32>
    %c0_42 = arith.constant 0 : index
    %c0_43 = arith.constant 0 : index
    %87 = vector.load %arg10[%c0_42, %c0_43] : memref<1x128xf32, #tpu.memory_space<vmem>>, vector<1x128xf32>
    %88 = vector.shape_cast %87 : vector<1x128xf32> to vector<1x1x128xf32>
    %89 = vector.broadcast %88 : vector<1x1x128xf32> to vector<2x16x128xf32>
    %90 = arith.addf %86, %89 : vector<2x16x128xf32>
    %c0_44 = arith.constant 0 : index
    %c0_45 = arith.constant 0 : index
    %c0_46 = arith.constant 0 : index
    %91 = vector.load %arg11[%c0_44, %c0_45, %c0_46] : memref<2x16x128xf32, #tpu.memory_space<vmem>>, vector<2x16x128xf32>
    tpu.vector_store %arg11[%c0_44, %c0_45, %c0_46], %90 {strides = array<i32>} : memref<2x16x128xf32, #tpu.memory_space<vmem>>, vector<2x16x128xf32>,
    return
  }
  func.func @transform_0(%arg0: i32) -> (i32, i32, i32) {
    %c0_i32 = arith.constant 0 : i32
    %c0_i32_0 = arith.constant 0 : i32
    %c0_i32_1 = arith.constant 0 : i32
    return %arg0, %c0_i32, %c0_i32_0 : i32, i32, i32
  }
  func.func @transform_1(%arg0: i32) -> (i32, i32, i32) {
    %c0_i32 = arith.constant 0 : i32
    %c0_i32_0 = arith.constant 0 : i32
    %c0_i32_1 = arith.constant 0 : i32
    return %arg0, %c0_i32, %c0_i32_0 : i32, i32, i32
  }
  func.func @transform_2(%arg0: i32) -> (i32, i32, i32) {
    %c0_i32 = arith.constant 0 : i32
    %c0_i32_0 = arith.constant 0 : i32
    %c0_i32_1 = arith.constant 0 : i32
    return %arg0, %c0_i32, %c0_i32_0 : i32, i32, i32
  }
  func.func @transform_3(%arg0: i32) -> (i32, i32, i32) {
    %c0_i32 = arith.constant 0 : i32
    %c0_i32_0 = arith.constant 0 : i32
    %c0_i32_1 = arith.constant 0 : i32
    %c0_i32_2 = arith.constant 0 : i32
    return %c0_i32, %c0_i32_0, %c0_i32_1 : i32, i32, i32
  }
  func.func @transform_4(%arg0: i32) -> (i32, i32) {
    %c0_i32 = arith.constant 0 : i32
    %c0_i32_0 = arith.constant 0 : i32
    %c0_i32_1 = arith.constant 0 : i32
    return %c0_i32, %c0_i32_0 : i32, i32
  }
  func.func @transform_5(%arg0: i32) -> (i32, i32) {
    %c0_i32 = arith.constant 0 : i32
    %c0_i32_0 = arith.constant 0 : i32
    %c0_i32_1 = arith.constant 0 : i32
    return %c0_i32, %c0_i32_0 : i32, i32
  }
  func.func @transform_6(%arg0: i32) -> (i32, i32) {
    %c0_i32 = arith.constant 0 : i32
    %c0_i32_0 = arith.constant 0 : i32
    %c0_i32_1 = arith.constant 0 : i32
    return %c0_i32, %c0_i32_0 : i32, i32
  }
  func.func @transform_7(%arg0: i32) -> (i32, i32) {
    %c0_i32 = arith.constant 0 : i32
    %c0_i32_0 = arith.constant 0 : i32
    %c0_i32_1 = arith.constant 0 : i32
    return %c0_i32, %c0_i32_0 : i32, i32
  }
  func.func @transform_8(%arg0: i32) -> (i32, i32, i32) {
    %c0_i32 = arith.constant 0 : i32
    %c0_i32_0 = arith.constant 0 : i32
    %c0_i32_1 = arith.constant 0 : i32
    %c0_i32_2 = arith.constant 0 : i32
    return %c0_i32, %c0_i32_0, %c0_i32_1 : i32, i32, i32
  }
  func.func @transform_9(%arg0: i32) -> (i32, i32) {
    %c0_i32 = arith.constant 0 : i32
    %c0_i32_0 = arith.constant 0 : i32
    %c0_i32_1 = arith.constant 0 : i32
    return %c0_i32, %c0_i32_0 : i32, i32
  }
  func.func @transform_10(%arg0: i32) -> (i32, i32, i32) {
    %c0_i32 = arith.constant 0 : i32
    %c0_i32_0 = arith.constant 0 : i32
    %c0_i32_1 = arith.constant 0 : i32
    return %arg0, %c0_i32, %c0_i32_0 : i32, i32, i32
  }
}

</mosaic_0001>

<llo_original>
// kernel: tpu_custom_call.1
$region0: #{tpu_custom_call.1}
  #allocation0 [shape = 'u32[]', space=smem, size = 0x4, offset = 0x4, fixed_abs, tag = 'smem constant byte address 0x4 - core index']
  #allocation1 [shape = 'u32[144,128]{1,0:T(1,128)}', space=vmem, size = 0x12000, scoped, tag = 'internal scratch']
  %s0 = inlined_call_operand.hbm [shape: f32[2,16,128], index: 0, kind: input, shape index: {}]
  %s1 = inlined_call_operand.hbm [shape: f32[2,16,128], index: 1, kind: input, shape index: {}]
  %s2 = inlined_call_operand.hbm [shape: f32[2,16,128], index: 2, kind: input, shape index: {}]
  %s3 = inlined_call_operand.hbm [shape: f32[4,16,16], index: 3, kind: input, shape index: {}]
  %s4 = inlined_call_operand.hbm [shape: bf16[128,128], index: 4, kind: input, shape index: {}]
  %s5 = inlined_call_operand.vmem [shape: f32[1,128], index: 5, kind: input, shape index: {}]
  %s6 = inlined_call_operand.hbm [shape: bf16[128,128], index: 6, kind: input, shape index: {}]
  %s7 = inlined_call_operand.vmem [shape: f32[1,128], index: 7, kind: input, shape index: {}]
  %s8 = inlined_call_operand.hbm [shape: bf16[4,32,128], index: 8, kind: input, shape index: {}]
  %s9 = inlined_call_operand.vmem [shape: f32[1,128], index: 9, kind: input, shape index: {}]
  %s10 = inlined_call_operand.hbm [shape: f32[2,16,128], index: 10, kind: output, shape index: {}]
  %s11 = sld [smem:[#allocation0]]
  $region78: #{tpu_custom_call.1} parent=0
    _
  %s13 = ssub.s32 1, %s11
  %s14 = scalar_select 0, %s13, %s11
  $region1: #{tpu_custom_call.1} parent=0
    #allocation2 [shape = 'u8[16384]{0}', space=vmem, size = 0x4000, scoped, tag = 'input window, operand 0, single buffered']
    #allocation3 [shape = 's32[1]{0}', space=sflag, size = 0x4, scoped, tag = 'scoped memory for tpu_custom_call.1']
    #allocation4 [shape = 's32[1]{0}', space=sflag, size = 0x4, scoped, tag = 'scoped memory for tpu_custom_call.1']
    #allocation5 [shape = 'u8[16384]{0}', space=vmem, size = 0x4000, scoped, tag = 'input window, operand 1, single buffered']
    #allocation6 [shape = 's32[1]{0}', space=sflag, size = 0x4, scoped, tag = 'scoped memory for tpu_custom_call.1']
    #allocation7 [shape = 'u8[16384]{0}', space=vmem, size = 0x4000, scoped, tag = 'input window, operand 2, single buffered']
    #allocation8 [shape = 'u8[32768]{0}', space=vmem, size = 0x8000, scoped, tag = 'input window, operand 3, single buffered']
    #allocation9 [shape = 's32[1]{0}', space=sflag, size = 0x4, scoped, tag = 'scoped memory for tpu_custom_call.1']
    #allocation10 [shape = 'u8[32768]{0}', space=vmem, size = 0x8000, scoped, tag = 'input window, operand 4, single buffered']
    #allocation11 [shape = 'u8[32768]{0}', space=vmem, size = 0x8000, scoped, tag = 'input window, operand 6, single buffered']
    #allocation12 [shape = 's32[1]{0}', space=sflag, size = 0x4, scoped, tag = 'scoped memory for tpu_custom_call.1']
    #allocation13 [shape = 'u8[32768]{0}', space=vmem, size = 0x8000, scoped, tag = 'input window, operand 8, single buffered']
    #allocation14 [shape = 'u8[16384]{0}', space=vmem, size = 0x4000, scoped, tag = 'output window, operand 0, single buffered']
    %15 = vsyncpa [#allocation3], 0
    %16 = vsyncpa [#allocation6], 0
    %17 = vsyncpa [#allocation9], 0
    %18 = vsyncpa [#allocation12], 0
    %19 = vsyncpa [#allocation4], 0
    // Predicated region
    $region2: #{tpu_custom_call.1} parent=1 // pred_check
      _
    $region3: #{tpu_custom_call.1} parent=1 // pred_check_branch
      %21 = sbr.rel (0) target = $region5
    $region4: #{tpu_custom_call.1} parent=1 // pred_region
      %s23 = ssub.s32 512, 512
      %24 = vsyncadd [#allocation3], %s23
      %s25 = sshll.u32 [#allocation2], 4
      %s26 = int_to_ptr.vmem [resolvable:$true] %s25
      %31 = dma.hbm_to_vmem [thread:$0]  %s0, 512, %s26, [#allocation3], 128, 128, 8
    $region5: #{tpu_custom_call.1} parent=1 // pred_fallthru
      _
    // Predicated region
    $region6: #{tpu_custom_call.1} parent=1 // pred_check
      _
    $region7: #{tpu_custom_call.1} parent=1 // pred_check_branch
      %33 = sbr.rel (0) target = $region9
    $region8: #{tpu_custom_call.1} parent=1 // pred_region
      %s35 = ssub.s32 512, 512
      %36 = vsyncadd [#allocation6], %s35
      %s37 = sshll.u32 [#allocation5], 4
      %s38 = int_to_ptr.vmem [resolvable:$true] %s37
      %43 = dma.hbm_to_vmem [thread:$0]  %s1, 512, %s38, [#allocation6], 128, 128, 8
    $region9: #{tpu_custom_call.1} parent=1 // pred_fallthru
      _
    // Predicated region
    $region10: #{tpu_custom_call.1} parent=1 // pred_check
      _
    $region11: #{tpu_custom_call.1} parent=1 // pred_check_branch
      %45 = sbr.rel (0) target = $region13
    $region12: #{tpu_custom_call.1} parent=1 // pred_region
      %s47 = ssub.s32 512, 512
      %48 = vsyncadd [#allocation6], %s47
      %s49 = sshll.u32 [#allocation7], 4
      %s50 = int_to_ptr.vmem [resolvable:$true] %s49
      %55 = dma.hbm_to_vmem [thread:$0]  %s2, 512, %s50, [#allocation6], 128, 128, 8
    $region13: #{tpu_custom_call.1} parent=1 // pred_fallthru
      _
    // Predicated region
    $region14: #{tpu_custom_call.1} parent=1 // pred_check
      _
    $region15: #{tpu_custom_call.1} parent=1 // pred_check_branch
      %57 = sbr.rel (0) target = $region17
    $region16: #{tpu_custom_call.1} parent=1 // pred_region
      %s59 = ssub.s32 1024, 1024
      %60 = vsyncadd [#allocation9], %s59
      %s61 = sshll.u32 [#allocation8], 4
      %s62 = int_to_ptr.vmem [resolvable:$true] %s61
      %67 = dma.hbm_to_vmem [thread:$0]  %s3, 1024, %s62, [#allocation9], 128, 128, 8
    $region17: #{tpu_custom_call.1} parent=1 // pred_fallthru
      _
    // Predicated region
    $region18: #{tpu_custom_call.1} parent=1 // pred_check
      _
    $region19: #{tpu_custom_call.1} parent=1 // pred_check_branch
      %69 = sbr.rel (0) target = $region21
    $region20: #{tpu_custom_call.1} parent=1 // pred_region
      %s71 = ssub.s32 1024, 1024
      %72 = vsyncadd [#allocation9], %s71
      %s73 = sshll.u32 [#allocation10], 4
      %s74 = int_to_ptr.vmem [resolvable:$true] %s73
      %79 = dma.hbm_to_vmem [thread:$0]  %s4, 1024, %s74, [#allocation9], 64, 64, 4
    $region21: #{tpu_custom_call.1} parent=1 // pred_fallthru
      _
    // Predicated region
    $region22: #{tpu_custom_call.1} parent=1 // pred_check
      _
    $region23: #{tpu_custom_call.1} parent=1 // pred_check_branch
      %81 = sbr.rel (0) target = $region25
    $region24: #{tpu_custom_call.1} parent=1 // pred_region
      _
    $region25: #{tpu_custom_call.1} parent=1 // pred_fallthru
      _
    // Predicated region
    $region26: #{tpu_custom_call.1} parent=1 // pred_check
      _
    $region27: #{tpu_custom_call.1} parent=1 // pred_check_branch
      %83 = sbr.rel (0) target = $region29
    $region28: #{tpu_custom_call.1} parent=1 // pred_region
      %s85 = ssub.s32 1024, 1024
      %86 = vsyncadd [#allocation12], %s85
      %s87 = sshll.u32 [#allocation11], 4
      %s88 = int_to_ptr.vmem [resolvable:$true] %s87
      %93 = dma.hbm_to_vmem [thread:$0]  %s6, 1024, %s88, [#allocation12], 64, 64, 4
    $region29: #{tpu_custom_call.1} parent=1 // pred_fallthru
      _
    // Predicated region
    $region30: #{tpu_custom_call.1} parent=1 // pred_check
      _
    $region31: #{tpu_custom_call.1} parent=1 // pred_check_branch
      %95 = sbr.rel (0) target = $region33
    $region32: #{tpu_custom_call.1} parent=1 // pred_region
      _
    $region33: #{tpu_custom_call.1} parent=1 // pred_fallthru
      _
    // Predicated region
    $region34: #{tpu_custom_call.1} parent=1 // pred_check
      _
    $region35: #{tpu_custom_call.1} parent=1 // pred_check_branch
      %97 = sbr.rel (0) target = $region37
    $region36: #{tpu_custom_call.1} parent=1 // pred_region
      %s99 = ssub.s32 1024, 1024
      %100 = vsyncadd [#allocation12], %s99
      %s101 = sshll.u32 [#allocation13], 4
      %s102 = int_to_ptr.vmem [resolvable:$true] %s101
      %107 = dma.hbm_to_vmem [thread:$0]  %s8, 1024, %s102, [#allocation12], 64, 64, 4
    $region37: #{tpu_custom_call.1} parent=1 // pred_fallthru
      _
    // Predicated region
    $region38: #{tpu_custom_call.1} parent=1 // pred_check
      _
    $region39: #{tpu_custom_call.1} parent=1 // pred_check_branch
      %109 = sbr.rel (0) target = $region41
    $region40: #{tpu_custom_call.1} parent=1 // pred_region
      _
    $region41: #{tpu_custom_call.1} parent=1 // pred_fallthru
      _
    // Predicated region
    $region42: #{tpu_custom_call.1} parent=1 // pred_check
      _
    $region43: #{tpu_custom_call.1} parent=1 // pred_check_branch
      %111 = sbr.rel (0) target = $region45
    $region44: #{tpu_custom_call.1} parent=1 // pred_region
      %112 = dma.done [#allocation3], 512
    $region45: #{tpu_custom_call.1} parent=1 // pred_fallthru
      _
    // Predicated region
    $region46: #{tpu_custom_call.1} parent=1 // pred_check
      _
    $region47: #{tpu_custom_call.1} parent=1 // pred_check_branch
      %114 = sbr.rel (0) target = $region49
    $region48: #{tpu_custom_call.1} parent=1 // pred_region
      %115 = dma.done [#allocation6], 512
    $region49: #{tpu_custom_call.1} parent=1 // pred_fallthru
      _
    // Predicated region
    $region50: #{tpu_custom_call.1} parent=1 // pred_check
      _
    $region51: #{tpu_custom_call.1} parent=1 // pred_check_branch
      %117 = sbr.rel (0) target = $region53
    $region52: #{tpu_custom_call.1} parent=1 // pred_region
      %118 = dma.done [#allocation6], 512
    $region53: #{tpu_custom_call.1} parent=1 // pred_fallthru
      _
    // Predicated region
    $region54: #{tpu_custom_call.1} parent=1 // pred_check
      _
    $region55: #{tpu_custom_call.1} parent=1 // pred_check_branch
      %120 = sbr.rel (0) target = $region57
    $region56: #{tpu_custom_call.1} parent=1 // pred_region
      %121 = dma.done [#allocation9], 1024
    $region57: #{tpu_custom_call.1} parent=1 // pred_fallthru
      _
    // Predicated region
    $region58: #{tpu_custom_call.1} parent=1 // pred_check
      _
    $region59: #{tpu_custom_call.1} parent=1 // pred_check_branch
      %123 = sbr.rel (0) target = $region61
    $region60: #{tpu_custom_call.1} parent=1 // pred_region
      %124 = dma.done [#allocation9], 1024
    $region61: #{tpu_custom_call.1} parent=1 // pred_fallthru
      _
    // Predicated region
    $region62: #{tpu_custom_call.1} parent=1 // pred_check
      _
    $region63: #{tpu_custom_call.1} parent=1 // pred_check_branch
      %126 = sbr.rel (0) target = $region65
    $region64: #{tpu_custom_call.1} parent=1 // pred_region
      %127 = dma.done [#allocation12], 1024
    $region65: #{tpu_custom_call.1} parent=1 // pred_fallthru
      _
    // Predicated region
    $region66: #{tpu_custom_call.1} parent=1 // pred_check
      _
    $region67: #{tpu_custom_call.1} parent=1 // pred_check_branch
      %129 = sbr.rel (0) target = $region69
    $region68: #{tpu_custom_call.1} parent=1 // pred_region
      %130 = dma.done [#allocation12], 1024
    $region69: #{tpu_custom_call.1} parent=1 // pred_fallthru
      _
    %v132 = vld [vmem:[#allocation2] sm:$0xff]
    %v133 = vld [vmem:[#allocation2 + $0x8] sm:$0xff]
    %v134 = vld [vmem:[#allocation2 + $0x10] sm:$0xff]
    %v135 = vld [vmem:[#allocation2 + $0x18] sm:$0xff]
    %v136 = vpack.c.bf16 %v133, %v132
    %v137 = vpack.c.bf16 %v135, %v134
    %v138 = vld [vmem:[#allocation5] sm:$0xff]
    %v139 = vld [vmem:[#allocation5 + $0x8] sm:$0xff]
    %v140 = vld [vmem:[#allocation5 + $0x10] sm:$0xff]
    %v141 = vld [vmem:[#allocation5 + $0x18] sm:$0xff]
    %v142 = vpack.c.bf16 %v139, %v138
    %v143 = vpack.c.bf16 %v141, %v140
    %v144 = vld [vmem:[#allocation7] sm:$0xff]
    %v145 = vld [vmem:[#allocation7 + $0x8] sm:$0xff]
    %v146 = vld [vmem:[#allocation7 + $0x10] sm:$0xff]
    %v147 = vld [vmem:[#allocation7 + $0x18] sm:$0xff]
    %v148 = vpack.c.bf16 %v145, %v144
    %v149 = vpack.c.bf16 %v147, %v146
    %v150 = vld [vmem:[#allocation10] sm:$0xf]
    %v151 = vld [vmem:[#allocation10 + $0x4] sm:$0xf]
    %v152 = vld [vmem:[#allocation10 + $0x8] sm:$0xf]
    %v153 = vld [vmem:[#allocation10 + $0xc] sm:$0xf]
    %v154 = vld [vmem:[#allocation10 + $0x10] sm:$0xf]
    %v155 = vld [vmem:[#allocation10 + $0x14] sm:$0xf]
    %v156 = vld [vmem:[#allocation10 + $0x18] sm:$0xf]
    %v157 = vld [vmem:[#allocation10 + $0x1c] sm:$0xf]
    %v158 = vld [vmem:[#allocation10 + $0x20] sm:$0xf]
    %v159 = vld [vmem:[#allocation10 + $0x24] sm:$0xf]
    %v160 = vld [vmem:[#allocation10 + $0x28] sm:$0xf]
    %v161 = vld [vmem:[#allocation10 + $0x2c] sm:$0xf]
    %v162 = vld [vmem:[#allocation10 + $0x30] sm:$0xf]
    %v163 = vld [vmem:[#allocation10 + $0x34] sm:$0xf]
    %v164 = vld [vmem:[#allocation10 + $0x38] sm:$0xf]
    %v165 = vld [vmem:[#allocation10 + $0x3c] sm:$0xf]
    %v166 = vld [vmem:[%s5] sm:$0x1]
    %v168 = vlaneseq
    %v169 = vshrl.u32 %v168, 7
    %v170 = vsub.s32 0, %v169
    %v171 = vrot.slane %v166, %v170
    %v189 = vunpack.c.l.b16 %v150
    %v190 = vunpack.c.l.b16 %v151
    %v191 = vunpack.c.l.b16 %v152
    %v192 = vunpack.c.l.b16 %v153
    %v193 = vunpack.c.l.b16 %v154
    %v194 = vunpack.c.l.b16 %v155
    %v195 = vunpack.c.l.b16 %v156
    %v196 = vunpack.c.l.b16 %v157
    %v197 = vunpack.c.l.b16 %v158
    %v198 = vunpack.c.l.b16 %v159
    %v199 = vunpack.c.l.b16 %v160
    %v200 = vunpack.c.l.b16 %v161
    %v201 = vunpack.c.l.b16 %v162
    %v202 = vunpack.c.l.b16 %v163
    %v203 = vunpack.c.l.b16 %v164
    %v204 = vunpack.c.l.b16 %v165
    %v205 = vpack.c.b16 %v190, %v189
    %v206 = vpack.c.b16 %v192, %v191
    %v207 = vpack.c.b16 %v194, %v193
    %v208 = vpack.c.b16 %v196, %v195
    %v209 = vpack.c.b16 %v198, %v197
    %v210 = vpack.c.b16 %v200, %v199
    %v211 = vpack.c.b16 %v202, %v201
    %v212 = vpack.c.b16 %v204, %v203
    %221 = vmatprep.subr.bf16.mxu0 0
    %222 = vmatpush1.bf16.msra.mxu0 %v212
    %223 = vmatprep.subr.bf16.mxu0 0
    %224 = vmatpush1.bf16.msra.mxu0 %v211
    %225 = vmatprep.subr.bf16.mxu0 0
    %226 = vmatpush1.bf16.msra.mxu0 %v210
    %227 = vmatprep.subr.bf16.mxu0 0
    %228 = vmatpush1.bf16.msra.mxu0 %v209
    %229 = vmatprep.subr.bf16.mxu0 0
    %230 = vmatpush1.bf16.msra.mxu0 %v208
    %231 = vmatprep.subr.bf16.mxu0 0
    %232 = vmatpush1.bf16.msra.mxu0 %v207
    %233 = vmatprep.subr.bf16.mxu0 0
    %234 = vmatpush1.bf16.msra.mxu0 %v206
    %235 = vmatprep.subr.bf16.mxu0 0
    %236 = vmatpush1.bf16.msra.mxu0 %v205
    %237 = vmatprep.subr.bf16.mxu0 0
    %238 = vmatpush2.bf16.msra.mxu0 0
    %239 = vmatprep.subr.bf16.mxu0 0
    %240 = vmatpush2.bf16.msra.mxu0 0
    %241 = vmatprep.subr.bf16.mxu0 0
    %242 = vmatpush2.bf16.msra.mxu0 0
    %243 = vmatprep.subr.bf16.mxu0 0
    %244 = vmatpush2.bf16.msra.mxu0 0
    %245 = vmatprep.subr.bf16.mxu0 0
    %246 = vmatpush2.bf16.msra.mxu0 0
    %247 = vmatprep.subr.bf16.mxu0 0
    %248 = vmatpush2.bf16.msra.mxu0 0
    %249 = vmatprep.subr.bf16.mxu0 0
    %250 = vmatpush2.bf16.msra.mxu0 0
    %251 = vmatprep.subr.bf16.mxu0 0
    %252 = vmatpush2.bf16.msra.mxu0 0
    %253 = vmatprep.mubr.bf16.mxu0 0
    %254 = vmatmul.mubr.bf16.gmra.mxu0 %v136
    %v255 = vpop.f32.mrf.mxu0
    %v256 = vadd.f32 %v171, %v255
    %v257 = vpop.f32.mrf.mxu0
    %v258 = vpop.f32.mrf.mxu0
    %v259 = vadd.f32 %v171, %v258
    %v260 = vpop.f32.mrf.mxu0
    %261 = vmatprep.mubr.bf16.mxu0 0
    %262 = vmatmul.mubr.bf16.gmra.mxu0 %v137
    %v263 = vpop.f32.mrf.mxu0
    %v264 = vadd.f32 %v171, %v263
    %v265 = vpop.f32.mrf.mxu0
    %v266 = vpop.f32.mrf.mxu0
    %v267 = vadd.f32 %v171, %v266
    %v268 = vpop.f32.mrf.mxu0
    %269 = vdwg.mxu0
    %v270 = vmul.f32 %v256, 0.17677669
    %v271 = vmul.f32 %v259, 0.17677669
    %v272 = vmul.f32 %v264, 0.17677669
    %v273 = vmul.f32 %v267, 0.17677669
    %274 = vmatprep.subr.bf16.mxu0 0
    %275 = vmatpush1.bf16.msra.mxu0 %v212
    %276 = vmatprep.subr.bf16.mxu0 0
    %277 = vmatpush1.bf16.msra.mxu0 %v211
    %278 = vmatprep.subr.bf16.mxu0 0
    %279 = vmatpush1.bf16.msra.mxu0 %v210
    %280 = vmatprep.subr.bf16.mxu0 0
    %281 = vmatpush1.bf16.msra.mxu0 %v209
    %282 = vmatprep.subr.bf16.mxu0 0
    %283 = vmatpush1.bf16.msra.mxu0 %v208
    %284 = vmatprep.subr.bf16.mxu0 0
    %285 = vmatpush1.bf16.msra.mxu0 %v207
    %286 = vmatprep.subr.bf16.mxu0 0
    %287 = vmatpush1.bf16.msra.mxu0 %v206
    %288 = vmatprep.subr.bf16.mxu0 0
    %289 = vmatpush1.bf16.msra.mxu0 %v205
    %290 = vmatprep.subr.bf16.mxu0 0
    %291 = vmatpush2.bf16.msra.mxu0 0
    %292 = vmatprep.subr.bf16.mxu0 0
    %293 = vmatpush2.bf16.msra.mxu0 0
    %294 = vmatprep.subr.bf16.mxu0 0
    %295 = vmatpush2.bf16.msra.mxu0 0
    %296 = vmatprep.subr.bf16.mxu0 0
    %297 = vmatpush2.bf16.msra.mxu0 0
    %298 = vmatprep.subr.bf16.mxu0 0
    %299 = vmatpush2.bf16.msra.mxu0 0
    %300 = vmatprep.subr.bf16.mxu0 0
    %301 = vmatpush2.bf16.msra.mxu0 0
    %302 = vmatprep.subr.bf16.mxu0 0
    %303 = vmatpush2.bf16.msra.mxu0 0
    %304 = vmatprep.subr.bf16.mxu0 0
    %305 = vmatpush2.bf16.msra.mxu0 0
    %306 = vmatprep.mubr.bf16.mxu0 0
    %307 = vmatmul.mubr.bf16.gmra.mxu0 %v142
    %v308 = vpop.f32.mrf.mxu0
    %v309 = vadd.f32 %v171, %v308
    %v310 = vpop.f32.mrf.mxu0
    %v311 = vpop.f32.mrf.mxu0
    %v312 = vadd.f32 %v171, %v311
    %v313 = vpop.f32.mrf.mxu0
    %314 = vmatprep.mubr.bf16.mxu0 0
    %315 = vmatmul.mubr.bf16.gmra.mxu0 %v143
    %v316 = vpop.f32.mrf.mxu0
    %v317 = vadd.f32 %v171, %v316
    %v318 = vpop.f32.mrf.mxu0
    %v319 = vpop.f32.mrf.mxu0
    %v320 = vadd.f32 %v171, %v319
    %v321 = vpop.f32.mrf.mxu0
    %322 = vdwg.mxu0
    %v323 = vld [vmem:[#allocation11] sm:$0xf]
    %v324 = vld [vmem:[#allocation11 + $0x4] sm:$0xf]
    %v325 = vld [vmem:[#allocation11 + $0x8] sm:$0xf]
    %v326 = vld [vmem:[#allocation11 + $0xc] sm:$0xf]
    %v327 = vld [vmem:[#allocation11 + $0x10] sm:$0xf]
    %v328 = vld [vmem:[#allocation11 + $0x14] sm:$0xf]
    %v329 = vld [vmem:[#allocation11 + $0x18] sm:$0xf]
    %v330 = vld [vmem:[#allocation11 + $0x1c] sm:$0xf]
    %v331 = vld [vmem:[#allocation11 + $0x20] sm:$0xf]
    %v332 = vld [vmem:[#allocation11 + $0x24] sm:$0xf]
    %v333 = vld [vmem:[#allocation11 + $0x28] sm:$0xf]
    %v334 = vld [vmem:[#allocation11 + $0x2c] sm:$0xf]
    %v335 = vld [vmem:[#allocation11 + $0x30] sm:$0xf]
    %v336 = vld [vmem:[#allocation11 + $0x34] sm:$0xf]
    %v337 = vld [vmem:[#allocation11 + $0x38] sm:$0xf]
    %v338 = vld [vmem:[#allocation11 + $0x3c] sm:$0xf]
    %v339 = vld [vmem:[%s7] sm:$0x1]
    %v341 = vlaneseq
    %v342 = vshrl.u32 %v341, 7
    %v343 = vsub.s32 0, %v342
    %v344 = vrot.slane %v339, %v343
    %v362 = vunpack.c.l.b16 %v323
    %v363 = vunpack.c.l.b16 %v324
    %v364 = vunpack.c.l.b16 %v325
    %v365 = vunpack.c.l.b16 %v326
    %v366 = vunpack.c.l.b16 %v327
    %v367 = vunpack.c.l.b16 %v328
    %v368 = vunpack.c.l.b16 %v329
    %v369 = vunpack.c.l.b16 %v330
    %v370 = vunpack.c.l.b16 %v331
    %v371 = vunpack.c.l.b16 %v332
    %v372 = vunpack.c.l.b16 %v333
    %v373 = vunpack.c.l.b16 %v334
    %v374 = vunpack.c.l.b16 %v335
    %v375 = vunpack.c.l.b16 %v336
    %v376 = vunpack.c.l.b16 %v337
    %v377 = vunpack.c.l.b16 %v338
    %v378 = vpack.c.b16 %v363, %v362
    %v379 = vpack.c.b16 %v365, %v364
    %v380 = vpack.c.b16 %v367, %v366
    %v381 = vpack.c.b16 %v369, %v368
    %v382 = vpack.c.b16 %v371, %v370
    %v383 = vpack.c.b16 %v373, %v372
    %v384 = vpack.c.b16 %v375, %v374
    %v385 = vpack.c.b16 %v377, %v376
    %394 = vmatprep.subr.bf16.mxu0 0
    %395 = vmatpush1.bf16.msra.mxu0 %v385
    %396 = vmatprep.subr.bf16.mxu0 0
    %397 = vmatpush1.bf16.msra.mxu0 %v384
    %398 = vmatprep.subr.bf16.mxu0 0
    %399 = vmatpush1.bf16.msra.mxu0 %v383
    %400 = vmatprep.subr.bf16.mxu0 0
    %401 = vmatpush1.bf16.msra.mxu0 %v382
    %402 = vmatprep.subr.bf16.mxu0 0
    %403 = vmatpush1.bf16.msra.mxu0 %v381
    %404 = vmatprep.subr.bf16.mxu0 0
    %405 = vmatpush1.bf16.msra.mxu0 %v380
    %406 = vmatprep.subr.bf16.mxu0 0
    %407 = vmatpush1.bf16.msra.mxu0 %v379
    %408 = vmatprep.subr.bf16.mxu0 0
    %409 = vmatpush1.bf16.msra.mxu0 %v378
    %410 = vmatprep.subr.bf16.mxu0 0
    %411 = vmatpush2.bf16.msra.mxu0 0
    %412 = vmatprep.subr.bf16.mxu0 0
    %413 = vmatpush2.bf16.msra.mxu0 0
    %414 = vmatprep.subr.bf16.mxu0 0
    %415 = vmatpush2.bf16.msra.mxu0 0
    %416 = vmatprep.subr.bf16.mxu0 0
    %417 = vmatpush2.bf16.msra.mxu0 0
    %418 = vmatprep.subr.bf16.mxu0 0
    %419 = vmatpush2.bf16.msra.mxu0 0
    %420 = vmatprep.subr.bf16.mxu0 0
    %421 = vmatpush2.bf16.msra.mxu0 0
    %422 = vmatprep.subr.bf16.mxu0 0
    %423 = vmatpush2.bf16.msra.mxu0 0
    %424 = vmatprep.subr.bf16.mxu0 0
    %425 = vmatpush2.bf16.msra.mxu0 0
    %426 = vmatprep.mubr.bf16.mxu0 0
    %427 = vmatmul.mubr.bf16.gmra.mxu0 %v148
    %v428 = vpop.f32.mrf.mxu0
    %v429 = vadd.f32 %v344, %v428
    %v430 = vpop.f32.mrf.mxu0
    %v431 = vpop.f32.mrf.mxu0
    %v432 = vadd.f32 %v344, %v431
    %v433 = vpop.f32.mrf.mxu0
    %434 = vmatprep.mubr.bf16.mxu0 0
    %435 = vmatmul.mubr.bf16.gmra.mxu0 %v149
    %v436 = vpop.f32.mrf.mxu0
    %v437 = vadd.f32 %v344, %v436
    %v438 = vpop.f32.mrf.mxu0
    %v439 = vpop.f32.mrf.mxu0
    %v440 = vadd.f32 %v344, %v439
    %v441 = vpop.f32.mrf.mxu0
    %442 = vdwg.mxu0
    %447 = vrot.lane.b32.xlu0 %v270, 96
    %v448 = vpop.permute.xlu0 %447
    %449 = vrot.lane.b32.xlu0 %v271, 96
    %v450 = vpop.permute.xlu0 %449
    %451 = vrot.lane.b32.xlu0 %v272, 96
    %v452 = vpop.permute.xlu0 %451
    %453 = vrot.lane.b32.xlu0 %v273, 96
    %v454 = vpop.permute.xlu0 %453
    %459 = vrot.lane.b32.xlu0 %v270, 64
    %v460 = vpop.permute.xlu0 %459
    %461 = vrot.lane.b32.xlu0 %v271, 64
    %v462 = vpop.permute.xlu0 %461
    %463 = vrot.lane.b32.xlu0 %v272, 64
    %v464 = vpop.permute.xlu0 %463
    %465 = vrot.lane.b32.xlu0 %v273, 64
    %v466 = vpop.permute.xlu0 %465
    %471 = vrot.lane.b32.xlu0 %v270, 32
    %v472 = vpop.permute.xlu0 %471
    %473 = vrot.lane.b32.xlu0 %v271, 32
    %v474 = vpop.permute.xlu0 %473
    %475 = vrot.lane.b32.xlu0 %v272, 32
    %v476 = vpop.permute.xlu0 %475
    %477 = vrot.lane.b32.xlu0 %v273, 32
    %v478 = vpop.permute.xlu0 %477
    %v483 = vcombine.low %v270, %v460
    %v484 = vcombine.high %v270, %v460
    %v486 = vunpack.c.l.s4 1983009808
    %v487 = vunpack.c.0.s8 %v486
    %v488 = vlaneseq
    %v489 = vshrl.u32 %v488, 7
    %v490 = vsub.s32 %v487, %v489
    %v491 = vrot.slane %v483, %v490
    %v493 = vunpack.c.l.s4 1983009808
    %v494 = vunpack.c.0.s8 %v493
    %v495 = vlaneseq
    %v496 = vshrl.u32 %v495, 7
    %v497 = vsub.s32 %v494, %v496
    %v498 = vrot.slane %v484, %v497
    %v499 = vcombine.low %v448, %v472
    %v500 = vcombine.high %v448, %v472
    %v502 = vunpack.c.l.s4 1983009808
    %v503 = vunpack.c.0.s8 %v502
    %v504 = vlaneseq
    %v505 = vshrl.u32 %v504, 7
    %v506 = vsub.s32 %v503, %v505
    %v507 = vrot.slane %v499, %v506
    %v509 = vunpack.c.l.s4 1983009808
    %v510 = vunpack.c.0.s8 %v509
    %v511 = vlaneseq
    %v512 = vshrl.u32 %v511, 7
    %v513 = vsub.s32 %v510, %v512
    %v514 = vrot.slane %v500, %v513
    %v515 = vcombine.low %v491, %v507
    %v516 = vcombine.high %v491, %v507
    %v518 = vunpack.c.l.s4 1934713408
    %v519 = vunpack.c.0.s8 %v518
    %v520 = vlaneseq
    %v521 = vshrl.u32 %v520, 7
    %v522 = vsub.s32 %v519, %v521
    %v523 = vrot.slane %v515, %v522
    %v525 = vunpack.c.l.s4 1934713408
    %v526 = vunpack.c.0.s8 %v525
    %v527 = vlaneseq
    %v528 = vshrl.u32 %v527, 7
    %v529 = vsub.s32 %v526, %v528
    %v530 = vrot.slane %v516, %v529
    %v531 = vcombine.low %v498, %v514
    %v532 = vcombine.high %v498, %v514
    %v534 = vunpack.c.l.s4 1934713408
    %v535 = vunpack.c.0.s8 %v534
    %v536 = vlaneseq
    %v537 = vshrl.u32 %v536, 7
    %v538 = vsub.s32 %v535, %v537
    %v539 = vrot.slane %v531, %v538
    %v541 = vunpack.c.l.s4 1934713408
    %v542 = vunpack.c.0.s8 %v541
    %v543 = vlaneseq
    %v544 = vshrl.u32 %v543, 7
    %v545 = vsub.s32 %v542, %v544
    %v546 = vrot.slane %v532, %v545
    %v547 = vcombine.high %v523, 0.0
    %v548 = vcombine.high %v530, 0.0
    %v549 = vcombine.high %v539, 0.0
    %v550 = vcombine.high %v546, 0.0
    %v551 = vcombine.low %v271, %v462
    %v552 = vcombine.high %v271, %v462
    %v554 = vunpack.c.l.s4 1983009808
    %v555 = vunpack.c.0.s8 %v554
    %v556 = vlaneseq
    %v557 = vshrl.u32 %v556, 7
    %v558 = vsub.s32 %v555, %v557
    %v559 = vrot.slane %v551, %v558
    %v561 = vunpack.c.l.s4 1983009808
    %v562 = vunpack.c.0.s8 %v561
    %v563 = vlaneseq
    %v564 = vshrl.u32 %v563, 7
    %v565 = vsub.s32 %v562, %v564
    %v566 = vrot.slane %v552, %v565
    %v567 = vcombine.low %v450, %v474
    %v568 = vcombine.high %v450, %v474
    %v570 = vunpack.c.l.s4 1983009808
    %v571 = vunpack.c.0.s8 %v570
    %v572 = vlaneseq
    %v573 = vshrl.u32 %v572, 7
    %v574 = vsub.s32 %v571, %v573
    %v575 = vrot.slane %v567, %v574
    %v577 = vunpack.c.l.s4 1983009808
    %v578 = vunpack.c.0.s8 %v577
    %v579 = vlaneseq
    %v580 = vshrl.u32 %v579, 7
    %v581 = vsub.s32 %v578, %v580
    %v582 = vrot.slane %v568, %v581
    %v583 = vcombine.low %v559, %v575
    %v584 = vcombine.high %v559, %v575
    %v586 = vunpack.c.l.s4 1934713408
    %v587 = vunpack.c.0.s8 %v586
    %v588 = vlaneseq
    %v589 = vshrl.u32 %v588, 7
    %v590 = vsub.s32 %v587, %v589
    %v591 = vrot.slane %v583, %v590
    %v593 = vunpack.c.l.s4 1934713408
    %v594 = vunpack.c.0.s8 %v593
    %v595 = vlaneseq
    %v596 = vshrl.u32 %v595, 7
    %v597 = vsub.s32 %v594, %v596
    %v598 = vrot.slane %v584, %v597
    %v599 = vcombine.low %v566, %v582
    %v600 = vcombine.high %v566, %v582
    %v602 = vunpack.c.l.s4 1934713408
    %v603 = vunpack.c.0.s8 %v602
    %v604 = vlaneseq
    %v605 = vshrl.u32 %v604, 7
    %v606 = vsub.s32 %v603, %v605
    %v607 = vrot.slane %v599, %v606
    %v609 = vunpack.c.l.s4 1934713408
    %v610 = vunpack.c.0.s8 %v609
    %v611 = vlaneseq
    %v612 = vshrl.u32 %v611, 7
    %v613 = vsub.s32 %v610, %v612
    %v614 = vrot.slane %v600, %v613
    %v615 = vcombine.high %v591, 0.0
    %v616 = vcombine.high %v598, 0.0
    %v617 = vcombine.high %v607, 0.0
    %v618 = vcombine.high %v614, 0.0
    %v619 = vcombine.low %v272, %v464
    %v620 = vcombine.high %v272, %v464
    %v622 = vunpack.c.l.s4 1983009808
    %v623 = vunpack.c.0.s8 %v622
    %v624 = vlaneseq
    %v625 = vshrl.u32 %v624, 7
    %v626 = vsub.s32 %v623, %v625
    %v627 = vrot.slane %v619, %v626
    %v629 = vunpack.c.l.s4 1983009808
    %v630 = vunpack.c.0.s8 %v629
    %v631 = vlaneseq
    %v632 = vshrl.u32 %v631, 7
    %v633 = vsub.s32 %v630, %v632
    %v634 = vrot.slane %v620, %v633
    %v635 = vcombine.low %v452, %v476
    %v636 = vcombine.high %v452, %v476
    %v638 = vunpack.c.l.s4 1983009808
    %v639 = vunpack.c.0.s8 %v638
    %v640 = vlaneseq
    %v641 = vshrl.u32 %v640, 7
    %v642 = vsub.s32 %v639, %v641
    %v643 = vrot.slane %v635, %v642
    %v645 = vunpack.c.l.s4 1983009808
    %v646 = vunpack.c.0.s8 %v645
    %v647 = vlaneseq
    %v648 = vshrl.u32 %v647, 7
    %v649 = vsub.s32 %v646, %v648
    %v650 = vrot.slane %v636, %v649
    %v651 = vcombine.low %v627, %v643
    %v652 = vcombine.high %v627, %v643
    %v654 = vunpack.c.l.s4 1934713408
    %v655 = vunpack.c.0.s8 %v654
    %v656 = vlaneseq
    %v657 = vshrl.u32 %v656, 7
    %v658 = vsub.s32 %v655, %v657
    %v659 = vrot.slane %v651, %v658
    %v661 = vunpack.c.l.s4 1934713408
    %v662 = vunpack.c.0.s8 %v661
    %v663 = vlaneseq
    %v664 = vshrl.u32 %v663, 7
    %v665 = vsub.s32 %v662, %v664
    %v666 = vrot.slane %v652, %v665
    %v667 = vcombine.low %v634, %v650
    %v668 = vcombine.high %v634, %v650
    %v670 = vunpack.c.l.s4 1934713408
    %v671 = vunpack.c.0.s8 %v670
    %v672 = vlaneseq
    %v673 = vshrl.u32 %v672, 7
    %v674 = vsub.s32 %v671, %v673
    %v675 = vrot.slane %v667, %v674
    %v677 = vunpack.c.l.s4 1934713408
    %v678 = vunpack.c.0.s8 %v677
    %v679 = vlaneseq
    %v680 = vshrl.u32 %v679, 7
    %v681 = vsub.s32 %v678, %v680
    %v682 = vrot.slane %v668, %v681
    %v683 = vcombine.high %v659, 0.0
    %v684 = vcombine.high %v666, 0.0
    %v685 = vcombine.high %v675, 0.0
    %v686 = vcombine.high %v682, 0.0
    %v687 = vcombine.low %v273, %v466
    %v688 = vcombine.high %v273, %v466
    %v690 = vunpack.c.l.s4 1983009808
    %v691 = vunpack.c.0.s8 %v690
    %v692 = vlaneseq
    %v693 = vshrl.u32 %v692, 7
    %v694 = vsub.s32 %v691, %v693
    %v695 = vrot.slane %v687, %v694
    %v697 = vunpack.c.l.s4 1983009808
    %v698 = vunpack.c.0.s8 %v697
    %v699 = vlaneseq
    %v700 = vshrl.u32 %v699, 7
    %v701 = vsub.s32 %v698, %v700
    %v702 = vrot.slane %v688, %v701
    %v703 = vcombine.low %v454, %v478
    %v704 = vcombine.high %v454, %v478
    %v706 = vunpack.c.l.s4 1983009808
    %v707 = vunpack.c.0.s8 %v706
    %v708 = vlaneseq
    %v709 = vshrl.u32 %v708, 7
    %v710 = vsub.s32 %v707, %v709
    %v711 = vrot.slane %v703, %v710
    %v713 = vunpack.c.l.s4 1983009808
    %v714 = vunpack.c.0.s8 %v713
    %v715 = vlaneseq
    %v716 = vshrl.u32 %v715, 7
    %v717 = vsub.s32 %v714, %v716
    %v718 = vrot.slane %v704, %v717
    %v719 = vcombine.low %v695, %v711
    %v720 = vcombine.high %v695, %v711
    %v722 = vunpack.c.l.s4 1934713408
    %v723 = vunpack.c.0.s8 %v722
    %v724 = vlaneseq
    %v725 = vshrl.u32 %v724, 7
    %v726 = vsub.s32 %v723, %v725
    %v727 = vrot.slane %v719, %v726
    %v729 = vunpack.c.l.s4 1934713408
    %v730 = vunpack.c.0.s8 %v729
    %v731 = vlaneseq
    %v732 = vshrl.u32 %v731, 7
    %v733 = vsub.s32 %v730, %v732
    %v734 = vrot.slane %v720, %v733
    %v735 = vcombine.low %v702, %v718
    %v736 = vcombine.high %v702, %v718
    %v738 = vunpack.c.l.s4 1934713408
    %v739 = vunpack.c.0.s8 %v738
    %v740 = vlaneseq
    %v741 = vshrl.u32 %v740, 7
    %v742 = vsub.s32 %v739, %v741
    %v743 = vrot.slane %v735, %v742
    %v745 = vunpack.c.l.s4 1934713408
    %v746 = vunpack.c.0.s8 %v745
    %v747 = vlaneseq
    %v748 = vshrl.u32 %v747, 7
    %v749 = vsub.s32 %v746, %v748
    %v750 = vrot.slane %v736, %v749
    %v751 = vcombine.high %v727, 0.0
    %v752 = vcombine.high %v734, 0.0
    %v753 = vcombine.high %v743, 0.0
    %v754 = vcombine.high %v750, 0.0
    %v755 = vcombine.low %v523, %v530
    %v757 = vunpack.c.l.s4 1983009808
    %v758 = vunpack.c.0.s8 %v757
    %v759 = vlaneseq
    %v760 = vshrl.u32 %v759, 7
    %v761 = vsub.s32 %v758, %v760
    %v762 = vrot.slane %v755, %v761
    %v763 = vcombine.low %v547, %v548
    %v765 = vunpack.c.l.s4 1983009808
    %v766 = vunpack.c.0.s8 %v765
    %v767 = vlaneseq
    %v768 = vshrl.u32 %v767, 7
    %v769 = vsub.s32 %v766, %v768
    %v770 = vrot.slane %v763, %v769
    %v771 = vcombine.low %v539, %v546
    %v773 = vunpack.c.l.s4 1983009808
    %v774 = vunpack.c.0.s8 %v773
    %v775 = vlaneseq
    %v776 = vshrl.u32 %v775, 7
    %v777 = vsub.s32 %v774, %v776
    %v778 = vrot.slane %v771, %v777
    %v779 = vcombine.low %v549, %v550
    %v781 = vunpack.c.l.s4 1983009808
    %v782 = vunpack.c.0.s8 %v781
    %v783 = vlaneseq
    %v784 = vshrl.u32 %v783, 7
    %v785 = vsub.s32 %v782, %v784
    %v786 = vrot.slane %v779, %v785
    %v787 = vcombine.low %v762, %v770
    %v788 = vcombine.high %v762, %v770
    %v790 = vunpack.c.l.s4 1934713408
    %v791 = vunpack.c.0.s8 %v790
    %v792 = vlaneseq
    %v793 = vshrl.u32 %v792, 7
    %v794 = vsub.s32 %v791, %v793
    %v795 = vrot.slane %v787, %v794
    %v797 = vunpack.c.l.s4 1934713408
    %v798 = vunpack.c.0.s8 %v797
    %v799 = vlaneseq
    %v800 = vshrl.u32 %v799, 7
    %v801 = vsub.s32 %v798, %v800
    %v802 = vrot.slane %v788, %v801
    %v803 = vcombine.low %v778, %v786
    %v804 = vcombine.high %v778, %v786
    %v806 = vunpack.c.l.s4 1934713408
    %v807 = vunpack.c.0.s8 %v806
    %v808 = vlaneseq
    %v809 = vshrl.u32 %v808, 7
    %v810 = vsub.s32 %v807, %v809
    %v811 = vrot.slane %v803, %v810
    %v813 = vunpack.c.l.s4 1934713408
    %v814 = vunpack.c.0.s8 %v813
    %v815 = vlaneseq
    %v816 = vshrl.u32 %v815, 7
    %v817 = vsub.s32 %v814, %v816
    %v818 = vrot.slane %v804, %v817
    %v819 = vcombine.low %v795, %v811
    %v820 = vcombine.high %v795, %v811
    %v821 = vcombine.low %v802, %v818
    %v822 = vcombine.high %v802, %v818
    %v823 = vcombine.low %v591, %v598
    %v825 = vunpack.c.l.s4 1983009808
    %v826 = vunpack.c.0.s8 %v825
    %v827 = vlaneseq
    %v828 = vshrl.u32 %v827, 7
    %v829 = vsub.s32 %v826, %v828
    %v830 = vrot.slane %v823, %v829
    %v831 = vcombine.low %v615, %v616
    %v833 = vunpack.c.l.s4 1983009808
    %v834 = vunpack.c.0.s8 %v833
    %v835 = vlaneseq
    %v836 = vshrl.u32 %v835, 7
    %v837 = vsub.s32 %v834, %v836
    %v838 = vrot.slane %v831, %v837
    %v839 = vcombine.low %v607, %v614
    %v841 = vunpack.c.l.s4 1983009808
    %v842 = vunpack.c.0.s8 %v841
    %v843 = vlaneseq
    %v844 = vshrl.u32 %v843, 7
    %v845 = vsub.s32 %v842, %v844
    %v846 = vrot.slane %v839, %v845
    %v847 = vcombine.low %v617, %v618
    %v849 = vunpack.c.l.s4 1983009808
    %v850 = vunpack.c.0.s8 %v849
    %v851 = vlaneseq
    %v852 = vshrl.u32 %v851, 7
    %v853 = vsub.s32 %v850, %v852
    %v854 = vrot.slane %v847, %v853
    %v855 = vcombine.low %v830, %v838
    %v856 = vcombine.high %v830, %v838
    %v858 = vunpack.c.l.s4 1934713408
    %v859 = vunpack.c.0.s8 %v858
    %v860 = vlaneseq
    %v861 = vshrl.u32 %v860, 7
    %v862 = vsub.s32 %v859, %v861
    %v863 = vrot.slane %v855, %v862
    %v865 = vunpack.c.l.s4 1934713408
    %v866 = vunpack.c.0.s8 %v865
    %v867 = vlaneseq
    %v868 = vshrl.u32 %v867, 7
    %v869 = vsub.s32 %v866, %v868
    %v870 = vrot.slane %v856, %v869
    %v871 = vcombine.low %v846, %v854
    %v872 = vcombine.high %v846, %v854
    %v874 = vunpack.c.l.s4 1934713408
    %v875 = vunpack.c.0.s8 %v874
    %v876 = vlaneseq
    %v877 = vshrl.u32 %v876, 7
    %v878 = vsub.s32 %v875, %v877
    %v879 = vrot.slane %v871, %v878
    %v881 = vunpack.c.l.s4 1934713408
    %v882 = vunpack.c.0.s8 %v881
    %v883 = vlaneseq
    %v884 = vshrl.u32 %v883, 7
    %v885 = vsub.s32 %v882, %v884
    %v886 = vrot.slane %v872, %v885
    %v887 = vcombine.low %v863, %v879
    %v888 = vcombine.high %v863, %v879
    %v889 = vcombine.low %v870, %v886
    %v890 = vcombine.high %v870, %v886
    %v891 = vcombine.low %v659, %v666
    %v893 = vunpack.c.l.s4 1983009808
    %v894 = vunpack.c.0.s8 %v893
    %v895 = vlaneseq
    %v896 = vshrl.u32 %v895, 7
    %v897 = vsub.s32 %v894, %v896
    %v898 = vrot.slane %v891, %v897
    %v899 = vcombine.low %v683, %v684
    %v901 = vunpack.c.l.s4 1983009808
    %v902 = vunpack.c.0.s8 %v901
    %v903 = vlaneseq
    %v904 = vshrl.u32 %v903, 7
    %v905 = vsub.s32 %v902, %v904
    %v906 = vrot.slane %v899, %v905
    %v907 = vcombine.low %v675, %v682
    %v909 = vunpack.c.l.s4 1983009808
    %v910 = vunpack.c.0.s8 %v909
    %v911 = vlaneseq
    %v912 = vshrl.u32 %v911, 7
    %v913 = vsub.s32 %v910, %v912
    %v914 = vrot.slane %v907, %v913
    %v915 = vcombine.low %v685, %v686
    %v917 = vunpack.c.l.s4 1983009808
    %v918 = vunpack.c.0.s8 %v917
    %v919 = vlaneseq
    %v920 = vshrl.u32 %v919, 7
    %v921 = vsub.s32 %v918, %v920
    %v922 = vrot.slane %v915, %v921
    %v923 = vcombine.low %v898, %v906
    %v924 = vcombine.high %v898, %v906
    %v926 = vunpack.c.l.s4 1934713408
    %v927 = vunpack.c.0.s8 %v926
    %v928 = vlaneseq
    %v929 = vshrl.u32 %v928, 7
    %v930 = vsub.s32 %v927, %v929
    %v931 = vrot.slane %v923, %v930
    %v933 = vunpack.c.l.s4 1934713408
    %v934 = vunpack.c.0.s8 %v933
    %v935 = vlaneseq
    %v936 = vshrl.u32 %v935, 7
    %v937 = vsub.s32 %v934, %v936
    %v938 = vrot.slane %v924, %v937
    %v939 = vcombine.low %v914, %v922
    %v940 = vcombine.high %v914, %v922
    %v942 = vunpack.c.l.s4 1934713408
    %v943 = vunpack.c.0.s8 %v942
    %v944 = vlaneseq
    %v945 = vshrl.u32 %v944, 7
    %v946 = vsub.s32 %v943, %v945
    %v947 = vrot.slane %v939, %v946
    %v949 = vunpack.c.l.s4 1934713408
    %v950 = vunpack.c.0.s8 %v949
    %v951 = vlaneseq
    %v952 = vshrl.u32 %v951, 7
    %v953 = vsub.s32 %v950, %v952
    %v954 = vrot.slane %v940, %v953
    %v955 = vcombine.low %v931, %v947
    %v956 = vcombine.high %v931, %v947
    %v957 = vcombine.low %v938, %v954
    %v958 = vcombine.high %v938, %v954
    %v959 = vcombine.low %v727, %v734
    %v961 = vunpack.c.l.s4 1983009808
    %v962 = vunpack.c.0.s8 %v961
    %v963 = vlaneseq
    %v964 = vshrl.u32 %v963, 7
    %v965 = vsub.s32 %v962, %v964
    %v966 = vrot.slane %v959, %v965
    %v967 = vcombine.low %v751, %v752
    %v969 = vunpack.c.l.s4 1983009808
    %v970 = vunpack.c.0.s8 %v969
    %v971 = vlaneseq
    %v972 = vshrl.u32 %v971, 7
    %v973 = vsub.s32 %v970, %v972
    %v974 = vrot.slane %v967, %v973
    %v975 = vcombine.low %v743, %v750
    %v977 = vunpack.c.l.s4 1983009808
    %v978 = vunpack.c.0.s8 %v977
    %v979 = vlaneseq
    %v980 = vshrl.u32 %v979, 7
    %v981 = vsub.s32 %v978, %v980
    %v982 = vrot.slane %v975, %v981
    %v983 = vcombine.low %v753, %v754
    %v985 = vunpack.c.l.s4 1983009808
    %v986 = vunpack.c.0.s8 %v985
    %v987 = vlaneseq
    %v988 = vshrl.u32 %v987, 7
    %v989 = vsub.s32 %v986, %v988
    %v990 = vrot.slane %v983, %v989
    %v991 = vcombine.low %v966, %v974
    %v992 = vcombine.high %v966, %v974
    %v994 = vunpack.c.l.s4 1934713408
    %v995 = vunpack.c.0.s8 %v994
    %v996 = vlaneseq
    %v997 = vshrl.u32 %v996, 7
    %v998 = vsub.s32 %v995, %v997
    %v999 = vrot.slane %v991, %v998
    %v1001 = vunpack.c.l.s4 1934713408
    %v1002 = vunpack.c.0.s8 %v1001
    %v1003 = vlaneseq
    %v1004 = vshrl.u32 %v1003, 7
    %v1005 = vsub.s32 %v1002, %v1004
    %v1006 = vrot.slane %v992, %v1005
    %v1007 = vcombine.low %v982, %v990
    %v1008 = vcombine.high %v982, %v990
    %v1010 = vunpack.c.l.s4 1934713408
    %v1011 = vunpack.c.0.s8 %v1010
    %v1012 = vlaneseq
    %v1013 = vshrl.u32 %v1012, 7
    %v1014 = vsub.s32 %v1011, %v1013
    %v1015 = vrot.slane %v1007, %v1014
    %v1017 = vunpack.c.l.s4 1934713408
    %v1018 = vunpack.c.0.s8 %v1017
    %v1019 = vlaneseq
    %v1020 = vshrl.u32 %v1019, 7
    %v1021 = vsub.s32 %v1018, %v1020
    %v1022 = vrot.slane %v1008, %v1021
    %v1023 = vcombine.low %v999, %v1015
    %v1024 = vcombine.high %v999, %v1015
    %v1025 = vcombine.low %v1006, %v1022
    %v1026 = vcombine.high %v1006, %v1022
    %v1027 = vpack.c.bf16 %v887, %v819
    %v1028 = vpack.c.bf16 %v1023, %v955
    %v1029 = vpack.c.bf16 %v888, %v820
    %v1030 = vpack.c.bf16 %v1024, %v956
    %v1031 = vpack.c.bf16 %v889, %v821
    %v1032 = vpack.c.bf16 %v1025, %v957
    %v1033 = vpack.c.bf16 %v890, %v822
    %v1034 = vpack.c.bf16 %v1026, %v958
    %1039 = vrot.lane.b32.xlu0 %v309, 96
    %v1040 = vpop.permute.xlu0 %1039
    %1041 = vrot.lane.b32.xlu0 %v312, 96
    %v1042 = vpop.permute.xlu0 %1041
    %1043 = vrot.lane.b32.xlu0 %v317, 96
    %v1044 = vpop.permute.xlu0 %1043
    %1045 = vrot.lane.b32.xlu0 %v320, 96
    %v1046 = vpop.permute.xlu0 %1045
    %1051 = vrot.lane.b32.xlu0 %v309, 64
    %v1052 = vpop.permute.xlu0 %1051
    %1053 = vrot.lane.b32.xlu0 %v312, 64
    %v1054 = vpop.permute.xlu0 %1053
    %1055 = vrot.lane.b32.xlu0 %v317, 64
    %v1056 = vpop.permute.xlu0 %1055
    %1057 = vrot.lane.b32.xlu0 %v320, 64
    %v1058 = vpop.permute.xlu0 %1057
    %1063 = vrot.lane.b32.xlu0 %v309, 32
    %v1064 = vpop.permute.xlu0 %1063
    %1065 = vrot.lane.b32.xlu0 %v312, 32
    %v1066 = vpop.permute.xlu0 %1065
    %1067 = vrot.lane.b32.xlu0 %v317, 32
    %v1068 = vpop.permute.xlu0 %1067
    %1069 = vrot.lane.b32.xlu0 %v320, 32
    %v1070 = vpop.permute.xlu0 %1069
    %v1075 = vcombine.low %v309, %v1052
    %v1076 = vcombine.high %v309, %v1052
    %v1078 = vunpack.c.l.s4 1983009808
    %v1079 = vunpack.c.0.s8 %v1078
    %v1080 = vlaneseq
    %v1081 = vshrl.u32 %v1080, 7
    %v1082 = vsub.s32 %v1079, %v1081
    %v1083 = vrot.slane %v1075, %v1082
    %v1085 = vunpack.c.l.s4 1983009808
    %v1086 = vunpack.c.0.s8 %v1085
    %v1087 = vlaneseq
    %v1088 = vshrl.u32 %v1087, 7
    %v1089 = vsub.s32 %v1086, %v1088
    %v1090 = vrot.slane %v1076, %v1089
    %v1091 = vcombine.low %v1040, %v1064
    %v1092 = vcombine.high %v1040, %v1064
    %v1094 = vunpack.c.l.s4 1983009808
    %v1095 = vunpack.c.0.s8 %v1094
    %v1096 = vlaneseq
    %v1097 = vshrl.u32 %v1096, 7
    %v1098 = vsub.s32 %v1095, %v1097
    %v1099 = vrot.slane %v1091, %v1098
    %v1101 = vunpack.c.l.s4 1983009808
    %v1102 = vunpack.c.0.s8 %v1101
    %v1103 = vlaneseq
    %v1104 = vshrl.u32 %v1103, 7
    %v1105 = vsub.s32 %v1102, %v1104
    %v1106 = vrot.slane %v1092, %v1105
    %v1107 = vcombine.low %v1083, %v1099
    %v1108 = vcombine.high %v1083, %v1099
    %v1110 = vunpack.c.l.s4 1934713408
    %v1111 = vunpack.c.0.s8 %v1110
    %v1112 = vlaneseq
    %v1113 = vshrl.u32 %v1112, 7
    %v1114 = vsub.s32 %v1111, %v1113
    %v1115 = vrot.slane %v1107, %v1114
    %v1117 = vunpack.c.l.s4 1934713408
    %v1118 = vunpack.c.0.s8 %v1117
    %v1119 = vlaneseq
    %v1120 = vshrl.u32 %v1119, 7
    %v1121 = vsub.s32 %v1118, %v1120
    %v1122 = vrot.slane %v1108, %v1121
    %v1123 = vcombine.low %v1090, %v1106
    %v1124 = vcombine.high %v1090, %v1106
    %v1126 = vunpack.c.l.s4 1934713408
    %v1127 = vunpack.c.0.s8 %v1126
    %v1128 = vlaneseq
    %v1129 = vshrl.u32 %v1128, 7
    %v1130 = vsub.s32 %v1127, %v1129
    %v1131 = vrot.slane %v1123, %v1130
    %v1133 = vunpack.c.l.s4 1934713408
    %v1134 = vunpack.c.0.s8 %v1133
    %v1135 = vlaneseq
    %v1136 = vshrl.u32 %v1135, 7
    %v1137 = vsub.s32 %v1134, %v1136
    %v1138 = vrot.slane %v1124, %v1137
    %v1139 = vcombine.high %v1115, 0.0
    %v1140 = vcombine.high %v1122, 0.0
    %v1141 = vcombine.high %v1131, 0.0
    %v1142 = vcombine.high %v1138, 0.0
    %v1143 = vcombine.low %v312, %v1054
    %v1144 = vcombine.high %v312, %v1054
    %v1146 = vunpack.c.l.s4 1983009808
    %v1147 = vunpack.c.0.s8 %v1146
    %v1148 = vlaneseq
    %v1149 = vshrl.u32 %v1148, 7
    %v1150 = vsub.s32 %v1147, %v1149
    %v1151 = vrot.slane %v1143, %v1150
    %v1153 = vunpack.c.l.s4 1983009808
    %v1154 = vunpack.c.0.s8 %v1153
    %v1155 = vlaneseq
    %v1156 = vshrl.u32 %v1155, 7
    %v1157 = vsub.s32 %v1154, %v1156
    %v1158 = vrot.slane %v1144, %v1157
    %v1159 = vcombine.low %v1042, %v1066
    %v1160 = vcombine.high %v1042, %v1066
    %v1162 = vunpack.c.l.s4 1983009808
    %v1163 = vunpack.c.0.s8 %v1162
    %v1164 = vlaneseq
    %v1165 = vshrl.u32 %v1164, 7
    %v1166 = vsub.s32 %v1163, %v1165
    %v1167 = vrot.slane %v1159, %v1166
    %v1169 = vunpack.c.l.s4 1983009808
    %v1170 = vunpack.c.0.s8 %v1169
    %v1171 = vlaneseq
    %v1172 = vshrl.u32 %v1171, 7
    %v1173 = vsub.s32 %v1170, %v1172
    %v1174 = vrot.slane %v1160, %v1173
    %v1175 = vcombine.low %v1151, %v1167
    %v1176 = vcombine.high %v1151, %v1167
    %v1178 = vunpack.c.l.s4 1934713408
    %v1179 = vunpack.c.0.s8 %v1178
    %v1180 = vlaneseq
    %v1181 = vshrl.u32 %v1180, 7
    %v1182 = vsub.s32 %v1179, %v1181
    %v1183 = vrot.slane %v1175, %v1182
    %v1185 = vunpack.c.l.s4 1934713408
    %v1186 = vunpack.c.0.s8 %v1185
    %v1187 = vlaneseq
    %v1188 = vshrl.u32 %v1187, 7
    %v1189 = vsub.s32 %v1186, %v1188
    %v1190 = vrot.slane %v1176, %v1189
    %v1191 = vcombine.low %v1158, %v1174
    %v1192 = vcombine.high %v1158, %v1174
    %v1194 = vunpack.c.l.s4 1934713408
    %v1195 = vunpack.c.0.s8 %v1194
    %v1196 = vlaneseq
    %v1197 = vshrl.u32 %v1196, 7
    %v1198 = vsub.s32 %v1195, %v1197
    %v1199 = vrot.slane %v1191, %v1198
    %v1201 = vunpack.c.l.s4 1934713408
    %v1202 = vunpack.c.0.s8 %v1201
    %v1203 = vlaneseq
    %v1204 = vshrl.u32 %v1203, 7
    %v1205 = vsub.s32 %v1202, %v1204
    %v1206 = vrot.slane %v1192, %v1205
    %v1207 = vcombine.high %v1183, 0.0
    %v1208 = vcombine.high %v1190, 0.0
    %v1209 = vcombine.high %v1199, 0.0
    %v1210 = vcombine.high %v1206, 0.0
    %v1211 = vcombine.low %v317, %v1056
    %v1212 = vcombine.high %v317, %v1056
    %v1214 = vunpack.c.l.s4 1983009808
    %v1215 = vunpack.c.0.s8 %v1214
    %v1216 = vlaneseq
    %v1217 = vshrl.u32 %v1216, 7
    %v1218 = vsub.s32 %v1215, %v1217
    %v1219 = vrot.slane %v1211, %v1218
    %v1221 = vunpack.c.l.s4 1983009808
    %v1222 = vunpack.c.0.s8 %v1221
    %v1223 = vlaneseq
    %v1224 = vshrl.u32 %v1223, 7
    %v1225 = vsub.s32 %v1222, %v1224
    %v1226 = vrot.slane %v1212, %v1225
    %v1227 = vcombine.low %v1044, %v1068
    %v1228 = vcombine.high %v1044, %v1068
    %v1230 = vunpack.c.l.s4 1983009808
    %v1231 = vunpack.c.0.s8 %v1230
    %v1232 = vlaneseq
    %v1233 = vshrl.u32 %v1232, 7
    %v1234 = vsub.s32 %v1231, %v1233
    %v1235 = vrot.slane %v1227, %v1234
    %v1237 = vunpack.c.l.s4 1983009808
    %v1238 = vunpack.c.0.s8 %v1237
    %v1239 = vlaneseq
    %v1240 = vshrl.u32 %v1239, 7
    %v1241 = vsub.s32 %v1238, %v1240
    %v1242 = vrot.slane %v1228, %v1241
    %v1243 = vcombine.low %v1219, %v1235
    %v1244 = vcombine.high %v1219, %v1235
    %v1246 = vunpack.c.l.s4 1934713408
    %v1247 = vunpack.c.0.s8 %v1246
    %v1248 = vlaneseq
    %v1249 = vshrl.u32 %v1248, 7
    %v1250 = vsub.s32 %v1247, %v1249
    %v1251 = vrot.slane %v1243, %v1250
    %v1253 = vunpack.c.l.s4 1934713408
    %v1254 = vunpack.c.0.s8 %v1253
    %v1255 = vlaneseq
    %v1256 = vshrl.u32 %v1255, 7
    %v1257 = vsub.s32 %v1254, %v1256
    %v1258 = vrot.slane %v1244, %v1257
    %v1259 = vcombine.low %v1226, %v1242
    %v1260 = vcombine.high %v1226, %v1242
    %v1262 = vunpack.c.l.s4 1934713408
    %v1263 = vunpack.c.0.s8 %v1262
    %v1264 = vlaneseq
    %v1265 = vshrl.u32 %v1264, 7
    %v1266 = vsub.s32 %v1263, %v1265
    %v1267 = vrot.slane %v1259, %v1266
    %v1269 = vunpack.c.l.s4 1934713408
    %v1270 = vunpack.c.0.s8 %v1269
    %v1271 = vlaneseq
    %v1272 = vshrl.u32 %v1271, 7
    %v1273 = vsub.s32 %v1270, %v1272
    %v1274 = vrot.slane %v1260, %v1273
    %v1275 = vcombine.high %v1251, 0.0
    %v1276 = vcombine.high %v1258, 0.0
    %v1277 = vcombine.high %v1267, 0.0
    %v1278 = vcombine.high %v1274, 0.0
    %v1279 = vcombine.low %v320, %v1058
    %v1280 = vcombine.high %v320, %v1058
    %v1282 = vunpack.c.l.s4 1983009808
    %v1283 = vunpack.c.0.s8 %v1282
    %v1284 = vlaneseq
    %v1285 = vshrl.u32 %v1284, 7
    %v1286 = vsub.s32 %v1283, %v1285
    %v1287 = vrot.slane %v1279, %v1286
    %v1289 = vunpack.c.l.s4 1983009808
    %v1290 = vunpack.c.0.s8 %v1289
    %v1291 = vlaneseq
    %v1292 = vshrl.u32 %v1291, 7
    %v1293 = vsub.s32 %v1290, %v1292
    %v1294 = vrot.slane %v1280, %v1293
    %v1295 = vcombine.low %v1046, %v1070
    %v1296 = vcombine.high %v1046, %v1070
    %v1298 = vunpack.c.l.s4 1983009808
    %v1299 = vunpack.c.0.s8 %v1298
    %v1300 = vlaneseq
    %v1301 = vshrl.u32 %v1300, 7
    %v1302 = vsub.s32 %v1299, %v1301
    %v1303 = vrot.slane %v1295, %v1302
    %v1305 = vunpack.c.l.s4 1983009808
    %v1306 = vunpack.c.0.s8 %v1305
    %v1307 = vlaneseq
    %v1308 = vshrl.u32 %v1307, 7
    %v1309 = vsub.s32 %v1306, %v1308
    %v1310 = vrot.slane %v1296, %v1309
    %v1311 = vcombine.low %v1287, %v1303
    %v1312 = vcombine.high %v1287, %v1303
    %v1314 = vunpack.c.l.s4 1934713408
    %v1315 = vunpack.c.0.s8 %v1314
    %v1316 = vlaneseq
    %v1317 = vshrl.u32 %v1316, 7
    %v1318 = vsub.s32 %v1315, %v1317
    %v1319 = vrot.slane %v1311, %v1318
    %v1321 = vunpack.c.l.s4 1934713408
    %v1322 = vunpack.c.0.s8 %v1321
    %v1323 = vlaneseq
    %v1324 = vshrl.u32 %v1323, 7
    %v1325 = vsub.s32 %v1322, %v1324
    %v1326 = vrot.slane %v1312, %v1325
    %v1327 = vcombine.low %v1294, %v1310
    %v1328 = vcombine.high %v1294, %v1310
    %v1330 = vunpack.c.l.s4 1934713408
    %v1331 = vunpack.c.0.s8 %v1330
    %v1332 = vlaneseq
    %v1333 = vshrl.u32 %v1332, 7
    %v1334 = vsub.s32 %v1331, %v1333
    %v1335 = vrot.slane %v1327, %v1334
    %v1337 = vunpack.c.l.s4 1934713408
    %v1338 = vunpack.c.0.s8 %v1337
    %v1339 = vlaneseq
    %v1340 = vshrl.u32 %v1339, 7
    %v1341 = vsub.s32 %v1338, %v1340
    %v1342 = vrot.slane %v1328, %v1341
    %v1343 = vcombine.high %v1319, 0.0
    %v1344 = vcombine.high %v1326, 0.0
    %v1345 = vcombine.high %v1335, 0.0
    %v1346 = vcombine.high %v1342, 0.0
    %v1347 = vcombine.low %v1115, %v1122
    %v1349 = vunpack.c.l.s4 1983009808
    %v1350 = vunpack.c.0.s8 %v1349
    %v1351 = vlaneseq
    %v1352 = vshrl.u32 %v1351, 7
    %v1353 = vsub.s32 %v1350, %v1352
    %v1354 = vrot.slane %v1347, %v1353
    %v1355 = vcombine.low %v1139, %v1140
    %v1357 = vunpack.c.l.s4 1983009808
    %v1358 = vunpack.c.0.s8 %v1357
    %v1359 = vlaneseq
    %v1360 = vshrl.u32 %v1359, 7
    %v1361 = vsub.s32 %v1358, %v1360
    %v1362 = vrot.slane %v1355, %v1361
    %v1363 = vcombine.low %v1131, %v1138
    %v1365 = vunpack.c.l.s4 1983009808
    %v1366 = vunpack.c.0.s8 %v1365
    %v1367 = vlaneseq
    %v1368 = vshrl.u32 %v1367, 7
    %v1369 = vsub.s32 %v1366, %v1368
    %v1370 = vrot.slane %v1363, %v1369
    %v1371 = vcombine.low %v1141, %v1142
    %v1373 = vunpack.c.l.s4 1983009808
    %v1374 = vunpack.c.0.s8 %v1373
    %v1375 = vlaneseq
    %v1376 = vshrl.u32 %v1375, 7
    %v1377 = vsub.s32 %v1374, %v1376
    %v1378 = vrot.slane %v1371, %v1377
    %v1379 = vcombine.low %v1354, %v1362
    %v1380 = vcombine.high %v1354, %v1362
    %v1382 = vunpack.c.l.s4 1934713408
    %v1383 = vunpack.c.0.s8 %v1382
    %v1384 = vlaneseq
    %v1385 = vshrl.u32 %v1384, 7
    %v1386 = vsub.s32 %v1383, %v1385
    %v1387 = vrot.slane %v1379, %v1386
    %v1389 = vunpack.c.l.s4 1934713408
    %v1390 = vunpack.c.0.s8 %v1389
    %v1391 = vlaneseq
    %v1392 = vshrl.u32 %v1391, 7
    %v1393 = vsub.s32 %v1390, %v1392
    %v1394 = vrot.slane %v1380, %v1393
    %v1395 = vcombine.low %v1370, %v1378
    %v1396 = vcombine.high %v1370, %v1378
    %v1398 = vunpack.c.l.s4 1934713408
    %v1399 = vunpack.c.0.s8 %v1398
    %v1400 = vlaneseq
    %v1401 = vshrl.u32 %v1400, 7
    %v1402 = vsub.s32 %v1399, %v1401
    %v1403 = vrot.slane %v1395, %v1402
    %v1405 = vunpack.c.l.s4 1934713408
    %v1406 = vunpack.c.0.s8 %v1405
    %v1407 = vlaneseq
    %v1408 = vshrl.u32 %v1407, 7
    %v1409 = vsub.s32 %v1406, %v1408
    %v1410 = vrot.slane %v1396, %v1409
    %v1411 = vcombine.low %v1387, %v1403
    %v1412 = vcombine.high %v1387, %v1403
    %v1413 = vcombine.low %v1394, %v1410
    %v1414 = vcombine.high %v1394, %v1410
    %v1415 = vcombine.low %v1183, %v1190
    %v1417 = vunpack.c.l.s4 1983009808
    %v1418 = vunpack.c.0.s8 %v1417
    %v1419 = vlaneseq
    %v1420 = vshrl.u32 %v1419, 7
    %v1421 = vsub.s32 %v1418, %v1420
    %v1422 = vrot.slane %v1415, %v1421
    %v1423 = vcombine.low %v1207, %v1208
    %v1425 = vunpack.c.l.s4 1983009808
    %v1426 = vunpack.c.0.s8 %v1425
    %v1427 = vlaneseq
    %v1428 = vshrl.u32 %v1427, 7
    %v1429 = vsub.s32 %v1426, %v1428
    %v1430 = vrot.slane %v1423, %v1429
    %v1431 = vcombine.low %v1199, %v1206
    %v1433 = vunpack.c.l.s4 1983009808
    %v1434 = vunpack.c.0.s8 %v1433
    %v1435 = vlaneseq
    %v1436 = vshrl.u32 %v1435, 7
    %v1437 = vsub.s32 %v1434, %v1436
    %v1438 = vrot.slane %v1431, %v1437
    %v1439 = vcombine.low %v1209, %v1210
    %v1441 = vunpack.c.l.s4 1983009808
    %v1442 = vunpack.c.0.s8 %v1441
    %v1443 = vlaneseq
    %v1444 = vshrl.u32 %v1443, 7
    %v1445 = vsub.s32 %v1442, %v1444
    %v1446 = vrot.slane %v1439, %v1445
    %v1447 = vcombine.low %v1422, %v1430
    %v1448 = vcombine.high %v1422, %v1430
    %v1450 = vunpack.c.l.s4 1934713408
    %v1451 = vunpack.c.0.s8 %v1450
    %v1452 = vlaneseq
    %v1453 = vshrl.u32 %v1452, 7
    %v1454 = vsub.s32 %v1451, %v1453
    %v1455 = vrot.slane %v1447, %v1454
    %v1457 = vunpack.c.l.s4 1934713408
    %v1458 = vunpack.c.0.s8 %v1457
    %v1459 = vlaneseq
    %v1460 = vshrl.u32 %v1459, 7
    %v1461 = vsub.s32 %v1458, %v1460
    %v1462 = vrot.slane %v1448, %v1461
    %v1463 = vcombine.low %v1438, %v1446
    %v1464 = vcombine.high %v1438, %v1446
    %v1466 = vunpack.c.l.s4 1934713408
    %v1467 = vunpack.c.0.s8 %v1466
    %v1468 = vlaneseq
    %v1469 = vshrl.u32 %v1468, 7
    %v1470 = vsub.s32 %v1467, %v1469
    %v1471 = vrot.slane %v1463, %v1470
    %v1473 = vunpack.c.l.s4 1934713408
    %v1474 = vunpack.c.0.s8 %v1473
    %v1475 = vlaneseq
    %v1476 = vshrl.u32 %v1475, 7
    %v1477 = vsub.s32 %v1474, %v1476
    %v1478 = vrot.slane %v1464, %v1477
    %v1479 = vcombine.low %v1455, %v1471
    %v1480 = vcombine.high %v1455, %v1471
    %v1481 = vcombine.low %v1462, %v1478
    %v1482 = vcombine.high %v1462, %v1478
    %v1483 = vcombine.low %v1251, %v1258
    %v1485 = vunpack.c.l.s4 1983009808
    %v1486 = vunpack.c.0.s8 %v1485
    %v1487 = vlaneseq
    %v1488 = vshrl.u32 %v1487, 7
    %v1489 = vsub.s32 %v1486, %v1488
    %v1490 = vrot.slane %v1483, %v1489
    %v1491 = vcombine.low %v1275, %v1276
    %v1493 = vunpack.c.l.s4 1983009808
    %v1494 = vunpack.c.0.s8 %v1493
    %v1495 = vlaneseq
    %v1496 = vshrl.u32 %v1495, 7
    %v1497 = vsub.s32 %v1494, %v1496
    %v1498 = vrot.slane %v1491, %v1497
    %v1499 = vcombine.low %v1267, %v1274
    %v1501 = vunpack.c.l.s4 1983009808
    %v1502 = vunpack.c.0.s8 %v1501
    %v1503 = vlaneseq
    %v1504 = vshrl.u32 %v1503, 7
    %v1505 = vsub.s32 %v1502, %v1504
    %v1506 = vrot.slane %v1499, %v1505
    %v1507 = vcombine.low %v1277, %v1278
    %v1509 = vunpack.c.l.s4 1983009808
    %v1510 = vunpack.c.0.s8 %v1509
    %v1511 = vlaneseq
    %v1512 = vshrl.u32 %v1511, 7
    %v1513 = vsub.s32 %v1510, %v1512
    %v1514 = vrot.slane %v1507, %v1513
    %v1515 = vcombine.low %v1490, %v1498
    %v1516 = vcombine.high %v1490, %v1498
    %v1518 = vunpack.c.l.s4 1934713408
    %v1519 = vunpack.c.0.s8 %v1518
    %v1520 = vlaneseq
    %v1521 = vshrl.u32 %v1520, 7
    %v1522 = vsub.s32 %v1519, %v1521
    %v1523 = vrot.slane %v1515, %v1522
    %v1525 = vunpack.c.l.s4 1934713408
    %v1526 = vunpack.c.0.s8 %v1525
    %v1527 = vlaneseq
    %v1528 = vshrl.u32 %v1527, 7
    %v1529 = vsub.s32 %v1526, %v1528
    %v1530 = vrot.slane %v1516, %v1529
    %v1531 = vcombine.low %v1506, %v1514
    %v1532 = vcombine.high %v1506, %v1514
    %v1534 = vunpack.c.l.s4 1934713408
    %v1535 = vunpack.c.0.s8 %v1534
    %v1536 = vlaneseq
    %v1537 = vshrl.u32 %v1536, 7
    %v1538 = vsub.s32 %v1535, %v1537
    %v1539 = vrot.slane %v1531, %v1538
    %v1541 = vunpack.c.l.s4 1934713408
    %v1542 = vunpack.c.0.s8 %v1541
    %v1543 = vlaneseq
    %v1544 = vshrl.u32 %v1543, 7
    %v1545 = vsub.s32 %v1542, %v1544
    %v1546 = vrot.slane %v1532, %v1545
    %v1547 = vcombine.low %v1523, %v1539
    %v1548 = vcombine.high %v1523, %v1539
    %v1549 = vcombine.low %v1530, %v1546
    %v1550 = vcombine.high %v1530, %v1546
    %v1551 = vcombine.low %v1319, %v1326
    %v1553 = vunpack.c.l.s4 1983009808
    %v1554 = vunpack.c.0.s8 %v1553
    %v1555 = vlaneseq
    %v1556 = vshrl.u32 %v1555, 7
    %v1557 = vsub.s32 %v1554, %v1556
    %v1558 = vrot.slane %v1551, %v1557
    %v1559 = vcombine.low %v1343, %v1344
    %v1561 = vunpack.c.l.s4 1983009808
    %v1562 = vunpack.c.0.s8 %v1561
    %v1563 = vlaneseq
    %v1564 = vshrl.u32 %v1563, 7
    %v1565 = vsub.s32 %v1562, %v1564
    %v1566 = vrot.slane %v1559, %v1565
    %v1567 = vcombine.low %v1335, %v1342
    %v1569 = vunpack.c.l.s4 1983009808
    %v1570 = vunpack.c.0.s8 %v1569
    %v1571 = vlaneseq
    %v1572 = vshrl.u32 %v1571, 7
    %v1573 = vsub.s32 %v1570, %v1572
    %v1574 = vrot.slane %v1567, %v1573
    %v1575 = vcombine.low %v1345, %v1346
    %v1577 = vunpack.c.l.s4 1983009808
    %v1578 = vunpack.c.0.s8 %v1577
    %v1579 = vlaneseq
    %v1580 = vshrl.u32 %v1579, 7
    %v1581 = vsub.s32 %v1578, %v1580
    %v1582 = vrot.slane %v1575, %v1581
    %v1583 = vcombine.low %v1558, %v1566
    %v1584 = vcombine.high %v1558, %v1566
    %v1586 = vunpack.c.l.s4 1934713408
    %v1587 = vunpack.c.0.s8 %v1586
    %v1588 = vlaneseq
    %v1589 = vshrl.u32 %v1588, 7
    %v1590 = vsub.s32 %v1587, %v1589
    %v1591 = vrot.slane %v1583, %v1590
    %v1593 = vunpack.c.l.s4 1934713408
    %v1594 = vunpack.c.0.s8 %v1593
    %v1595 = vlaneseq
    %v1596 = vshrl.u32 %v1595, 7
    %v1597 = vsub.s32 %v1594, %v1596
    %v1598 = vrot.slane %v1584, %v1597
    %v1599 = vcombine.low %v1574, %v1582
    %v1600 = vcombine.high %v1574, %v1582
    %v1602 = vunpack.c.l.s4 1934713408
    %v1603 = vunpack.c.0.s8 %v1602
    %v1604 = vlaneseq
    %v1605 = vshrl.u32 %v1604, 7
    %v1606 = vsub.s32 %v1603, %v1605
    %v1607 = vrot.slane %v1599, %v1606
    %v1609 = vunpack.c.l.s4 1934713408
    %v1610 = vunpack.c.0.s8 %v1609
    %v1611 = vlaneseq
    %v1612 = vshrl.u32 %v1611, 7
    %v1613 = vsub.s32 %v1610, %v1612
    %v1614 = vrot.slane %v1600, %v1613
    %v1615 = vcombine.low %v1591, %v1607
    %v1616 = vcombine.high %v1591, %v1607
    %v1617 = vcombine.low %v1598, %v1614
    %v1618 = vcombine.high %v1598, %v1614
    %v1619 = vpack.c.bf16 %v1479, %v1411
    %v1620 = vpack.c.bf16 %v1615, %v1547
    %v1621 = vpack.c.bf16 %v1480, %v1412
    %v1622 = vpack.c.bf16 %v1616, %v1548
    %v1623 = vpack.c.bf16 %v1481, %v1413
    %v1624 = vpack.c.bf16 %v1617, %v1549
    %v1625 = vpack.c.bf16 %v1482, %v1414
    %v1626 = vpack.c.bf16 %v1618, %v1550
    %1631 = vrot.lane.b32.xlu0 %v429, 96
    %v1632 = vpop.permute.xlu0 %1631
    %1633 = vrot.lane.b32.xlu0 %v432, 96
    %v1634 = vpop.permute.xlu0 %1633
    %1635 = vrot.lane.b32.xlu0 %v437, 96
    %v1636 = vpop.permute.xlu0 %1635
    %1637 = vrot.lane.b32.xlu0 %v440, 96
    %v1638 = vpop.permute.xlu0 %1637
    %1643 = vrot.lane.b32.xlu0 %v429, 64
    %v1644 = vpop.permute.xlu0 %1643
    %1645 = vrot.lane.b32.xlu0 %v432, 64
    %v1646 = vpop.permute.xlu0 %1645
    %1647 = vrot.lane.b32.xlu0 %v437, 64
    %v1648 = vpop.permute.xlu0 %1647
    %1649 = vrot.lane.b32.xlu0 %v440, 64
    %v1650 = vpop.permute.xlu0 %1649
    %1655 = vrot.lane.b32.xlu0 %v429, 32
    %v1656 = vpop.permute.xlu0 %1655
    %1657 = vrot.lane.b32.xlu0 %v432, 32
    %v1658 = vpop.permute.xlu0 %1657
    %1659 = vrot.lane.b32.xlu0 %v437, 32
    %v1660 = vpop.permute.xlu0 %1659
    %1661 = vrot.lane.b32.xlu0 %v440, 32
    %v1662 = vpop.permute.xlu0 %1661
    %v1667 = vcombine.low %v429, %v1644
    %v1668 = vcombine.high %v429, %v1644
    %v1670 = vunpack.c.l.s4 1983009808
    %v1671 = vunpack.c.0.s8 %v1670
    %v1672 = vlaneseq
    %v1673 = vshrl.u32 %v1672, 7
    %v1674 = vsub.s32 %v1671, %v1673
    %v1675 = vrot.slane %v1667, %v1674
    %v1677 = vunpack.c.l.s4 1983009808
    %v1678 = vunpack.c.0.s8 %v1677
    %v1679 = vlaneseq
    %v1680 = vshrl.u32 %v1679, 7
    %v1681 = vsub.s32 %v1678, %v1680
    %v1682 = vrot.slane %v1668, %v1681
    %v1683 = vcombine.low %v1632, %v1656
    %v1684 = vcombine.high %v1632, %v1656
    %v1686 = vunpack.c.l.s4 1983009808
    %v1687 = vunpack.c.0.s8 %v1686
    %v1688 = vlaneseq
    %v1689 = vshrl.u32 %v1688, 7
    %v1690 = vsub.s32 %v1687, %v1689
    %v1691 = vrot.slane %v1683, %v1690
    %v1693 = vunpack.c.l.s4 1983009808
    %v1694 = vunpack.c.0.s8 %v1693
    %v1695 = vlaneseq
    %v1696 = vshrl.u32 %v1695, 7
    %v1697 = vsub.s32 %v1694, %v1696
    %v1698 = vrot.slane %v1684, %v1697
    %v1699 = vcombine.low %v1675, %v1691
    %v1700 = vcombine.high %v1675, %v1691
    %v1702 = vunpack.c.l.s4 1934713408
    %v1703 = vunpack.c.0.s8 %v1702
    %v1704 = vlaneseq
    %v1705 = vshrl.u32 %v1704, 7
    %v1706 = vsub.s32 %v1703, %v1705
    %v1707 = vrot.slane %v1699, %v1706
    %v1709 = vunpack.c.l.s4 1934713408
    %v1710 = vunpack.c.0.s8 %v1709
    %v1711 = vlaneseq
    %v1712 = vshrl.u32 %v1711, 7
    %v1713 = vsub.s32 %v1710, %v1712
    %v1714 = vrot.slane %v1700, %v1713
    %v1715 = vcombine.low %v1682, %v1698
    %v1716 = vcombine.high %v1682, %v1698
    %v1718 = vunpack.c.l.s4 1934713408
    %v1719 = vunpack.c.0.s8 %v1718
    %v1720 = vlaneseq
    %v1721 = vshrl.u32 %v1720, 7
    %v1722 = vsub.s32 %v1719, %v1721
    %v1723 = vrot.slane %v1715, %v1722
    %v1725 = vunpack.c.l.s4 1934713408
    %v1726 = vunpack.c.0.s8 %v1725
    %v1727 = vlaneseq
    %v1728 = vshrl.u32 %v1727, 7
    %v1729 = vsub.s32 %v1726, %v1728
    %v1730 = vrot.slane %v1716, %v1729
    %v1731 = vcombine.high %v1707, 0.0
    %v1732 = vcombine.high %v1714, 0.0
    %v1733 = vcombine.high %v1723, 0.0
    %v1734 = vcombine.high %v1730, 0.0
    %v1735 = vcombine.low %v432, %v1646
    %v1736 = vcombine.high %v432, %v1646
    %v1738 = vunpack.c.l.s4 1983009808
    %v1739 = vunpack.c.0.s8 %v1738
    %v1740 = vlaneseq
    %v1741 = vshrl.u32 %v1740, 7
    %v1742 = vsub.s32 %v1739, %v1741
    %v1743 = vrot.slane %v1735, %v1742
    %v1745 = vunpack.c.l.s4 1983009808
    %v1746 = vunpack.c.0.s8 %v1745
    %v1747 = vlaneseq
    %v1748 = vshrl.u32 %v1747, 7
    %v1749 = vsub.s32 %v1746, %v1748
    %v1750 = vrot.slane %v1736, %v1749
    %v1751 = vcombine.low %v1634, %v1658
    %v1752 = vcombine.high %v1634, %v1658
    %v1754 = vunpack.c.l.s4 1983009808
    %v1755 = vunpack.c.0.s8 %v1754
    %v1756 = vlaneseq
    %v1757 = vshrl.u32 %v1756, 7
    %v1758 = vsub.s32 %v1755, %v1757
    %v1759 = vrot.slane %v1751, %v1758
    %v1761 = vunpack.c.l.s4 1983009808
    %v1762 = vunpack.c.0.s8 %v1761
    %v1763 = vlaneseq
    %v1764 = vshrl.u32 %v1763, 7
    %v1765 = vsub.s32 %v1762, %v1764
    %v1766 = vrot.slane %v1752, %v1765
    %v1767 = vcombine.low %v1743, %v1759
    %v1768 = vcombine.high %v1743, %v1759
    %v1770 = vunpack.c.l.s4 1934713408
    %v1771 = vunpack.c.0.s8 %v1770
    %v1772 = vlaneseq
    %v1773 = vshrl.u32 %v1772, 7
    %v1774 = vsub.s32 %v1771, %v1773
    %v1775 = vrot.slane %v1767, %v1774
    %v1777 = vunpack.c.l.s4 1934713408
    %v1778 = vunpack.c.0.s8 %v1777
    %v1779 = vlaneseq
    %v1780 = vshrl.u32 %v1779, 7
    %v1781 = vsub.s32 %v1778, %v1780
    %v1782 = vrot.slane %v1768, %v1781
    %v1783 = vcombine.low %v1750, %v1766
    %v1784 = vcombine.high %v1750, %v1766
    %v1786 = vunpack.c.l.s4 1934713408
    %v1787 = vunpack.c.0.s8 %v1786
    %v1788 = vlaneseq
    %v1789 = vshrl.u32 %v1788, 7
    %v1790 = vsub.s32 %v1787, %v1789
    %v1791 = vrot.slane %v1783, %v1790
    %v1793 = vunpack.c.l.s4 1934713408
    %v1794 = vunpack.c.0.s8 %v1793
    %v1795 = vlaneseq
    %v1796 = vshrl.u32 %v1795, 7
    %v1797 = vsub.s32 %v1794, %v1796
    %v1798 = vrot.slane %v1784, %v1797
    %v1799 = vcombine.high %v1775, 0.0
    %v1800 = vcombine.high %v1782, 0.0
    %v1801 = vcombine.high %v1791, 0.0
    %v1802 = vcombine.high %v1798, 0.0
    %v1803 = vcombine.low %v437, %v1648
    %v1804 = vcombine.high %v437, %v1648
    %v1806 = vunpack.c.l.s4 1983009808
    %v1807 = vunpack.c.0.s8 %v1806
    %v1808 = vlaneseq
    %v1809 = vshrl.u32 %v1808, 7
    %v1810 = vsub.s32 %v1807, %v1809
    %v1811 = vrot.slane %v1803, %v1810
    %v1813 = vunpack.c.l.s4 1983009808
    %v1814 = vunpack.c.0.s8 %v1813
    %v1815 = vlaneseq
    %v1816 = vshrl.u32 %v1815, 7
    %v1817 = vsub.s32 %v1814, %v1816
    %v1818 = vrot.slane %v1804, %v1817
    %v1819 = vcombine.low %v1636, %v1660
    %v1820 = vcombine.high %v1636, %v1660
    %v1822 = vunpack.c.l.s4 1983009808
    %v1823 = vunpack.c.0.s8 %v1822
    %v1824 = vlaneseq
    %v1825 = vshrl.u32 %v1824, 7
    %v1826 = vsub.s32 %v1823, %v1825
    %v1827 = vrot.slane %v1819, %v1826
    %v1829 = vunpack.c.l.s4 1983009808
    %v1830 = vunpack.c.0.s8 %v1829
    %v1831 = vlaneseq
    %v1832 = vshrl.u32 %v1831, 7
    %v1833 = vsub.s32 %v1830, %v1832
    %v1834 = vrot.slane %v1820, %v1833
    %v1835 = vcombine.low %v1811, %v1827
    %v1836 = vcombine.high %v1811, %v1827
    %v1838 = vunpack.c.l.s4 1934713408
    %v1839 = vunpack.c.0.s8 %v1838
    %v1840 = vlaneseq
    %v1841 = vshrl.u32 %v1840, 7
    %v1842 = vsub.s32 %v1839, %v1841
    %v1843 = vrot.slane %v1835, %v1842
    %v1845 = vunpack.c.l.s4 1934713408
    %v1846 = vunpack.c.0.s8 %v1845
    %v1847 = vlaneseq
    %v1848 = vshrl.u32 %v1847, 7
    %v1849 = vsub.s32 %v1846, %v1848
    %v1850 = vrot.slane %v1836, %v1849
    %v1851 = vcombine.low %v1818, %v1834
    %v1852 = vcombine.high %v1818, %v1834
    %v1854 = vunpack.c.l.s4 1934713408
    %v1855 = vunpack.c.0.s8 %v1854
    %v1856 = vlaneseq
    %v1857 = vshrl.u32 %v1856, 7
    %v1858 = vsub.s32 %v1855, %v1857
    %v1859 = vrot.slane %v1851, %v1858
    %v1861 = vunpack.c.l.s4 1934713408
    %v1862 = vunpack.c.0.s8 %v1861
    %v1863 = vlaneseq
    %v1864 = vshrl.u32 %v1863, 7
    %v1865 = vsub.s32 %v1862, %v1864
    %v1866 = vrot.slane %v1852, %v1865
    %v1867 = vcombine.high %v1843, 0.0
    %v1868 = vcombine.high %v1850, 0.0
    %v1869 = vcombine.high %v1859, 0.0
    %v1870 = vcombine.high %v1866, 0.0
    %v1871 = vcombine.low %v440, %v1650
    %v1872 = vcombine.high %v440, %v1650
    %v1874 = vunpack.c.l.s4 1983009808
    %v1875 = vunpack.c.0.s8 %v1874
    %v1876 = vlaneseq
    %v1877 = vshrl.u32 %v1876, 7
    %v1878 = vsub.s32 %v1875, %v1877
    %v1879 = vrot.slane %v1871, %v1878
    %v1881 = vunpack.c.l.s4 1983009808
    %v1882 = vunpack.c.0.s8 %v1881
    %v1883 = vlaneseq
    %v1884 = vshrl.u32 %v1883, 7
    %v1885 = vsub.s32 %v1882, %v1884
    %v1886 = vrot.slane %v1872, %v1885
    %v1887 = vcombine.low %v1638, %v1662
    %v1888 = vcombine.high %v1638, %v1662
    %v1890 = vunpack.c.l.s4 1983009808
    %v1891 = vunpack.c.0.s8 %v1890
    %v1892 = vlaneseq
    %v1893 = vshrl.u32 %v1892, 7
    %v1894 = vsub.s32 %v1891, %v1893
    %v1895 = vrot.slane %v1887, %v1894
    %v1897 = vunpack.c.l.s4 1983009808
    %v1898 = vunpack.c.0.s8 %v1897
    %v1899 = vlaneseq
    %v1900 = vshrl.u32 %v1899, 7
    %v1901 = vsub.s32 %v1898, %v1900
    %v1902 = vrot.slane %v1888, %v1901
    %v1903 = vcombine.low %v1879, %v1895
    %v1904 = vcombine.high %v1879, %v1895
    %v1906 = vunpack.c.l.s4 1934713408
    %v1907 = vunpack.c.0.s8 %v1906
    %v1908 = vlaneseq
    %v1909 = vshrl.u32 %v1908, 7
    %v1910 = vsub.s32 %v1907, %v1909
    %v1911 = vrot.slane %v1903, %v1910
    %v1913 = vunpack.c.l.s4 1934713408
    %v1914 = vunpack.c.0.s8 %v1913
    %v1915 = vlaneseq
    %v1916 = vshrl.u32 %v1915, 7
    %v1917 = vsub.s32 %v1914, %v1916
    %v1918 = vrot.slane %v1904, %v1917
    %v1919 = vcombine.low %v1886, %v1902
    %v1920 = vcombine.high %v1886, %v1902
    %v1922 = vunpack.c.l.s4 1934713408
    %v1923 = vunpack.c.0.s8 %v1922
    %v1924 = vlaneseq
    %v1925 = vshrl.u32 %v1924, 7
    %v1926 = vsub.s32 %v1923, %v1925
    %v1927 = vrot.slane %v1919, %v1926
    %v1929 = vunpack.c.l.s4 1934713408
    %v1930 = vunpack.c.0.s8 %v1929
    %v1931 = vlaneseq
    %v1932 = vshrl.u32 %v1931, 7
    %v1933 = vsub.s32 %v1930, %v1932
    %v1934 = vrot.slane %v1920, %v1933
    %v1935 = vcombine.high %v1911, 0.0
    %v1936 = vcombine.high %v1918, 0.0
    %v1937 = vcombine.high %v1927, 0.0
    %v1938 = vcombine.high %v1934, 0.0
    %v1939 = vcombine.low %v1707, %v1714
    %v1941 = vunpack.c.l.s4 1983009808
    %v1942 = vunpack.c.0.s8 %v1941
    %v1943 = vlaneseq
    %v1944 = vshrl.u32 %v1943, 7
    %v1945 = vsub.s32 %v1942, %v1944
    %v1946 = vrot.slane %v1939, %v1945
    %v1947 = vcombine.low %v1731, %v1732
    %v1949 = vunpack.c.l.s4 1983009808
    %v1950 = vunpack.c.0.s8 %v1949
    %v1951 = vlaneseq
    %v1952 = vshrl.u32 %v1951, 7
    %v1953 = vsub.s32 %v1950, %v1952
    %v1954 = vrot.slane %v1947, %v1953
    %v1955 = vcombine.low %v1723, %v1730
    %v1957 = vunpack.c.l.s4 1983009808
    %v1958 = vunpack.c.0.s8 %v1957
    %v1959 = vlaneseq
    %v1960 = vshrl.u32 %v1959, 7
    %v1961 = vsub.s32 %v1958, %v1960
    %v1962 = vrot.slane %v1955, %v1961
    %v1963 = vcombine.low %v1733, %v1734
    %v1965 = vunpack.c.l.s4 1983009808
    %v1966 = vunpack.c.0.s8 %v1965
    %v1967 = vlaneseq
    %v1968 = vshrl.u32 %v1967, 7
    %v1969 = vsub.s32 %v1966, %v1968
    %v1970 = vrot.slane %v1963, %v1969
    %v1971 = vcombine.low %v1946, %v1954
    %v1972 = vcombine.high %v1946, %v1954
    %v1974 = vunpack.c.l.s4 1934713408
    %v1975 = vunpack.c.0.s8 %v1974
    %v1976 = vlaneseq
    %v1977 = vshrl.u32 %v1976, 7
    %v1978 = vsub.s32 %v1975, %v1977
    %v1979 = vrot.slane %v1971, %v1978
    %v1981 = vunpack.c.l.s4 1934713408
    %v1982 = vunpack.c.0.s8 %v1981
    %v1983 = vlaneseq
    %v1984 = vshrl.u32 %v1983, 7
    %v1985 = vsub.s32 %v1982, %v1984
    %v1986 = vrot.slane %v1972, %v1985
    %v1987 = vcombine.low %v1962, %v1970
    %v1988 = vcombine.high %v1962, %v1970
    %v1990 = vunpack.c.l.s4 1934713408
    %v1991 = vunpack.c.0.s8 %v1990
    %v1992 = vlaneseq
    %v1993 = vshrl.u32 %v1992, 7
    %v1994 = vsub.s32 %v1991, %v1993
    %v1995 = vrot.slane %v1987, %v1994
    %v1997 = vunpack.c.l.s4 1934713408
    %v1998 = vunpack.c.0.s8 %v1997
    %v1999 = vlaneseq
    %v2000 = vshrl.u32 %v1999, 7
    %v2001 = vsub.s32 %v1998, %v2000
    %v2002 = vrot.slane %v1988, %v2001
    %v2003 = vcombine.low %v1979, %v1995
    %v2004 = vcombine.high %v1979, %v1995
    %v2005 = vcombine.low %v1986, %v2002
    %v2006 = vcombine.high %v1986, %v2002
    %v2007 = vcombine.low %v1775, %v1782
    %v2009 = vunpack.c.l.s4 1983009808
    %v2010 = vunpack.c.0.s8 %v2009
    %v2011 = vlaneseq
    %v2012 = vshrl.u32 %v2011, 7
    %v2013 = vsub.s32 %v2010, %v2012
    %v2014 = vrot.slane %v2007, %v2013
    %v2015 = vcombine.low %v1799, %v1800
    %v2017 = vunpack.c.l.s4 1983009808
    %v2018 = vunpack.c.0.s8 %v2017
    %v2019 = vlaneseq
    %v2020 = vshrl.u32 %v2019, 7
    %v2021 = vsub.s32 %v2018, %v2020
    %v2022 = vrot.slane %v2015, %v2021
    %v2023 = vcombine.low %v1791, %v1798
    %v2025 = vunpack.c.l.s4 1983009808
    %v2026 = vunpack.c.0.s8 %v2025
    %v2027 = vlaneseq
    %v2028 = vshrl.u32 %v2027, 7
    %v2029 = vsub.s32 %v2026, %v2028
    %v2030 = vrot.slane %v2023, %v2029
    %v2031 = vcombine.low %v1801, %v1802
    %v2033 = vunpack.c.l.s4 1983009808
    %v2034 = vunpack.c.0.s8 %v2033
    %v2035 = vlaneseq
    %v2036 = vshrl.u32 %v2035, 7
    %v2037 = vsub.s32 %v2034, %v2036
    %v2038 = vrot.slane %v2031, %v2037
    %v2039 = vcombine.low %v2014, %v2022
    %v2040 = vcombine.high %v2014, %v2022
    %v2042 = vunpack.c.l.s4 1934713408
    %v2043 = vunpack.c.0.s8 %v2042
    %v2044 = vlaneseq
    %v2045 = vshrl.u32 %v2044, 7
    %v2046 = vsub.s32 %v2043, %v2045
    %v2047 = vrot.slane %v2039, %v2046
    %v2049 = vunpack.c.l.s4 1934713408
    %v2050 = vunpack.c.0.s8 %v2049
    %v2051 = vlaneseq
    %v2052 = vshrl.u32 %v2051, 7
    %v2053 = vsub.s32 %v2050, %v2052
    %v2054 = vrot.slane %v2040, %v2053
    %v2055 = vcombine.low %v2030, %v2038
    %v2056 = vcombine.high %v2030, %v2038
    %v2058 = vunpack.c.l.s4 1934713408
    %v2059 = vunpack.c.0.s8 %v2058
    %v2060 = vlaneseq
    %v2061 = vshrl.u32 %v2060, 7
    %v2062 = vsub.s32 %v2059, %v2061
    %v2063 = vrot.slane %v2055, %v2062
    %v2065 = vunpack.c.l.s4 1934713408
    %v2066 = vunpack.c.0.s8 %v2065
    %v2067 = vlaneseq
    %v2068 = vshrl.u32 %v2067, 7
    %v2069 = vsub.s32 %v2066, %v2068
    %v2070 = vrot.slane %v2056, %v2069
    %v2071 = vcombine.low %v2047, %v2063
    %v2072 = vcombine.high %v2047, %v2063
    %v2073 = vcombine.low %v2054, %v2070
    %v2074 = vcombine.high %v2054, %v2070
    %v2075 = vcombine.low %v1843, %v1850
    %v2077 = vunpack.c.l.s4 1983009808
    %v2078 = vunpack.c.0.s8 %v2077
    %v2079 = vlaneseq
    %v2080 = vshrl.u32 %v2079, 7
    %v2081 = vsub.s32 %v2078, %v2080
    %v2082 = vrot.slane %v2075, %v2081
    %v2083 = vcombine.low %v1867, %v1868
    %v2085 = vunpack.c.l.s4 1983009808
    %v2086 = vunpack.c.0.s8 %v2085
    %v2087 = vlaneseq
    %v2088 = vshrl.u32 %v2087, 7
    %v2089 = vsub.s32 %v2086, %v2088
    %v2090 = vrot.slane %v2083, %v2089
    %v2091 = vcombine.low %v1859, %v1866
    %v2093 = vunpack.c.l.s4 1983009808
    %v2094 = vunpack.c.0.s8 %v2093
    %v2095 = vlaneseq
    %v2096 = vshrl.u32 %v2095, 7
    %v2097 = vsub.s32 %v2094, %v2096
    %v2098 = vrot.slane %v2091, %v2097
    %v2099 = vcombine.low %v1869, %v1870
    %v2101 = vunpack.c.l.s4 1983009808
    %v2102 = vunpack.c.0.s8 %v2101
    %v2103 = vlaneseq
    %v2104 = vshrl.u32 %v2103, 7
    %v2105 = vsub.s32 %v2102, %v2104
    %v2106 = vrot.slane %v2099, %v2105
    %v2107 = vcombine.low %v2082, %v2090
    %v2108 = vcombine.high %v2082, %v2090
    %v2110 = vunpack.c.l.s4 1934713408
    %v2111 = vunpack.c.0.s8 %v2110
    %v2112 = vlaneseq
    %v2113 = vshrl.u32 %v2112, 7
    %v2114 = vsub.s32 %v2111, %v2113
    %v2115 = vrot.slane %v2107, %v2114
    %v2117 = vunpack.c.l.s4 1934713408
    %v2118 = vunpack.c.0.s8 %v2117
    %v2119 = vlaneseq
    %v2120 = vshrl.u32 %v2119, 7
    %v2121 = vsub.s32 %v2118, %v2120
    %v2122 = vrot.slane %v2108, %v2121
    %v2123 = vcombine.low %v2098, %v2106
    %v2124 = vcombine.high %v2098, %v2106
    %v2126 = vunpack.c.l.s4 1934713408
    %v2127 = vunpack.c.0.s8 %v2126
    %v2128 = vlaneseq
    %v2129 = vshrl.u32 %v2128, 7
    %v2130 = vsub.s32 %v2127, %v2129
    %v2131 = vrot.slane %v2123, %v2130
    %v2133 = vunpack.c.l.s4 1934713408
    %v2134 = vunpack.c.0.s8 %v2133
    %v2135 = vlaneseq
    %v2136 = vshrl.u32 %v2135, 7
    %v2137 = vsub.s32 %v2134, %v2136
    %v2138 = vrot.slane %v2124, %v2137
    %v2139 = vcombine.low %v2115, %v2131
    %v2140 = vcombine.high %v2115, %v2131
    %v2141 = vcombine.low %v2122, %v2138
    %v2142 = vcombine.high %v2122, %v2138
    %v2143 = vcombine.low %v1911, %v1918
    %v2145 = vunpack.c.l.s4 1983009808
    %v2146 = vunpack.c.0.s8 %v2145
    %v2147 = vlaneseq
    %v2148 = vshrl.u32 %v2147, 7
    %v2149 = vsub.s32 %v2146, %v2148
    %v2150 = vrot.slane %v2143, %v2149
    %v2151 = vcombine.low %v1935, %v1936
    %v2153 = vunpack.c.l.s4 1983009808
    %v2154 = vunpack.c.0.s8 %v2153
    %v2155 = vlaneseq
    %v2156 = vshrl.u32 %v2155, 7
    %v2157 = vsub.s32 %v2154, %v2156
    %v2158 = vrot.slane %v2151, %v2157
    %v2159 = vcombine.low %v1927, %v1934
    %v2161 = vunpack.c.l.s4 1983009808
    %v2162 = vunpack.c.0.s8 %v2161
    %v2163 = vlaneseq
    %v2164 = vshrl.u32 %v2163, 7
    %v2165 = vsub.s32 %v2162, %v2164
    %v2166 = vrot.slane %v2159, %v2165
    %v2167 = vcombine.low %v1937, %v1938
    %v2169 = vunpack.c.l.s4 1983009808
    %v2170 = vunpack.c.0.s8 %v2169
    %v2171 = vlaneseq
    %v2172 = vshrl.u32 %v2171, 7
    %v2173 = vsub.s32 %v2170, %v2172
    %v2174 = vrot.slane %v2167, %v2173
    %v2175 = vcombine.low %v2150, %v2158
    %v2176 = vcombine.high %v2150, %v2158
    %v2178 = vunpack.c.l.s4 1934713408
    %v2179 = vunpack.c.0.s8 %v2178
    %v2180 = vlaneseq
    %v2181 = vshrl.u32 %v2180, 7
    %v2182 = vsub.s32 %v2179, %v2181
    %v2183 = vrot.slane %v2175, %v2182
    %v2185 = vunpack.c.l.s4 1934713408
    %v2186 = vunpack.c.0.s8 %v2185
    %v2187 = vlaneseq
    %v2188 = vshrl.u32 %v2187, 7
    %v2189 = vsub.s32 %v2186, %v2188
    %v2190 = vrot.slane %v2176, %v2189
    %v2191 = vcombine.low %v2166, %v2174
    %v2192 = vcombine.high %v2166, %v2174
    %v2194 = vunpack.c.l.s4 1934713408
    %v2195 = vunpack.c.0.s8 %v2194
    %v2196 = vlaneseq
    %v2197 = vshrl.u32 %v2196, 7
    %v2198 = vsub.s32 %v2195, %v2197
    %v2199 = vrot.slane %v2191, %v2198
    %v2201 = vunpack.c.l.s4 1934713408
    %v2202 = vunpack.c.0.s8 %v2201
    %v2203 = vlaneseq
    %v2204 = vshrl.u32 %v2203, 7
    %v2205 = vsub.s32 %v2202, %v2204
    %v2206 = vrot.slane %v2192, %v2205
    %v2207 = vcombine.low %v2183, %v2199
    %v2208 = vcombine.high %v2183, %v2199
    %v2209 = vcombine.low %v2190, %v2206
    %v2210 = vcombine.high %v2190, %v2206
    %v2211 = vpack.c.bf16 %v2071, %v2003
    %v2212 = vpack.c.bf16 %v2207, %v2139
    %v2213 = vpack.c.bf16 %v2072, %v2004
    %v2214 = vpack.c.bf16 %v2208, %v2140
    %v2215 = vpack.c.bf16 %v2073, %v2005
    %v2216 = vpack.c.bf16 %v2209, %v2141
    %v2217 = vpack.c.bf16 %v2074, %v2006
    %v2218 = vpack.c.bf16 %v2210, %v2142
    %vm2219 = vcmask 261120
    %v2221 = vsel %vm2219, %v1027, 0
    %v2224 = vsel %vm2219, %v1619, 0
    %2226 = vmatprep.subr.bf16.mxu0 0
    %2227 = vmatpush1.bf16.xpose.msra.mxu0 0
    %2228 = vmatprep.subr.bf16.mxu0 0
    %2229 = vmatpush1.bf16.xpose.msra.mxu0 0
    %2230 = vmatprep.subr.bf16.mxu0 0
    %2231 = vmatpush1.bf16.xpose.msra.mxu0 0
    %2232 = vmatprep.subr.bf16.mxu0 0
    %2233 = vmatpush1.bf16.xpose.msra.mxu0 0
    %2234 = vmatprep.subr.bf16.mxu0 0
    %2235 = vmatpush1.bf16.xpose.msra.mxu0 0
    %2236 = vmatprep.subr.bf16.mxu0 0
    %2237 = vmatpush1.bf16.xpose.msra.mxu0 0
    %2238 = vmatprep.subr.bf16.mxu0 0
    %2239 = vmatpush1.bf16.xpose.msra.mxu0 0
    %2240 = vmatprep.subr.bf16.mxu0 0
    %2241 = vmatpush1.bf16.xpose.msra.mxu0 %v2224
    %2242 = vmatprep.subr.bf16.mxu0 0
    %2243 = vmatpush2.bf16.xpose.msra.mxu0 0
    %2244 = vmatprep.subr.bf16.mxu0 0
    %2245 = vmatpush2.bf16.xpose.msra.mxu0 0
    %2246 = vmatprep.subr.bf16.mxu0 0
    %2247 = vmatpush2.bf16.xpose.msra.mxu0 0
    %2248 = vmatprep.subr.bf16.mxu0 0
    %2249 = vmatpush2.bf16.xpose.msra.mxu0 0
    %2250 = vmatprep.subr.bf16.mxu0 0
    %2251 = vmatpush2.bf16.xpose.msra.mxu0 0
    %2252 = vmatprep.subr.bf16.mxu0 0
    %2253 = vmatpush2.bf16.xpose.msra.mxu0 0
    %2254 = vmatprep.subr.bf16.mxu0 0
    %2255 = vmatpush2.bf16.xpose.msra.mxu0 0
    %2256 = vmatprep.subr.bf16.mxu0 0
    %2257 = vmatpush2.bf16.xpose.msra.mxu0 0
    %2258 = vmatprep.mubr.bf16.mxu0 0
    %2259 = vmatmul.mubr.bf16.gmra.mxu0 %v2221
    %v2260 = vpop.f32.mrf.mxu0
    %v2261 = vadd.f32 0.0, %v2260
    %v2262 = vpop.f32.mrf.mxu0
    %v2263 = vpop.f32.mrf.mxu0
    %v2264 = vadd.f32 0.0, %v2263
    %v2265 = vpop.f32.mrf.mxu0
    %2266 = vdwg.mxu0
    %v2268 = vsel %vm2219, %v1028, 0
    %v2271 = vsel %vm2219, %v1620, 0
    %2273 = vmatprep.subr.bf16.mxu0 0
    %2274 = vmatpush1.bf16.xpose.msra.mxu0 0
    %2275 = vmatprep.subr.bf16.mxu0 0
    %2276 = vmatpush1.bf16.xpose.msra.mxu0 0
    %2277 = vmatprep.subr.bf16.mxu0 0
    %2278 = vmatpush1.bf16.xpose.msra.mxu0 0
    %2279 = vmatprep.subr.bf16.mxu0 0
    %2280 = vmatpush1.bf16.xpose.msra.mxu0 0
    %2281 = vmatprep.subr.bf16.mxu0 0
    %2282 = vmatpush1.bf16.xpose.msra.mxu0 0
    %2283 = vmatprep.subr.bf16.mxu0 0
    %2284 = vmatpush1.bf16.xpose.msra.mxu0 0
    %2285 = vmatprep.subr.bf16.mxu0 0
    %2286 = vmatpush1.bf16.xpose.msra.mxu0 0
    %2287 = vmatprep.subr.bf16.mxu0 0
    %2288 = vmatpush1.bf16.xpose.msra.mxu0 %v2271
    %2289 = vmatprep.subr.bf16.mxu0 0
    %2290 = vmatpush2.bf16.xpose.msra.mxu0 0
    %2291 = vmatprep.subr.bf16.mxu0 0
    %2292 = vmatpush2.bf16.xpose.msra.mxu0 0
    %2293 = vmatprep.subr.bf16.mxu0 0
    %2294 = vmatpush2.bf16.xpose.msra.mxu0 0
    %2295 = vmatprep.subr.bf16.mxu0 0
    %2296 = vmatpush2.bf16.xpose.msra.mxu0 0
    %2297 = vmatprep.subr.bf16.mxu0 0
    %2298 = vmatpush2.bf16.xpose.msra.mxu0 0
    %2299 = vmatprep.subr.bf16.mxu0 0
    %2300 = vmatpush2.bf16.xpose.msra.mxu0 0
    %2301 = vmatprep.subr.bf16.mxu0 0
    %2302 = vmatpush2.bf16.xpose.msra.mxu0 0
    %2303 = vmatprep.subr.bf16.mxu0 0
    %2304 = vmatpush2.bf16.xpose.msra.mxu0 0
    %2305 = vmatprep.mubr.bf16.mxu0 0
    %2306 = vmatmul.mubr.bf16.gmra.mxu0 %v2268
    %v2307 = vpop.f32.mrf.mxu0
    %v2308 = vadd.f32 0.0, %v2307
    %v2309 = vpop.f32.mrf.mxu0
    %v2310 = vpop.f32.mrf.mxu0
    %v2311 = vadd.f32 0.0, %v2310
    %v2312 = vpop.f32.mrf.mxu0
    %2313 = vdwg.mxu0
    %v2315 = vsel %vm2219, %v1029, 0
    %v2318 = vsel %vm2219, %v1621, 0
    %2320 = vmatprep.subr.bf16.mxu0 0
    %2321 = vmatpush1.bf16.xpose.msra.mxu0 0
    %2322 = vmatprep.subr.bf16.mxu0 0
    %2323 = vmatpush1.bf16.xpose.msra.mxu0 0
    %2324 = vmatprep.subr.bf16.mxu0 0
    %2325 = vmatpush1.bf16.xpose.msra.mxu0 0
    %2326 = vmatprep.subr.bf16.mxu0 0
    %2327 = vmatpush1.bf16.xpose.msra.mxu0 0
    %2328 = vmatprep.subr.bf16.mxu0 0
    %2329 = vmatpush1.bf16.xpose.msra.mxu0 0
    %2330 = vmatprep.subr.bf16.mxu0 0
    %2331 = vmatpush1.bf16.xpose.msra.mxu0 0
    %2332 = vmatprep.subr.bf16.mxu0 0
    %2333 = vmatpush1.bf16.xpose.msra.mxu0 0
    %2334 = vmatprep.subr.bf16.mxu0 0
    %2335 = vmatpush1.bf16.xpose.msra.mxu0 %v2318
    %2336 = vmatprep.subr.bf16.mxu0 0
    %2337 = vmatpush2.bf16.xpose.msra.mxu0 0
    %2338 = vmatprep.subr.bf16.mxu0 0
    %2339 = vmatpush2.bf16.xpose.msra.mxu0 0
    %2340 = vmatprep.subr.bf16.mxu0 0
    %2341 = vmatpush2.bf16.xpose.msra.mxu0 0
    %2342 = vmatprep.subr.bf16.mxu0 0
    %2343 = vmatpush2.bf16.xpose.msra.mxu0 0
    %2344 = vmatprep.subr.bf16.mxu0 0
    %2345 = vmatpush2.bf16.xpose.msra.mxu0 0
    %2346 = vmatprep.subr.bf16.mxu0 0
    %2347 = vmatpush2.bf16.xpose.msra.mxu0 0
    %2348 = vmatprep.subr.bf16.mxu0 0
    %2349 = vmatpush2.bf16.xpose.msra.mxu0 0
    %2350 = vmatprep.subr.bf16.mxu0 0
    %2351 = vmatpush2.bf16.xpose.msra.mxu0 0
    %2352 = vmatprep.mubr.bf16.mxu0 0
    %2353 = vmatmul.mubr.bf16.gmra.mxu0 %v2315
    %v2354 = vpop.f32.mrf.mxu0
    %v2355 = vadd.f32 0.0, %v2354
    %v2356 = vpop.f32.mrf.mxu0
    %v2357 = vpop.f32.mrf.mxu0
    %v2358 = vadd.f32 0.0, %v2357
    %v2359 = vpop.f32.mrf.mxu0
    %2360 = vdwg.mxu0
    %v2362 = vsel %vm2219, %v1030, 0
    %v2365 = vsel %vm2219, %v1622, 0
    %2367 = vmatprep.subr.bf16.mxu0 0
    %2368 = vmatpush1.bf16.xpose.msra.mxu0 0
    %2369 = vmatprep.subr.bf16.mxu0 0
    %2370 = vmatpush1.bf16.xpose.msra.mxu0 0
    %2371 = vmatprep.subr.bf16.mxu0 0
    %2372 = vmatpush1.bf16.xpose.msra.mxu0 0
    %2373 = vmatprep.subr.bf16.mxu0 0
    %2374 = vmatpush1.bf16.xpose.msra.mxu0 0
    %2375 = vmatprep.subr.bf16.mxu0 0
    %2376 = vmatpush1.bf16.xpose.msra.mxu0 0
    %2377 = vmatprep.subr.bf16.mxu0 0
    %2378 = vmatpush1.bf16.xpose.msra.mxu0 0
    %2379 = vmatprep.subr.bf16.mxu0 0
    %2380 = vmatpush1.bf16.xpose.msra.mxu0 0
    %2381 = vmatprep.subr.bf16.mxu0 0
    %2382 = vmatpush1.bf16.xpose.msra.mxu0 %v2365
    %2383 = vmatprep.subr.bf16.mxu0 0
    %2384 = vmatpush2.bf16.xpose.msra.mxu0 0
    %2385 = vmatprep.subr.bf16.mxu0 0
    %2386 = vmatpush2.bf16.xpose.msra.mxu0 0
    %2387 = vmatprep.subr.bf16.mxu0 0
    %2388 = vmatpush2.bf16.xpose.msra.mxu0 0
    %2389 = vmatprep.subr.bf16.mxu0 0
    %2390 = vmatpush2.bf16.xpose.msra.mxu0 0
    %2391 = vmatprep.subr.bf16.mxu0 0
    %2392 = vmatpush2.bf16.xpose.msra.mxu0 0
    %2393 = vmatprep.subr.bf16.mxu0 0
    %2394 = vmatpush2.bf16.xpose.msra.mxu0 0
    %2395 = vmatprep.subr.bf16.mxu0 0
    %2396 = vmatpush2.bf16.xpose.msra.mxu0 0
    %2397 = vmatprep.subr.bf16.mxu0 0
    %2398 = vmatpush2.bf16.xpose.msra.mxu0 0
    %2399 = vmatprep.mubr.bf16.mxu0 0
    %2400 = vmatmul.mubr.bf16.gmra.mxu0 %v2362
    %v2401 = vpop.f32.mrf.mxu0
    %v2402 = vadd.f32 0.0, %v2401
    %v2403 = vpop.f32.mrf.mxu0
    %v2404 = vpop.f32.mrf.mxu0
    %v2405 = vadd.f32 0.0, %v2404
    %v2406 = vpop.f32.mrf.mxu0
    %2407 = vdwg.mxu0
    %v2409 = vsel %vm2219, %v1031, 0
    %v2412 = vsel %vm2219, %v1623, 0
    %2414 = vmatprep.subr.bf16.mxu0 0
    %2415 = vmatpush1.bf16.xpose.msra.mxu0 0
    %2416 = vmatprep.subr.bf16.mxu0 0
    %2417 = vmatpush1.bf16.xpose.msra.mxu0 0
    %2418 = vmatprep.subr.bf16.mxu0 0
    %2419 = vmatpush1.bf16.xpose.msra.mxu0 0
    %2420 = vmatprep.subr.bf16.mxu0 0
    %2421 = vmatpush1.bf16.xpose.msra.mxu0 0
    %2422 = vmatprep.subr.bf16.mxu0 0
    %2423 = vmatpush1.bf16.xpose.msra.mxu0 0
    %2424 = vmatprep.subr.bf16.mxu0 0
    %2425 = vmatpush1.bf16.xpose.msra.mxu0 0
    %2426 = vmatprep.subr.bf16.mxu0 0
    %2427 = vmatpush1.bf16.xpose.msra.mxu0 0
    %2428 = vmatprep.subr.bf16.mxu0 0
    %2429 = vmatpush1.bf16.xpose.msra.mxu0 %v2412
    %2430 = vmatprep.subr.bf16.mxu0 0
    %2431 = vmatpush2.bf16.xpose.msra.mxu0 0
    %2432 = vmatprep.subr.bf16.mxu0 0
    %2433 = vmatpush2.bf16.xpose.msra.mxu0 0
    %2434 = vmatprep.subr.bf16.mxu0 0
    %2435 = vmatpush2.bf16.xpose.msra.mxu0 0
    %2436 = vmatprep.subr.bf16.mxu0 0
    %2437 = vmatpush2.bf16.xpose.msra.mxu0 0
    %2438 = vmatprep.subr.bf16.mxu0 0
    %2439 = vmatpush2.bf16.xpose.msra.mxu0 0
    %2440 = vmatprep.subr.bf16.mxu0 0
    %2441 = vmatpush2.bf16.xpose.msra.mxu0 0
    %2442 = vmatprep.subr.bf16.mxu0 0
    %2443 = vmatpush2.bf16.xpose.msra.mxu0 0
    %2444 = vmatprep.subr.bf16.mxu0 0
    %2445 = vmatpush2.bf16.xpose.msra.mxu0 0
    %2446 = vmatprep.mubr.bf16.mxu0 0
    %2447 = vmatmul.mubr.bf16.gmra.mxu0 %v2409
    %v2448 = vpop.f32.mrf.mxu0
    %v2449 = vadd.f32 0.0, %v2448
    %v2450 = vpop.f32.mrf.mxu0
    %v2451 = vpop.f32.mrf.mxu0
    %v2452 = vadd.f32 0.0, %v2451
    %v2453 = vpop.f32.mrf.mxu0
    %2454 = vdwg.mxu0
    %v2456 = vsel %vm2219, %v1032, 0
    %v2459 = vsel %vm2219, %v1624, 0
    %2461 = vmatprep.subr.bf16.mxu0 0
    %2462 = vmatpush1.bf16.xpose.msra.mxu0 0
    %2463 = vmatprep.subr.bf16.mxu0 0
    %2464 = vmatpush1.bf16.xpose.msra.mxu0 0
    %2465 = vmatprep.subr.bf16.mxu0 0
    %2466 = vmatpush1.bf16.xpose.msra.mxu0 0
    %2467 = vmatprep.subr.bf16.mxu0 0
    %2468 = vmatpush1.bf16.xpose.msra.mxu0 0
    %2469 = vmatprep.subr.bf16.mxu0 0
    %2470 = vmatpush1.bf16.xpose.msra.mxu0 0
    %2471 = vmatprep.subr.bf16.mxu0 0
    %2472 = vmatpush1.bf16.xpose.msra.mxu0 0
    %2473 = vmatprep.subr.bf16.mxu0 0
    %2474 = vmatpush1.bf16.xpose.msra.mxu0 0
    %2475 = vmatprep.subr.bf16.mxu0 0
    %2476 = vmatpush1.bf16.xpose.msra.mxu0 %v2459
    %2477 = vmatprep.subr.bf16.mxu0 0
    %2478 = vmatpush2.bf16.xpose.msra.mxu0 0
    %2479 = vmatprep.subr.bf16.mxu0 0
    %2480 = vmatpush2.bf16.xpose.msra.mxu0 0
    %2481 = vmatprep.subr.bf16.mxu0 0
    %2482 = vmatpush2.bf16.xpose.msra.mxu0 0
    %2483 = vmatprep.subr.bf16.mxu0 0
    %2484 = vmatpush2.bf16.xpose.msra.mxu0 0
    %2485 = vmatprep.subr.bf16.mxu0 0
    %2486 = vmatpush2.bf16.xpose.msra.mxu0 0
    %2487 = vmatprep.subr.bf16.mxu0 0
    %2488 = vmatpush2.bf16.xpose.msra.mxu0 0
    %2489 = vmatprep.subr.bf16.mxu0 0
    %2490 = vmatpush2.bf16.xpose.msra.mxu0 0
    %2491 = vmatprep.subr.bf16.mxu0 0
    %2492 = vmatpush2.bf16.xpose.msra.mxu0 0
    %2493 = vmatprep.mubr.bf16.mxu0 0
    %2494 = vmatmul.mubr.bf16.gmra.mxu0 %v2456
    %v2495 = vpop.f32.mrf.mxu0
    %v2496 = vadd.f32 0.0, %v2495
    %v2497 = vpop.f32.mrf.mxu0
    %v2498 = vpop.f32.mrf.mxu0
    %v2499 = vadd.f32 0.0, %v2498
    %v2500 = vpop.f32.mrf.mxu0
    %2501 = vdwg.mxu0
    %v2503 = vsel %vm2219, %v1033, 0
    %v2506 = vsel %vm2219, %v1625, 0
    %2508 = vmatprep.subr.bf16.mxu0 0
    %2509 = vmatpush1.bf16.xpose.msra.mxu0 0
    %2510 = vmatprep.subr.bf16.mxu0 0
    %2511 = vmatpush1.bf16.xpose.msra.mxu0 0
    %2512 = vmatprep.subr.bf16.mxu0 0
    %2513 = vmatpush1.bf16.xpose.msra.mxu0 0
    %2514 = vmatprep.subr.bf16.mxu0 0
    %2515 = vmatpush1.bf16.xpose.msra.mxu0 0
    %2516 = vmatprep.subr.bf16.mxu0 0
    %2517 = vmatpush1.bf16.xpose.msra.mxu0 0
    %2518 = vmatprep.subr.bf16.mxu0 0
    %2519 = vmatpush1.bf16.xpose.msra.mxu0 0
    %2520 = vmatprep.subr.bf16.mxu0 0
    %2521 = vmatpush1.bf16.xpose.msra.mxu0 0
    %2522 = vmatprep.subr.bf16.mxu0 0
    %2523 = vmatpush1.bf16.xpose.msra.mxu0 %v2506
    %2524 = vmatprep.subr.bf16.mxu0 0
    %2525 = vmatpush2.bf16.xpose.msra.mxu0 0
    %2526 = vmatprep.subr.bf16.mxu0 0
    %2527 = vmatpush2.bf16.xpose.msra.mxu0 0
    %2528 = vmatprep.subr.bf16.mxu0 0
    %2529 = vmatpush2.bf16.xpose.msra.mxu0 0
    %2530 = vmatprep.subr.bf16.mxu0 0
    %2531 = vmatpush2.bf16.xpose.msra.mxu0 0
    %2532 = vmatprep.subr.bf16.mxu0 0
    %2533 = vmatpush2.bf16.xpose.msra.mxu0 0
    %2534 = vmatprep.subr.bf16.mxu0 0
    %2535 = vmatpush2.bf16.xpose.msra.mxu0 0
    %2536 = vmatprep.subr.bf16.mxu0 0
    %2537 = vmatpush2.bf16.xpose.msra.mxu0 0
    %2538 = vmatprep.subr.bf16.mxu0 0
    %2539 = vmatpush2.bf16.xpose.msra.mxu0 0
    %2540 = vmatprep.mubr.bf16.mxu0 0
    %2541 = vmatmul.mubr.bf16.gmra.mxu0 %v2503
    %v2542 = vpop.f32.mrf.mxu0
    %v2543 = vadd.f32 0.0, %v2542
    %v2544 = vpop.f32.mrf.mxu0
    %v2545 = vpop.f32.mrf.mxu0
    %v2546 = vadd.f32 0.0, %v2545
    %v2547 = vpop.f32.mrf.mxu0
    %2548 = vdwg.mxu0
    %v2550 = vsel %vm2219, %v1034, 0
    %v2553 = vsel %vm2219, %v1626, 0
    %2555 = vmatprep.subr.bf16.mxu0 0
    %2556 = vmatpush1.bf16.xpose.msra.mxu0 0
    %2557 = vmatprep.subr.bf16.mxu0 0
    %2558 = vmatpush1.bf16.xpose.msra.mxu0 0
    %2559 = vmatprep.subr.bf16.mxu0 0
    %2560 = vmatpush1.bf16.xpose.msra.mxu0 0
    %2561 = vmatprep.subr.bf16.mxu0 0
    %2562 = vmatpush1.bf16.xpose.msra.mxu0 0
    %2563 = vmatprep.subr.bf16.mxu0 0
    %2564 = vmatpush1.bf16.xpose.msra.mxu0 0
    %2565 = vmatprep.subr.bf16.mxu0 0
    %2566 = vmatpush1.bf16.xpose.msra.mxu0 0
    %2567 = vmatprep.subr.bf16.mxu0 0
    %2568 = vmatpush1.bf16.xpose.msra.mxu0 0
    %2569 = vmatprep.subr.bf16.mxu0 0
    %2570 = vmatpush1.bf16.xpose.msra.mxu0 %v2553
    %2571 = vmatprep.subr.bf16.mxu0 0
    %2572 = vmatpush2.bf16.xpose.msra.mxu0 0
    %2573 = vmatprep.subr.bf16.mxu0 0
    %2574 = vmatpush2.bf16.xpose.msra.mxu0 0
    %2575 = vmatprep.subr.bf16.mxu0 0
    %2576 = vmatpush2.bf16.xpose.msra.mxu0 0
    %2577 = vmatprep.subr.bf16.mxu0 0
    %2578 = vmatpush2.bf16.xpose.msra.mxu0 0
    %2579 = vmatprep.subr.bf16.mxu0 0
    %2580 = vmatpush2.bf16.xpose.msra.mxu0 0
    %2581 = vmatprep.subr.bf16.mxu0 0
    %2582 = vmatpush2.bf16.xpose.msra.mxu0 0
    %2583 = vmatprep.subr.bf16.mxu0 0
    %2584 = vmatpush2.bf16.xpose.msra.mxu0 0
    %2585 = vmatprep.subr.bf16.mxu0 0
    %2586 = vmatpush2.bf16.xpose.msra.mxu0 0
    %2587 = vmatprep.mubr.bf16.mxu0 0
    %2588 = vmatmul.mubr.bf16.gmra.mxu0 %v2550
    %v2589 = vpop.f32.mrf.mxu0
    %v2590 = vadd.f32 0.0, %v2589
    %v2591 = vpop.f32.mrf.mxu0
    %v2592 = vpop.f32.mrf.mxu0
    %v2593 = vadd.f32 0.0, %v2592
    %v2594 = vpop.f32.mrf.mxu0
    %2595 = vdwg.mxu0
    %v2596 = vld [vmem:[#allocation8] sm:$0xff]
    %v2597 = vld [vmem:[#allocation8 + $0x8] sm:$0xff]
    %v2598 = vld [vmem:[#allocation8 + $0x10] sm:$0xff]
    %v2599 = vld [vmem:[#allocation8 + $0x18] sm:$0xff]
    %v2600 = vld [vmem:[#allocation8 + $0x20] sm:$0xff]
    %v2601 = vld [vmem:[#allocation8 + $0x28] sm:$0xff]
    %v2602 = vld [vmem:[#allocation8 + $0x30] sm:$0xff]
    %v2603 = vld [vmem:[#allocation8 + $0x38] sm:$0xff]
    %v2604 = vadd.f32 %v2261, %v2596
    %v2605 = vadd.f32 %v2264, %v2597
    %v2606 = vadd.f32 %v2308, %v2596
    %v2607 = vadd.f32 %v2311, %v2597
    %v2608 = vadd.f32 %v2355, %v2598
    %v2609 = vadd.f32 %v2358, %v2599
    %v2610 = vadd.f32 %v2402, %v2598
    %v2611 = vadd.f32 %v2405, %v2599
    %v2612 = vadd.f32 %v2449, %v2600
    %v2613 = vadd.f32 %v2452, %v2601
    %v2614 = vadd.f32 %v2496, %v2600
    %v2615 = vadd.f32 %v2499, %v2601
    %v2616 = vadd.f32 %v2543, %v2602
    %v2617 = vadd.f32 %v2546, %v2603
    %v2618 = vadd.f32 %v2590, %v2602
    %v2619 = vadd.f32 %v2593, %v2603
    %vm2620 = vcmask 130048
    %v2621 = vsel %vm2620, %v2604, -inf
    %2622 = vmax.xlane.f32.xlu0 %v2621
    %v2623 = vpop.xlane.xlu0 %2622
    %v2624 = vsel %vm2620, %v2605, -inf
    %2625 = vmax.xlane.f32.xlu0 %v2624
    %v2626 = vpop.xlane.xlu0 %2625
    %v2627 = vsel %vm2620, %v2606, -inf
    %2628 = vmax.xlane.f32.xlu0 %v2627
    %v2629 = vpop.xlane.xlu0 %2628
    %v2630 = vsel %vm2620, %v2607, -inf
    %2631 = vmax.xlane.f32.xlu0 %v2630
    %v2632 = vpop.xlane.xlu0 %2631
    %v2633 = vsel %vm2620, %v2608, -inf
    %2634 = vmax.xlane.f32.xlu0 %v2633
    %v2635 = vpop.xlane.xlu0 %2634
    %v2636 = vsel %vm2620, %v2609, -inf
    %2637 = vmax.xlane.f32.xlu0 %v2636
    %v2638 = vpop.xlane.xlu0 %2637
    %v2639 = vsel %vm2620, %v2610, -inf
    %2640 = vmax.xlane.f32.xlu0 %v2639
    %v2641 = vpop.xlane.xlu0 %2640
    %v2642 = vsel %vm2620, %v2611, -inf
    %2643 = vmax.xlane.f32.xlu0 %v2642
    %v2644 = vpop.xlane.xlu0 %2643
    %v2645 = vsel %vm2620, %v2612, -inf
    %2646 = vmax.xlane.f32.xlu0 %v2645
    %v2647 = vpop.xlane.xlu0 %2646
    %v2648 = vsel %vm2620, %v2613, -inf
    %2649 = vmax.xlane.f32.xlu0 %v2648
    %v2650 = vpop.xlane.xlu0 %2649
    %v2651 = vsel %vm2620, %v2614, -inf
    %2652 = vmax.xlane.f32.xlu0 %v2651
    %v2653 = vpop.xlane.xlu0 %2652
    %v2654 = vsel %vm2620, %v2615, -inf
    %2655 = vmax.xlane.f32.xlu0 %v2654
    %v2656 = vpop.xlane.xlu0 %2655
    %v2657 = vsel %vm2620, %v2616, -inf
    %2658 = vmax.xlane.f32.xlu0 %v2657
    %v2659 = vpop.xlane.xlu0 %2658
    %v2660 = vsel %vm2620, %v2617, -inf
    %2661 = vmax.xlane.f32.xlu0 %v2660
    %v2662 = vpop.xlane.xlu0 %2661
    %v2663 = vsel %vm2620, %v2618, -inf
    %2664 = vmax.xlane.f32.xlu0 %v2663
    %v2665 = vpop.xlane.xlu0 %2664
    %v2666 = vsel %vm2620, %v2619, -inf
    %2667 = vmax.xlane.f32.xlu0 %v2666
    %v2668 = vpop.xlane.xlu0 %2667
    %v2669 = vsub.f32 %v2604, %v2623
    %v2670 = vsub.f32 %v2605, %v2626
    %v2671 = vsub.f32 %v2606, %v2629
    %v2672 = vsub.f32 %v2607, %v2632
    %v2673 = vsub.f32 %v2608, %v2635
    %v2674 = vsub.f32 %v2609, %v2638
    %v2675 = vsub.f32 %v2610, %v2641
    %v2676 = vsub.f32 %v2611, %v2644
    %v2677 = vsub.f32 %v2612, %v2647
    %v2678 = vsub.f32 %v2613, %v2650
    %v2679 = vsub.f32 %v2614, %v2653
    %v2680 = vsub.f32 %v2615, %v2656
    %v2681 = vsub.f32 %v2616, %v2659
    %v2682 = vsub.f32 %v2617, %v2662
    %v2683 = vsub.f32 %v2618, %v2665
    %v2684 = vsub.f32 %v2619, %v2668
    %v2685 = vmul.f32 %v2669, 1.442695
    %v2686 = vpow.pop %v2685
    %v2687 = vmul.f32 %v2670, 1.442695
    %v2688 = vpow.pop %v2687
    %v2689 = vmul.f32 %v2671, 1.442695
    %v2690 = vpow.pop %v2689
    %v2691 = vmul.f32 %v2672, 1.442695
    %v2692 = vpow.pop %v2691
    %v2693 = vmul.f32 %v2673, 1.442695
    %v2694 = vpow.pop %v2693
    %v2695 = vmul.f32 %v2674, 1.442695
    %v2696 = vpow.pop %v2695
    %v2697 = vmul.f32 %v2675, 1.442695
    %v2698 = vpow.pop %v2697
    %v2699 = vmul.f32 %v2676, 1.442695
    %v2700 = vpow.pop %v2699
    %v2701 = vmul.f32 %v2677, 1.442695
    %v2702 = vpow.pop %v2701
    %v2703 = vmul.f32 %v2678, 1.442695
    %v2704 = vpow.pop %v2703
    %v2705 = vmul.f32 %v2679, 1.442695
    %v2706 = vpow.pop %v2705
    %v2707 = vmul.f32 %v2680, 1.442695
    %v2708 = vpow.pop %v2707
    %v2709 = vmul.f32 %v2681, 1.442695
    %v2710 = vpow.pop %v2709
    %v2711 = vmul.f32 %v2682, 1.442695
    %v2712 = vpow.pop %v2711
    %v2713 = vmul.f32 %v2683, 1.442695
    %v2714 = vpow.pop %v2713
    %v2715 = vmul.f32 %v2684, 1.442695
    %v2716 = vpow.pop %v2715
    %v2717 = vsel %vm2620, %v2686, 0.0
    %2718 = vadd.xlane.f32.xlu0 %v2717
    %v2719 = vpop.xlane.xlu0 %2718
    %v2720 = vsel %vm2620, %v2688, 0.0
    %2721 = vadd.xlane.f32.xlu0 %v2720
    %v2722 = vpop.xlane.xlu0 %2721
    %v2723 = vsel %vm2620, %v2690, 0.0
    %2724 = vadd.xlane.f32.xlu0 %v2723
    %v2725 = vpop.xlane.xlu0 %2724
    %v2726 = vsel %vm2620, %v2692, 0.0
    %2727 = vadd.xlane.f32.xlu0 %v2726
    %v2728 = vpop.xlane.xlu0 %2727
    %v2729 = vsel %vm2620, %v2694, 0.0
    %2730 = vadd.xlane.f32.xlu0 %v2729
    %v2731 = vpop.xlane.xlu0 %2730
    %v2732 = vsel %vm2620, %v2696, 0.0
    %2733 = vadd.xlane.f32.xlu0 %v2732
    %v2734 = vpop.xlane.xlu0 %2733
    %v2735 = vsel %vm2620, %v2698, 0.0
    %2736 = vadd.xlane.f32.xlu0 %v2735
    %v2737 = vpop.xlane.xlu0 %2736
    %v2738 = vsel %vm2620, %v2700, 0.0
    %2739 = vadd.xlane.f32.xlu0 %v2738
    %v2740 = vpop.xlane.xlu0 %2739
    %v2741 = vsel %vm2620, %v2702, 0.0
    %2742 = vadd.xlane.f32.xlu0 %v2741
    %v2743 = vpop.xlane.xlu0 %2742
    %v2744 = vsel %vm2620, %v2704, 0.0
    %2745 = vadd.xlane.f32.xlu0 %v2744
    %v2746 = vpop.xlane.xlu0 %2745
    %v2747 = vsel %vm2620, %v2706, 0.0
    %2748 = vadd.xlane.f32.xlu0 %v2747
    %v2749 = vpop.xlane.xlu0 %2748
    %v2750 = vsel %vm2620, %v2708, 0.0
    %2751 = vadd.xlane.f32.xlu0 %v2750
    %v2752 = vpop.xlane.xlu0 %2751
    %v2753 = vsel %vm2620, %v2710, 0.0
    %2754 = vadd.xlane.f32.xlu0 %v2753
    %v2755 = vpop.xlane.xlu0 %2754
    %v2756 = vsel %vm2620, %v2712, 0.0
    %2757 = vadd.xlane.f32.xlu0 %v2756
    %v2758 = vpop.xlane.xlu0 %2757
    %v2759 = vsel %vm2620, %v2714, 0.0
    %2760 = vadd.xlane.f32.xlu0 %v2759
    %v2761 = vpop.xlane.xlu0 %2760
    %v2762 = vsel %vm2620, %v2716, 0.0
    %2763 = vadd.xlane.f32.xlu0 %v2762
    %v2764 = vpop.xlane.xlu0 %2763
    %v2765 = vrcp.pop %v2719
    %v2766 = vrcp.pop %v2722
    %v2767 = vrcp.pop %v2725
    %v2768 = vrcp.pop %v2728
    %v2769 = vrcp.pop %v2731
    %v2770 = vrcp.pop %v2734
    %v2771 = vrcp.pop %v2737
    %v2772 = vrcp.pop %v2740
    %v2773 = vrcp.pop %v2743
    %v2774 = vrcp.pop %v2746
    %v2775 = vrcp.pop %v2749
    %v2776 = vrcp.pop %v2752
    %v2777 = vrcp.pop %v2755
    %v2778 = vrcp.pop %v2758
    %v2779 = vrcp.pop %v2761
    %v2780 = vrcp.pop %v2764
    %v2781 = vmul.f32 %v2686, %v2765
    %v2782 = vmul.f32 %v2688, %v2766
    %v2783 = vmul.f32 %v2690, %v2767
    %v2784 = vmul.f32 %v2692, %v2768
    %v2785 = vmul.f32 %v2694, %v2769
    %v2786 = vmul.f32 %v2696, %v2770
    %v2787 = vmul.f32 %v2698, %v2771
    %v2788 = vmul.f32 %v2700, %v2772
    %v2789 = vmul.f32 %v2702, %v2773
    %v2790 = vmul.f32 %v2704, %v2774
    %v2791 = vmul.f32 %v2706, %v2775
    %v2792 = vmul.f32 %v2708, %v2776
    %v2793 = vmul.f32 %v2710, %v2777
    %v2794 = vmul.f32 %v2712, %v2778
    %v2795 = vmul.f32 %v2714, %v2779
    %v2796 = vmul.f32 %v2716, %v2780
    %v2797 = vpack.c.bf16 %v2782, %v2781
    %v2798 = vpack.c.bf16 %v2784, %v2783
    %v2799 = vpack.c.bf16 %v2786, %v2785
    %v2800 = vpack.c.bf16 %v2788, %v2787
    %v2801 = vpack.c.bf16 %v2790, %v2789
    %v2802 = vpack.c.bf16 %v2792, %v2791
    %v2803 = vpack.c.bf16 %v2794, %v2793
    %v2804 = vpack.c.bf16 %v2796, %v2795
    %v2806 = vsel %vm2620, %v2797, 0
    %2808 = vmatprep.subr.bf16.mxu0 0
    %2809 = vmatpush1.bf16.msra.mxu0 0
    %2810 = vmatprep.subr.bf16.mxu0 0
    %2811 = vmatpush1.bf16.msra.mxu0 0
    %2812 = vmatprep.subr.bf16.mxu0 0
    %2813 = vmatpush1.bf16.msra.mxu0 0
    %2814 = vmatprep.subr.bf16.mxu0 0
    %2815 = vmatpush1.bf16.msra.mxu0 0
    %2816 = vmatprep.subr.bf16.mxu0 0
    %2817 = vmatpush1.bf16.msra.mxu0 0
    %2818 = vmatprep.subr.bf16.mxu0 0
    %2819 = vmatpush1.bf16.msra.mxu0 0
    %2820 = vmatprep.subr.bf16.mxu0 0
    %2821 = vmatpush1.bf16.msra.mxu0 0
    %2822 = vmatprep.subr.bf16.mxu0 0
    %2823 = vmatpush1.bf16.msra.mxu0 %v2211
    %2824 = vmatprep.subr.bf16.mxu0 0
    %2825 = vmatpush2.bf16.msra.mxu0 0
    %2826 = vmatprep.subr.bf16.mxu0 0
    %2827 = vmatpush2.bf16.msra.mxu0 0
    %2828 = vmatprep.subr.bf16.mxu0 0
    %2829 = vmatpush2.bf16.msra.mxu0 0
    %2830 = vmatprep.subr.bf16.mxu0 0
    %2831 = vmatpush2.bf16.msra.mxu0 0
    %2832 = vmatprep.subr.bf16.mxu0 0
    %2833 = vmatpush2.bf16.msra.mxu0 0
    %2834 = vmatprep.subr.bf16.mxu0 0
    %2835 = vmatpush2.bf16.msra.mxu0 0
    %2836 = vmatprep.subr.bf16.mxu0 0
    %2837 = vmatpush2.bf16.msra.mxu0 0
    %2838 = vmatprep.subr.bf16.mxu0 0
    %2839 = vmatpush2.bf16.msra.mxu0 0
    %2840 = vmatprep.mubr.bf16.mxu0 0
    %2841 = vmatmul.mubr.bf16.gmra.mxu0 %v2806
    %v2842 = vpop.f32.mrf.mxu0
    %v2843 = vadd.f32 0.0, %v2842
    %v2844 = vpop.f32.mrf.mxu0
    %v2845 = vpop.f32.mrf.mxu0
    %v2846 = vadd.f32 0.0, %v2845
    %v2847 = vpop.f32.mrf.mxu0
    %2848 = vdwg.mxu0
    %v2850 = vsel %vm2620, %v2798, 0
    %2852 = vmatprep.subr.bf16.mxu0 0
    %2853 = vmatpush1.bf16.msra.mxu0 0
    %2854 = vmatprep.subr.bf16.mxu0 0
    %2855 = vmatpush1.bf16.msra.mxu0 0
    %2856 = vmatprep.subr.bf16.mxu0 0
    %2857 = vmatpush1.bf16.msra.mxu0 0
    %2858 = vmatprep.subr.bf16.mxu0 0
    %2859 = vmatpush1.bf16.msra.mxu0 0
    %2860 = vmatprep.subr.bf16.mxu0 0
    %2861 = vmatpush1.bf16.msra.mxu0 0
    %2862 = vmatprep.subr.bf16.mxu0 0
    %2863 = vmatpush1.bf16.msra.mxu0 0
    %2864 = vmatprep.subr.bf16.mxu0 0
    %2865 = vmatpush1.bf16.msra.mxu0 0
    %2866 = vmatprep.subr.bf16.mxu0 0
    %2867 = vmatpush1.bf16.msra.mxu0 %v2212
    %2868 = vmatprep.subr.bf16.mxu0 0
    %2869 = vmatpush2.bf16.msra.mxu0 0
    %2870 = vmatprep.subr.bf16.mxu0 0
    %2871 = vmatpush2.bf16.msra.mxu0 0
    %2872 = vmatprep.subr.bf16.mxu0 0
    %2873 = vmatpush2.bf16.msra.mxu0 0
    %2874 = vmatprep.subr.bf16.mxu0 0
    %2875 = vmatpush2.bf16.msra.mxu0 0
    %2876 = vmatprep.subr.bf16.mxu0 0
    %2877 = vmatpush2.bf16.msra.mxu0 0
    %2878 = vmatprep.subr.bf16.mxu0 0
    %2879 = vmatpush2.bf16.msra.mxu0 0
    %2880 = vmatprep.subr.bf16.mxu0 0
    %2881 = vmatpush2.bf16.msra.mxu0 0
    %2882 = vmatprep.subr.bf16.mxu0 0
    %2883 = vmatpush2.bf16.msra.mxu0 0
    %2884 = vmatprep.mubr.bf16.mxu0 0
    %2885 = vmatmul.mubr.bf16.gmra.mxu0 %v2850
    %v2886 = vpop.f32.mrf.mxu0
    %v2887 = vadd.f32 0.0, %v2886
    %v2888 = vpop.f32.mrf.mxu0
    %v2889 = vpop.f32.mrf.mxu0
    %v2890 = vadd.f32 0.0, %v2889
    %v2891 = vpop.f32.mrf.mxu0
    %2892 = vdwg.mxu0
    %v2894 = vsel %vm2620, %v2799, 0
    %2896 = vmatprep.subr.bf16.mxu0 0
    %2897 = vmatpush1.bf16.msra.mxu0 0
    %2898 = vmatprep.subr.bf16.mxu0 0
    %2899 = vmatpush1.bf16.msra.mxu0 0
    %2900 = vmatprep.subr.bf16.mxu0 0
    %2901 = vmatpush1.bf16.msra.mxu0 0
    %2902 = vmatprep.subr.bf16.mxu0 0
    %2903 = vmatpush1.bf16.msra.mxu0 0
    %2904 = vmatprep.subr.bf16.mxu0 0
    %2905 = vmatpush1.bf16.msra.mxu0 0
    %2906 = vmatprep.subr.bf16.mxu0 0
    %2907 = vmatpush1.bf16.msra.mxu0 0
    %2908 = vmatprep.subr.bf16.mxu0 0
    %2909 = vmatpush1.bf16.msra.mxu0 0
    %2910 = vmatprep.subr.bf16.mxu0 0
    %2911 = vmatpush1.bf16.msra.mxu0 %v2213
    %2912 = vmatprep.subr.bf16.mxu0 0
    %2913 = vmatpush2.bf16.msra.mxu0 0
    %2914 = vmatprep.subr.bf16.mxu0 0
    %2915 = vmatpush2.bf16.msra.mxu0 0
    %2916 = vmatprep.subr.bf16.mxu0 0
    %2917 = vmatpush2.bf16.msra.mxu0 0
    %2918 = vmatprep.subr.bf16.mxu0 0
    %2919 = vmatpush2.bf16.msra.mxu0 0
    %2920 = vmatprep.subr.bf16.mxu0 0
    %2921 = vmatpush2.bf16.msra.mxu0 0
    %2922 = vmatprep.subr.bf16.mxu0 0
    %2923 = vmatpush2.bf16.msra.mxu0 0
    %2924 = vmatprep.subr.bf16.mxu0 0
    %2925 = vmatpush2.bf16.msra.mxu0 0
    %2926 = vmatprep.subr.bf16.mxu0 0
    %2927 = vmatpush2.bf16.msra.mxu0 0
    %2928 = vmatprep.mubr.bf16.mxu0 0
    %2929 = vmatmul.mubr.bf16.gmra.mxu0 %v2894
    %v2930 = vpop.f32.mrf.mxu0
    %v2931 = vadd.f32 0.0, %v2930
    %v2932 = vpop.f32.mrf.mxu0
    %v2933 = vpop.f32.mrf.mxu0
    %v2934 = vadd.f32 0.0, %v2933
    %v2935 = vpop.f32.mrf.mxu0
    %2936 = vdwg.mxu0
    %v2938 = vsel %vm2620, %v2800, 0
    %2940 = vmatprep.subr.bf16.mxu0 0
    %2941 = vmatpush1.bf16.msra.mxu0 0
    %2942 = vmatprep.subr.bf16.mxu0 0
    %2943 = vmatpush1.bf16.msra.mxu0 0
    %2944 = vmatprep.subr.bf16.mxu0 0
    %2945 = vmatpush1.bf16.msra.mxu0 0
    %2946 = vmatprep.subr.bf16.mxu0 0
    %2947 = vmatpush1.bf16.msra.mxu0 0
    %2948 = vmatprep.subr.bf16.mxu0 0
    %2949 = vmatpush1.bf16.msra.mxu0 0
    %2950 = vmatprep.subr.bf16.mxu0 0
    %2951 = vmatpush1.bf16.msra.mxu0 0
    %2952 = vmatprep.subr.bf16.mxu0 0
    %2953 = vmatpush1.bf16.msra.mxu0 0
    %2954 = vmatprep.subr.bf16.mxu0 0
    %2955 = vmatpush1.bf16.msra.mxu0 %v2214
    %2956 = vmatprep.subr.bf16.mxu0 0
    %2957 = vmatpush2.bf16.msra.mxu0 0
    %2958 = vmatprep.subr.bf16.mxu0 0
    %2959 = vmatpush2.bf16.msra.mxu0 0
    %2960 = vmatprep.subr.bf16.mxu0 0
    %2961 = vmatpush2.bf16.msra.mxu0 0
    %2962 = vmatprep.subr.bf16.mxu0 0
    %2963 = vmatpush2.bf16.msra.mxu0 0
    %2964 = vmatprep.subr.bf16.mxu0 0
    %2965 = vmatpush2.bf16.msra.mxu0 0
    %2966 = vmatprep.subr.bf16.mxu0 0
    %2967 = vmatpush2.bf16.msra.mxu0 0
    %2968 = vmatprep.subr.bf16.mxu0 0
    %2969 = vmatpush2.bf16.msra.mxu0 0
    %2970 = vmatprep.subr.bf16.mxu0 0
    %2971 = vmatpush2.bf16.msra.mxu0 0
    %2972 = vmatprep.mubr.bf16.mxu0 0
    %2973 = vmatmul.mubr.bf16.gmra.mxu0 %v2938
    %v2974 = vpop.f32.mrf.mxu0
    %v2975 = vadd.f32 0.0, %v2974
    %v2976 = vpop.f32.mrf.mxu0
    %v2977 = vpop.f32.mrf.mxu0
    %v2978 = vadd.f32 0.0, %v2977
    %v2979 = vpop.f32.mrf.mxu0
    %2980 = vdwg.mxu0
    %v2982 = vsel %vm2620, %v2801, 0
    %2984 = vmatprep.subr.bf16.mxu0 0
    %2985 = vmatpush1.bf16.msra.mxu0 0
    %2986 = vmatprep.subr.bf16.mxu0 0
    %2987 = vmatpush1.bf16.msra.mxu0 0
    %2988 = vmatprep.subr.bf16.mxu0 0
    %2989 = vmatpush1.bf16.msra.mxu0 0
    %2990 = vmatprep.subr.bf16.mxu0 0
    %2991 = vmatpush1.bf16.msra.mxu0 0
    %2992 = vmatprep.subr.bf16.mxu0 0
    %2993 = vmatpush1.bf16.msra.mxu0 0
    %2994 = vmatprep.subr.bf16.mxu0 0
    %2995 = vmatpush1.bf16.msra.mxu0 0
    %2996 = vmatprep.subr.bf16.mxu0 0
    %2997 = vmatpush1.bf16.msra.mxu0 0
    %2998 = vmatprep.subr.bf16.mxu0 0
    %2999 = vmatpush1.bf16.msra.mxu0 %v2215
    %3000 = vmatprep.subr.bf16.mxu0 0
    %3001 = vmatpush2.bf16.msra.mxu0 0
    %3002 = vmatprep.subr.bf16.mxu0 0
    %3003 = vmatpush2.bf16.msra.mxu0 0
    %3004 = vmatprep.subr.bf16.mxu0 0
    %3005 = vmatpush2.bf16.msra.mxu0 0
    %3006 = vmatprep.subr.bf16.mxu0 0
    %3007 = vmatpush2.bf16.msra.mxu0 0
    %3008 = vmatprep.subr.bf16.mxu0 0
    %3009 = vmatpush2.bf16.msra.mxu0 0
    %3010 = vmatprep.subr.bf16.mxu0 0
    %3011 = vmatpush2.bf16.msra.mxu0 0
    %3012 = vmatprep.subr.bf16.mxu0 0
    %3013 = vmatpush2.bf16.msra.mxu0 0
    %3014 = vmatprep.subr.bf16.mxu0 0
    %3015 = vmatpush2.bf16.msra.mxu0 0
    %3016 = vmatprep.mubr.bf16.mxu0 0
    %3017 = vmatmul.mubr.bf16.gmra.mxu0 %v2982
    %v3018 = vpop.f32.mrf.mxu0
    %v3019 = vadd.f32 0.0, %v3018
    %v3020 = vpop.f32.mrf.mxu0
    %v3021 = vpop.f32.mrf.mxu0
    %v3022 = vadd.f32 0.0, %v3021
    %v3023 = vpop.f32.mrf.mxu0
    %3024 = vdwg.mxu0
    %v3026 = vsel %vm2620, %v2802, 0
    %3028 = vmatprep.subr.bf16.mxu0 0
    %3029 = vmatpush1.bf16.msra.mxu0 0
    %3030 = vmatprep.subr.bf16.mxu0 0
    %3031 = vmatpush1.bf16.msra.mxu0 0
    %3032 = vmatprep.subr.bf16.mxu0 0
    %3033 = vmatpush1.bf16.msra.mxu0 0
    %3034 = vmatprep.subr.bf16.mxu0 0
    %3035 = vmatpush1.bf16.msra.mxu0 0
    %3036 = vmatprep.subr.bf16.mxu0 0
    %3037 = vmatpush1.bf16.msra.mxu0 0
    %3038 = vmatprep.subr.bf16.mxu0 0
    %3039 = vmatpush1.bf16.msra.mxu0 0
    %3040 = vmatprep.subr.bf16.mxu0 0
    %3041 = vmatpush1.bf16.msra.mxu0 0
    %3042 = vmatprep.subr.bf16.mxu0 0
    %3043 = vmatpush1.bf16.msra.mxu0 %v2216
    %3044 = vmatprep.subr.bf16.mxu0 0
    %3045 = vmatpush2.bf16.msra.mxu0 0
    %3046 = vmatprep.subr.bf16.mxu0 0
    %3047 = vmatpush2.bf16.msra.mxu0 0
    %3048 = vmatprep.subr.bf16.mxu0 0
    %3049 = vmatpush2.bf16.msra.mxu0 0
    %3050 = vmatprep.subr.bf16.mxu0 0
    %3051 = vmatpush2.bf16.msra.mxu0 0
    %3052 = vmatprep.subr.bf16.mxu0 0
    %3053 = vmatpush2.bf16.msra.mxu0 0
    %3054 = vmatprep.subr.bf16.mxu0 0
    %3055 = vmatpush2.bf16.msra.mxu0 0
    %3056 = vmatprep.subr.bf16.mxu0 0
    %3057 = vmatpush2.bf16.msra.mxu0 0
    %3058 = vmatprep.subr.bf16.mxu0 0
    %3059 = vmatpush2.bf16.msra.mxu0 0
    %3060 = vmatprep.mubr.bf16.mxu0 0
    %3061 = vmatmul.mubr.bf16.gmra.mxu0 %v3026
    %v3062 = vpop.f32.mrf.mxu0
    %v3063 = vadd.f32 0.0, %v3062
    %v3064 = vpop.f32.mrf.mxu0
    %v3065 = vpop.f32.mrf.mxu0
    %v3066 = vadd.f32 0.0, %v3065
    %v3067 = vpop.f32.mrf.mxu0
    %3068 = vdwg.mxu0
    %v3070 = vsel %vm2620, %v2803, 0
    %3072 = vmatprep.subr.bf16.mxu0 0
    %3073 = vmatpush1.bf16.msra.mxu0 0
    %3074 = vmatprep.subr.bf16.mxu0 0
    %3075 = vmatpush1.bf16.msra.mxu0 0
    %3076 = vmatprep.subr.bf16.mxu0 0
    %3077 = vmatpush1.bf16.msra.mxu0 0
    %3078 = vmatprep.subr.bf16.mxu0 0
    %3079 = vmatpush1.bf16.msra.mxu0 0
    %3080 = vmatprep.subr.bf16.mxu0 0
    %3081 = vmatpush1.bf16.msra.mxu0 0
    %3082 = vmatprep.subr.bf16.mxu0 0
    %3083 = vmatpush1.bf16.msra.mxu0 0
    %3084 = vmatprep.subr.bf16.mxu0 0
    %3085 = vmatpush1.bf16.msra.mxu0 0
    %3086 = vmatprep.subr.bf16.mxu0 0
    %3087 = vmatpush1.bf16.msra.mxu0 %v2217
    %3088 = vmatprep.subr.bf16.mxu0 0
    %3089 = vmatpush2.bf16.msra.mxu0 0
    %3090 = vmatprep.subr.bf16.mxu0 0
    %3091 = vmatpush2.bf16.msra.mxu0 0
    %3092 = vmatprep.subr.bf16.mxu0 0
    %3093 = vmatpush2.bf16.msra.mxu0 0
    %3094 = vmatprep.subr.bf16.mxu0 0
    %3095 = vmatpush2.bf16.msra.mxu0 0
    %3096 = vmatprep.subr.bf16.mxu0 0
    %3097 = vmatpush2.bf16.msra.mxu0 0
    %3098 = vmatprep.subr.bf16.mxu0 0
    %3099 = vmatpush2.bf16.msra.mxu0 0
    %3100 = vmatprep.subr.bf16.mxu0 0
    %3101 = vmatpush2.bf16.msra.mxu0 0
    %3102 = vmatprep.subr.bf16.mxu0 0
    %3103 = vmatpush2.bf16.msra.mxu0 0
    %3104 = vmatprep.mubr.bf16.mxu0 0
    %3105 = vmatmul.mubr.bf16.gmra.mxu0 %v3070
    %v3106 = vpop.f32.mrf.mxu0
    %v3107 = vadd.f32 0.0, %v3106
    %v3108 = vpop.f32.mrf.mxu0
    %v3109 = vpop.f32.mrf.mxu0
    %v3110 = vadd.f32 0.0, %v3109
    %v3111 = vpop.f32.mrf.mxu0
    %3112 = vdwg.mxu0
    %v3114 = vsel %vm2620, %v2804, 0
    %3116 = vmatprep.subr.bf16.mxu0 0
    %3117 = vmatpush1.bf16.msra.mxu0 0
    %3118 = vmatprep.subr.bf16.mxu0 0
    %3119 = vmatpush1.bf16.msra.mxu0 0
    %3120 = vmatprep.subr.bf16.mxu0 0
    %3121 = vmatpush1.bf16.msra.mxu0 0
    %3122 = vmatprep.subr.bf16.mxu0 0
    %3123 = vmatpush1.bf16.msra.mxu0 0
    %3124 = vmatprep.subr.bf16.mxu0 0
    %3125 = vmatpush1.bf16.msra.mxu0 0
    %3126 = vmatprep.subr.bf16.mxu0 0
    %3127 = vmatpush1.bf16.msra.mxu0 0
    %3128 = vmatprep.subr.bf16.mxu0 0
    %3129 = vmatpush1.bf16.msra.mxu0 0
    %3130 = vmatprep.subr.bf16.mxu0 0
    %3131 = vmatpush1.bf16.msra.mxu0 %v2218
    %3132 = vmatprep.subr.bf16.mxu0 0
    %3133 = vmatpush2.bf16.msra.mxu0 0
    %3134 = vmatprep.subr.bf16.mxu0 0
    %3135 = vmatpush2.bf16.msra.mxu0 0
    %3136 = vmatprep.subr.bf16.mxu0 0
    %3137 = vmatpush2.bf16.msra.mxu0 0
    %3138 = vmatprep.subr.bf16.mxu0 0
    %3139 = vmatpush2.bf16.msra.mxu0 0
    %3140 = vmatprep.subr.bf16.mxu0 0
    %3141 = vmatpush2.bf16.msra.mxu0 0
    %3142 = vmatprep.subr.bf16.mxu0 0
    %3143 = vmatpush2.bf16.msra.mxu0 0
    %3144 = vmatprep.subr.bf16.mxu0 0
    %3145 = vmatpush2.bf16.msra.mxu0 0
    %3146 = vmatprep.subr.bf16.mxu0 0
    %3147 = vmatpush2.bf16.msra.mxu0 0
    %3148 = vmatprep.mubr.bf16.mxu0 0
    %3149 = vmatmul.mubr.bf16.gmra.mxu0 %v3114
    %v3150 = vpop.f32.mrf.mxu0
    %v3151 = vadd.f32 0.0, %v3150
    %v3152 = vpop.f32.mrf.mxu0
    %v3153 = vpop.f32.mrf.mxu0
    %v3154 = vadd.f32 0.0, %v3153
    %v3155 = vpop.f32.mrf.mxu0
    %3156 = vdwg.mxu0
    %v3157 = vpack.c.bf16 %v2846, %v2843
    %v3158 = vpack.c.bf16 %v2890, %v2887
    %v3159 = vpack.c.bf16 %v2934, %v2931
    %v3160 = vpack.c.bf16 %v2978, %v2975
    %v3161 = vpack.c.bf16 %v3022, %v3019
    %v3162 = vpack.c.bf16 %v3066, %v3063
    %v3163 = vpack.c.bf16 %v3110, %v3107
    %v3164 = vpack.c.bf16 %v3154, %v3151
    %v3165 = vld [vmem:[#allocation13] sm:$0xf]
    %v3166 = vld [vmem:[#allocation13 + $0x4] sm:$0xf]
    %v3167 = vld [vmem:[#allocation13 + $0x8] sm:$0xf]
    %v3168 = vld [vmem:[#allocation13 + $0xc] sm:$0xf]
    %s3169 = scalar_lea.vmem [#allocation13], 16
    %v3170 = vld [vmem:[%s3169] sm:$0xf]
    %v3171 = vld [vmem:[%s3169 + $0x4] sm:$0xf]
    %v3172 = vld [vmem:[%s3169 + $0x8] sm:$0xf]
    %v3173 = vld [vmem:[%s3169 + $0xc] sm:$0xf]
    %v3178 = vunpack.c.l.b16 %v3170
    %v3179 = vunpack.c.l.b16 %v3171
    %v3180 = vunpack.c.l.b16 %v3172
    %v3181 = vunpack.c.l.b16 %v3173
    %v3182 = vpack.c.b16 %v3179, %v3178
    %v3183 = vpack.c.b16 %v3181, %v3180
    %v3187 = vsel %vm2219, %v3159, 0
    %v3190 = vsel %vm2219, %v3160, 0
    %3192 = vmatprep.subr.bf16.mxu0 0
    %3193 = vmatpush1.bf16.msra.mxu0 0
    %3194 = vmatprep.subr.bf16.mxu0 0
    %3195 = vmatpush1.bf16.msra.mxu0 0
    %3196 = vmatprep.subr.bf16.mxu0 0
    %3197 = vmatpush1.bf16.msra.mxu0 0
    %3198 = vmatprep.subr.bf16.mxu0 0
    %3199 = vmatpush1.bf16.msra.mxu0 0
    %3200 = vmatprep.subr.bf16.mxu0 0
    %3201 = vmatpush1.bf16.msra.mxu0 0
    %3202 = vmatprep.subr.bf16.mxu0 0
    %3203 = vmatpush1.bf16.msra.mxu0 0
    %3204 = vmatprep.subr.bf16.mxu0 0
    %3205 = vmatpush1.bf16.msra.mxu0 %v3183
    %3206 = vmatprep.subr.bf16.mxu0 0
    %3207 = vmatpush1.bf16.msra.mxu0 %v3182
    %3208 = vmatprep.subr.bf16.mxu0 0
    %3209 = vmatpush2.bf16.msra.mxu0 0
    %3210 = vmatprep.subr.bf16.mxu0 0
    %3211 = vmatpush2.bf16.msra.mxu0 0
    %3212 = vmatprep.subr.bf16.mxu0 0
    %3213 = vmatpush2.bf16.msra.mxu0 0
    %3214 = vmatprep.subr.bf16.mxu0 0
    %3215 = vmatpush2.bf16.msra.mxu0 0
    %3216 = vmatprep.subr.bf16.mxu0 0
    %3217 = vmatpush2.bf16.msra.mxu0 0
    %3218 = vmatprep.subr.bf16.mxu0 0
    %3219 = vmatpush2.bf16.msra.mxu0 0
    %3220 = vmatprep.subr.bf16.mxu0 0
    %3221 = vmatpush2.bf16.msra.mxu0 0
    %3222 = vmatprep.subr.bf16.mxu0 0
    %3223 = vmatpush2.bf16.msra.mxu0 0
    %3224 = vmatprep.mubr.bf16.mxu0 0
    %3225 = vmatmul.mubr.bf16.gmra.mxu0 %v3187
    %v3226 = vpop.f32.mrf.mxu0
    %v3227 = vadd.f32 0.0, %v3226
    %v3228 = vpop.f32.mrf.mxu0
    %v3229 = vpop.f32.mrf.mxu0
    %v3230 = vadd.f32 0.0, %v3229
    %v3231 = vpop.f32.mrf.mxu0
    %3232 = vmatprep.mubr.bf16.mxu0 0
    %3233 = vmatmul.mubr.bf16.gmra.mxu0 %v3190
    %v3234 = vpop.f32.mrf.mxu0
    %v3235 = vadd.f32 0.0, %v3234
    %v3236 = vpop.f32.mrf.mxu0
    %v3237 = vpop.f32.mrf.mxu0
    %v3238 = vadd.f32 0.0, %v3237
    %v3239 = vpop.f32.mrf.mxu0
    %3240 = vdwg.mxu0
    %v3245 = vunpack.c.l.b16 %v3165
    %v3246 = vunpack.c.l.b16 %v3166
    %v3247 = vunpack.c.l.b16 %v3167
    %v3248 = vunpack.c.l.b16 %v3168
    %v3249 = vpack.c.b16 %v3246, %v3245
    %v3250 = vpack.c.b16 %v3248, %v3247
    %v3254 = vsel %vm2219, %v3157, 0
    %v3257 = vsel %vm2219, %v3158, 0
    %3259 = vmatprep.subr.bf16.mxu0 0
    %3260 = vmatpush1.bf16.msra.mxu0 0
    %3261 = vmatprep.subr.bf16.mxu0 0
    %3262 = vmatpush1.bf16.msra.mxu0 0
    %3263 = vmatprep.subr.bf16.mxu0 0
    %3264 = vmatpush1.bf16.msra.mxu0 0
    %3265 = vmatprep.subr.bf16.mxu0 0
    %3266 = vmatpush1.bf16.msra.mxu0 0
    %3267 = vmatprep.subr.bf16.mxu0 0
    %3268 = vmatpush1.bf16.msra.mxu0 0
    %3269 = vmatprep.subr.bf16.mxu0 0
    %3270 = vmatpush1.bf16.msra.mxu0 0
    %3271 = vmatprep.subr.bf16.mxu0 0
    %3272 = vmatpush1.bf16.msra.mxu0 %v3250
    %3273 = vmatprep.subr.bf16.mxu0 0
    %3274 = vmatpush1.bf16.msra.mxu0 %v3249
    %3275 = vmatprep.subr.bf16.mxu0 0
    %3276 = vmatpush2.bf16.msra.mxu0 0
    %3277 = vmatprep.subr.bf16.mxu0 0
    %3278 = vmatpush2.bf16.msra.mxu0 0
    %3279 = vmatprep.subr.bf16.mxu0 0
    %3280 = vmatpush2.bf16.msra.mxu0 0
    %3281 = vmatprep.subr.bf16.mxu0 0
    %3282 = vmatpush2.bf16.msra.mxu0 0
    %3283 = vmatprep.subr.bf16.mxu0 0
    %3284 = vmatpush2.bf16.msra.mxu0 0
    %3285 = vmatprep.subr.bf16.mxu0 0
    %3286 = vmatpush2.bf16.msra.mxu0 0
    %3287 = vmatprep.subr.bf16.mxu0 0
    %3288 = vmatpush2.bf16.msra.mxu0 0
    %3289 = vmatprep.subr.bf16.mxu0 0
    %3290 = vmatpush2.bf16.msra.mxu0 0
    %3291 = vmatprep.mubr.bf16.mxu0 0
    %3292 = vmatmul.mubr.bf16.gmra.mxu0 %v3254
    %v3293 = vpop.f32.mrf.mxu0
    %v3294 = vadd.f32 %v3227, %v3293
    %v3295 = vpop.f32.mrf.mxu0
    %v3296 = vpop.f32.mrf.mxu0
    %v3297 = vadd.f32 %v3230, %v3296
    %v3298 = vpop.f32.mrf.mxu0
    %3299 = vmatprep.mubr.bf16.mxu0 0
    %3300 = vmatmul.mubr.bf16.gmra.mxu0 %v3257
    %v3301 = vpop.f32.mrf.mxu0
    %v3302 = vadd.f32 %v3235, %v3301
    %v3303 = vpop.f32.mrf.mxu0
    %v3304 = vpop.f32.mrf.mxu0
    %v3305 = vadd.f32 %v3238, %v3304
    %v3306 = vpop.f32.mrf.mxu0
    %3307 = vdwg.mxu0
    %s3308 = scalar_lea.vmem [#allocation13], 32
    %v3309 = vld [vmem:[%s3308] sm:$0xf]
    %v3310 = vld [vmem:[%s3308 + $0x4] sm:$0xf]
    %v3311 = vld [vmem:[%s3308 + $0x8] sm:$0xf]
    %v3312 = vld [vmem:[%s3308 + $0xc] sm:$0xf]
    %v3317 = vunpack.c.l.b16 %v3309
    %v3318 = vunpack.c.l.b16 %v3310
    %v3319 = vunpack.c.l.b16 %v3311
    %v3320 = vunpack.c.l.b16 %v3312
    %v3321 = vpack.c.b16 %v3318, %v3317
    %v3322 = vpack.c.b16 %v3320, %v3319
    %v3326 = vsel %vm2219, %v3161, 0
    %v3329 = vsel %vm2219, %v3162, 0
    %3331 = vmatprep.subr.bf16.mxu0 0
    %3332 = vmatpush1.bf16.msra.mxu0 0
    %3333 = vmatprep.subr.bf16.mxu0 0
    %3334 = vmatpush1.bf16.msra.mxu0 0
    %3335 = vmatprep.subr.bf16.mxu0 0
    %3336 = vmatpush1.bf16.msra.mxu0 0
    %3337 = vmatprep.subr.bf16.mxu0 0
    %3338 = vmatpush1.bf16.msra.mxu0 0
    %3339 = vmatprep.subr.bf16.mxu0 0
    %3340 = vmatpush1.bf16.msra.mxu0 0
    %3341 = vmatprep.subr.bf16.mxu0 0
    %3342 = vmatpush1.bf16.msra.mxu0 0
    %3343 = vmatprep.subr.bf16.mxu0 0
    %3344 = vmatpush1.bf16.msra.mxu0 %v3322
    %3345 = vmatprep.subr.bf16.mxu0 0
    %3346 = vmatpush1.bf16.msra.mxu0 %v3321
    %3347 = vmatprep.subr.bf16.mxu0 0
    %3348 = vmatpush2.bf16.msra.mxu0 0
    %3349 = vmatprep.subr.bf16.mxu0 0
    %3350 = vmatpush2.bf16.msra.mxu0 0
    %3351 = vmatprep.subr.bf16.mxu0 0
    %3352 = vmatpush2.bf16.msra.mxu0 0
    %3353 = vmatprep.subr.bf16.mxu0 0
    %3354 = vmatpush2.bf16.msra.mxu0 0
    %3355 = vmatprep.subr.bf16.mxu0 0
    %3356 = vmatpush2.bf16.msra.mxu0 0
    %3357 = vmatprep.subr.bf16.mxu0 0
    %3358 = vmatpush2.bf16.msra.mxu0 0
    %3359 = vmatprep.subr.bf16.mxu0 0
    %3360 = vmatpush2.bf16.msra.mxu0 0
    %3361 = vmatprep.subr.bf16.mxu0 0
    %3362 = vmatpush2.bf16.msra.mxu0 0
    %3363 = vmatprep.mubr.bf16.mxu0 0
    %3364 = vmatmul.mubr.bf16.gmra.mxu0 %v3326
    %v3365 = vpop.f32.mrf.mxu0
    %v3366 = vadd.f32 0.0, %v3365
    %v3367 = vpop.f32.mrf.mxu0
    %v3368 = vpop.f32.mrf.mxu0
    %v3369 = vadd.f32 0.0, %v3368
    %v3370 = vpop.f32.mrf.mxu0
    %3371 = vmatprep.mubr.bf16.mxu0 0
    %3372 = vmatmul.mubr.bf16.gmra.mxu0 %v3329
    %v3373 = vpop.f32.mrf.mxu0
    %v3374 = vadd.f32 0.0, %v3373
    %v3375 = vpop.f32.mrf.mxu0
    %v3376 = vpop.f32.mrf.mxu0
    %v3377 = vadd.f32 0.0, %v3376
    %v3378 = vpop.f32.mrf.mxu0
    %3379 = vdwg.mxu0
    %v3380 = vadd.f32 %v3294, %v3366
    %v3381 = vadd.f32 %v3297, %v3369
    %v3382 = vadd.f32 %v3302, %v3374
    %v3383 = vadd.f32 %v3305, %v3377
    %s3384 = scalar_lea.vmem [#allocation13], 48
    %v3385 = vld [vmem:[%s3384] sm:$0xf]
    %v3386 = vld [vmem:[%s3384 + $0x4] sm:$0xf]
    %v3387 = vld [vmem:[%s3384 + $0x8] sm:$0xf]
    %v3388 = vld [vmem:[%s3384 + $0xc] sm:$0xf]
    %v3393 = vunpack.c.l.b16 %v3385
    %v3394 = vunpack.c.l.b16 %v3386
    %v3395 = vunpack.c.l.b16 %v3387
    %v3396 = vunpack.c.l.b16 %v3388
    %v3397 = vpack.c.b16 %v3394, %v3393
    %v3398 = vpack.c.b16 %v3396, %v3395
    %v3402 = vsel %vm2219, %v3163, 0
    %v3405 = vsel %vm2219, %v3164, 0
    %3407 = vmatprep.subr.bf16.mxu0 0
    %3408 = vmatpush1.bf16.msra.mxu0 0
    %3409 = vmatprep.subr.bf16.mxu0 0
    %3410 = vmatpush1.bf16.msra.mxu0 0
    %3411 = vmatprep.subr.bf16.mxu0 0
    %3412 = vmatpush1.bf16.msra.mxu0 0
    %3413 = vmatprep.subr.bf16.mxu0 0
    %3414 = vmatpush1.bf16.msra.mxu0 0
    %3415 = vmatprep.subr.bf16.mxu0 0
    %3416 = vmatpush1.bf16.msra.mxu0 0
    %3417 = vmatprep.subr.bf16.mxu0 0
    %3418 = vmatpush1.bf16.msra.mxu0 0
    %3419 = vmatprep.subr.bf16.mxu0 0
    %3420 = vmatpush1.bf16.msra.mxu0 %v3398
    %3421 = vmatprep.subr.bf16.mxu0 0
    %3422 = vmatpush1.bf16.msra.mxu0 %v3397
    %3423 = vmatprep.subr.bf16.mxu0 0
    %3424 = vmatpush2.bf16.msra.mxu0 0
    %3425 = vmatprep.subr.bf16.mxu0 0
    %3426 = vmatpush2.bf16.msra.mxu0 0
    %3427 = vmatprep.subr.bf16.mxu0 0
    %3428 = vmatpush2.bf16.msra.mxu0 0
    %3429 = vmatprep.subr.bf16.mxu0 0
    %3430 = vmatpush2.bf16.msra.mxu0 0
    %3431 = vmatprep.subr.bf16.mxu0 0
    %3432 = vmatpush2.bf16.msra.mxu0 0
    %3433 = vmatprep.subr.bf16.mxu0 0
    %3434 = vmatpush2.bf16.msra.mxu0 0
    %3435 = vmatprep.subr.bf16.mxu0 0
    %3436 = vmatpush2.bf16.msra.mxu0 0
    %3437 = vmatprep.subr.bf16.mxu0 0
    %3438 = vmatpush2.bf16.msra.mxu0 0
    %3439 = vmatprep.mubr.bf16.mxu0 0
    %3440 = vmatmul.mubr.bf16.gmra.mxu0 %v3402
    %v3441 = vpop.f32.mrf.mxu0
    %v3442 = vadd.f32 0.0, %v3441
    %v3443 = vpop.f32.mrf.mxu0
    %v3444 = vpop.f32.mrf.mxu0
    %v3445 = vadd.f32 0.0, %v3444
    %v3446 = vpop.f32.mrf.mxu0
    %3447 = vmatprep.mubr.bf16.mxu0 0
    %3448 = vmatmul.mubr.bf16.gmra.mxu0 %v3405
    %v3449 = vpop.f32.mrf.mxu0
    %v3450 = vadd.f32 0.0, %v3449
    %v3451 = vpop.f32.mrf.mxu0
    %v3452 = vpop.f32.mrf.mxu0
    %v3453 = vadd.f32 0.0, %v3452
    %v3454 = vpop.f32.mrf.mxu0
    %3455 = vdwg.mxu0
    %v3456 = vadd.f32 %v3380, %v3442
    %v3457 = vadd.f32 %v3381, %v3445
    %v3458 = vadd.f32 %v3382, %v3450
    %v3459 = vadd.f32 %v3383, %v3453
    %v3460 = vlaneseq
    %v3461 = vshrl.u32 %v3460, 7
    %v3462 = vadd.s32 %v3461, 8
    %vm3463 = vcmp.ge.s32.totalorder %v3461, 1
    %vm3464 = vcmp.ge.s32.totalorder %v3462, 1
    %v3465 = vsel %vm3463, %v3456, 0.0
    %v3466 = vsel %vm3464, %v3457, 0.0
    %v3467 = vsel %vm3463, %v3458, 0.0
    %v3468 = vsel %vm3464, %v3459, 0.0
    %v3469 = vld [vmem:[%s9] sm:$0x1]
    %v3471 = vlaneseq
    %v3472 = vshrl.u32 %v3471, 7
    %v3473 = vsub.s32 0, %v3472
    %v3474 = vrot.slane %v3469, %v3473
    %v3476 = vadd.f32 %v3465, %v3474
    %v3477 = vadd.f32 %v3466, %v3474
    %v3478 = vadd.f32 %v3467, %v3474
    %v3479 = vadd.f32 %v3468, %v3474
    %3480 = vst [vmem:[#allocation14] sm:$0xff] %v3476
    %3481 = vst [vmem:[#allocation14 + $0x8] sm:$0xff] %v3477
    %3482 = vst [vmem:[#allocation14 + $0x10] sm:$0xff] %v3478
    %3483 = vst [vmem:[#allocation14 + $0x18] sm:$0xff] %v3479
    // Predicated region
    $region70: #{tpu_custom_call.1} parent=1 // pred_check
      _
    $region71: #{tpu_custom_call.1} parent=1 // pred_check_branch
      %3485 = sbr.rel (0) target = $region73
    $region72: #{tpu_custom_call.1} parent=1 // pred_region
      %s3487 = ssub.s32 512, 512
      %3488 = vsyncadd [#allocation4], %s3487
      %s3489 = sshll.u32 [#allocation14], 4
      %s3490 = int_to_ptr.vmem [resolvable:$true] %s3489
      %3495 = dma.vmem_to_hbm [thread:$0]  %s3490, 512, %s10, [#allocation4], 128, 128, 8
    $region73: #{tpu_custom_call.1} parent=1 // pred_fallthru
      _
    // Predicated region
    $region74: #{tpu_custom_call.1} parent=1 // pred_check
      _
    $region75: #{tpu_custom_call.1} parent=1 // pred_check_branch
      %3497 = sbr.rel (0) target = $region77
    $region76: #{tpu_custom_call.1} parent=1 // pred_region
      %3498 = dma.done [#allocation4], 512
    $region77: #{tpu_custom_call.1} parent=1 // pred_fallthru
      _
    %3499 = vsyncpa [#allocation3], 1
    %3500 = vsyncpa [#allocation6], 1
    %3501 = vsyncpa [#allocation9], 1
    %3502 = vsyncpa [#allocation12], 1
    %3503 = vsyncpa [#allocation4], 1

</llo_original>
